<compile_context>
chip_gen: v5e
topology: v5e:2x2
jax: 0.10.0
libtpu: 0.0.40
codegen_flags: <defaults>
</compile_context>

<pallas_src>
import functools
import math

import jax
import jax.numpy as jnp
from jax.experimental import pallas as pl
from jax.experimental.pallas import tpu as pltpu

CH = 128                                  # lane-dense channel width used throughout
_BBOX_CLIP = math.log(1000.0 / 16.0)      # torchvision dw/dh clamp
_VMEM_LIMIT = 32 * 1024 * 1024            # safe on v5e/v6e/v7x; blocks are far smaller


def _round_up(x, m):
    return (x + m - 1) // m * m


# ---------------------------------------------------------------------------
# Pallas kernel 1: tiled GEMM + bias [+ ReLU]  (M,N parallel; K reduction last)
# ---------------------------------------------------------------------------

def _matmul_bias_kernel(x_ref, w_ref, b_ref, o_ref, acc_ref, *, relu):
    @pl.when(pl.program_id(2) == 0)
    def _():
        acc_ref[...] = jnp.zeros_like(acc_ref)

    acc_ref[...] += jnp.dot(x_ref[...], w_ref[...],
                            preferred_element_type=jnp.float32)

    @pl.when(pl.program_id(2) == pl.num_programs(2) - 1)
    def _():
        out = acc_ref[...] + b_ref[...]
        if relu:
            out = jnp.maximum(out, 0.0)
        o_ref[...] = out.astype(o_ref.dtype)


def matmul_bias(x, w, b, *, relu=False, out_dtype=jnp.float32,
                tm=128, tn=128, tk=128):
    """(M,K)@(K,N)+(N,) [+ReLU]; bf16 MXU inputs, f32 accumulate, 128-aligned pads.
    NOTE: on v6e/v7x tn=tk=256 better fills the 256x256 MXU when shapes allow; every
    N,K in this model is <=128 so 128 tiles are already the full usable width."""
    M, K = x.shape
    K2, N = w.shape
    assert K == K2
    tm = min(tm, _round_up(M, 8))
    Mp, Kp, Np = _round_up(M, tm), _round_up(K, tk), _round_up(N, tn)
    xp = jnp.zeros((Mp, Kp), jnp.bfloat16).at[:M, :K].set(x.astype(jnp.bfloat16))
    wp = jnp.zeros((Kp, Np), jnp.bfloat16).at[:K, :N].set(w.astype(jnp.bfloat16))
    bp = jnp.zeros((1, Np), jnp.float32).at[0, :N].set(b.astype(jnp.float32))
    out = pl.pallas_call(
        functools.partial(_matmul_bias_kernel, relu=relu),
        out_shape=jax.ShapeDtypeStruct((Mp, Np), out_dtype),
        grid=(Mp // tm, Np // tn, Kp // tk),
        in_specs=[
            pl.BlockSpec((tm, tk), lambda i, j, k: (i, k)),
            pl.BlockSpec((tk, tn), lambda i, j, k: (k, j)),
            pl.BlockSpec((1, tn), lambda i, j, k: (0, j)),
        ],
        out_specs=pl.BlockSpec((tm, tn), lambda i, j, k: (i, j)),
        scratch_shapes=[pltpu.VMEM((tm, tn), jnp.float32)],
        compiler_params=pltpu.CompilerParams(
            dimension_semantics=("parallel", "parallel", "arbitrary"),
            vmem_limit_bytes=_VMEM_LIMIT),
    )(xp, wp, bp)
    return out[:M, :N]


def conv1_im2col_pallas(x_nhwc, w_hwio, b, *, stride, padding):
    """First conv (Cin=3): im2col to K=kh*kw*Cin (=27) once, one lane-dense GEMM.
    Avoids channel-padding the raw 3-channel image to 128 lanes."""
    B, H, W, Cin = x_nhwc.shape
    kh, kw, _, cout = w_hwio.shape
    s = stride
    Ho = (H + 2 * padding - kh) // s + 1
    Wo = (W + 2 * padding - kw) // s + 1
    xp = jnp.pad(x_nhwc, ((0, 0), (padding, padding), (padding, padding), (0, 0)))
    cols = [xp[:, i:i + (Ho - 1) * s + 1:s, j:j + (Wo - 1) * s + 1:s, :]
            for i in range(kh) for j in range(kw)]
    patches = jnp.stack(cols, axis=3).reshape(B * Ho * Wo, kh * kw * Cin)
    # Output channels padded to the lane-dense width so downstream convs consume
    # this activation directly (zero lanes beyond cout).
    w2d = jnp.zeros((kh * kw * Cin, CH), jnp.float32).at[:, :cout].set(
        w_hwio.reshape(kh * kw * Cin, cout).astype(jnp.float32))
    b2d = jnp.zeros((CH,), jnp.float32).at[:cout].set(b.astype(jnp.float32))
    out = matmul_bias(patches, w2d, b2d, relu=True, out_dtype=jnp.bfloat16)
    return out.reshape(B, Ho, Wo, CH)


# ---------------------------------------------------------------------------
# Pallas kernel 2: conv (in-kernel paired-tap streaming) + bias + ReLU
#                  [+ fused 1x1 head], bf16 activations, f32 VMEM accumulator
# ---------------------------------------------------------------------------

def _conv_pair_kernel(x_ref, w_ref, b_ref, *rest, pairs, stride, Ho, Wo,
                      relu, fuse_head):
    if fuse_head:
        hw_ref, hb_ref, o_ref, acc_ref = rest
    else:
        o_ref, acc_ref = rest

    def tap(t):
        i, j = t
        p = (i % stride) * stride + (j % stride)
        di, dj = i // stride, j // stride
        return x_ref[p, di:di + Ho, dj:dj + Wo, :].reshape(Ho * Wo, CH)  # bf16

    acc_ref[...] = jnp.zeros_like(acc_ref)
    # Unrolled tap-pair loop: two taps concatenated along K (256-deep bf16 dot).
    for pi, (ta, tb) in enumerate(pairs):
        patch = jnp.concatenate([tap(ta), tap(tb)], axis=-1)       # (Ho*Wo, 2*CH)
        acc_ref[...] += jnp.dot(patch, w_ref[pi],
                                preferred_element_type=jnp.float32)
    acc = acc_ref[...] + b_ref[...]
    if relu:
        acc = jnp.maximum(acc, 0.0)
    if fuse_head:
        # Fused per-location 1x1 head GEMM (RPN cls|delta) -> one launch instead of
        # three and no extra activation HBM round trip.
        acc = jnp.dot(acc.astype(jnp.bfloat16), hw_ref[...],
                      preferred_element_type=jnp.float32) + hb_ref[...]
    o_ref[...] = acc.astype(o_ref.dtype)


def conv2d_pallas(x_nhwc, w_hwio, b, *, stride, padding, relu,
                  out_dtype=jnp.bfloat16, head_w=None, head_b=None):
    """3x3 conv (+bias, +ReLU, optional fused 1x1 head) on lane-dense (128ch) input.
    Returns (B, Ho, Wo, CH)."""
    B, H, W, Cin = x_nhwc.shape
    assert Cin == CH, "conv2d_pallas expects lane-dense (128-channel) inputs"
    kh, kw, cin_r, cout_r = w_hwio.shape
    s = stride
    Ho = (H + 2 * padding - kh) // s + 1
    Wo = (W + 2 * padding - kw) // s + 1

    # bf16 staging of the activation: halves DMA + removes per-tap casts in-kernel.
    x = x_nhwc.astype(jnp.bfloat16)
    Hp, Wp = H + 2 * padding, W + 2 * padding
    if s == 1:
        # stride 1: no stride-phase decomposition needed (saves an HBM transpose).
        xph = jnp.pad(x, ((0, 0), (padding, padding), (padding, padding), (0, 0)))
        Hps, Wps = Hp, Wp
        n_phase = 1
    else:
        Hpr, Wpr = _round_up(Hp, s), _round_up(Wp, s)
        xp = jnp.pad(x, ((0, 0),
                         (padding, padding + (Hpr - Hp)),
                         (padding, padding + (Wpr - Wp)),
                         (0, 0)))
        Hps, Wps = Hpr // s, Wpr // s
        # TODO(synk): for detector-scale inputs this stride-phase transpose should be
        # replaced by strided in-kernel reads and the spatial dim tiled into the grid
        # (v7x 64 MiB VMEM); both are no-ops at these toy shapes.
        xph = xp.reshape(B, Hps, s, Wps, s, CH).transpose(0, 2, 4, 1, 3, 5)
        xph = xph.reshape(B * s * s, Hps, Wps, CH)
        n_phase = s * s

    # Pair taps along K: kh*kw taps -> ceil/2 pairs of K=256 (odd tap pairs with a
    # zero-weight duplicate). Fills the 256-deep v6e/v7x MXU, halves acc adds.
    n_taps = kh * kw
    n_pairs = (n_taps + 1) // 2
    taps = [(i, j) for i in range(kh) for j in range(kw)]
    taps_pad = taps + [taps[-1]] * (2 * n_pairs - n_taps)
    pairs = tuple((taps_pad[2 * t], taps_pad[2 * t + 1]) for t in range(n_pairs))

    wflat = jnp.zeros((2 * n_pairs, CH, CH), jnp.bfloat16)
    wflat = wflat.at[:n_taps, :cin_r, :cout_r].set(
        w_hwio.reshape(n_taps, cin_r, cout_r).astype(jnp.bfloat16))
    wp_ = wflat.reshape(n_pairs, 2 * CH, CH)
    bp = jnp.zeros((1, CH), jnp.float32).at[0, :cout_r].set(b.astype(jnp.float32))

    fuse_head = head_w is not None
    inputs = [xph, wp_, bp]
    in_specs = [
        pl.BlockSpec((n_phase, Hps, Wps, CH), lambda bi: (bi, 0, 0, 0)),
        pl.BlockSpec((n_pairs, 2 * CH, CH), lambda bi: (0, 0, 0)),
        pl.BlockSpec((1, CH), lambda bi: (0, 0)),
    ]
    if fuse_head:
        hw = jnp.zeros((CH, CH), jnp.bfloat16).at[
            :head_w.shape[0], :head_w.shape[1]].set(head_w.astype(jnp.bfloat16))
        hb = jnp.zeros((1, CH), jnp.float32).at[0, :head_b.shape[0]].set(
            head_b.astype(jnp.float32))
        inputs += [hw, hb]
        in_specs += [pl.BlockSpec((CH, CH), lambda bi: (0, 0)),
                     pl.BlockSpec((1, CH), lambda bi: (0, 0))]

    out = pl.pallas_call(
        functools.partial(_conv_pair_kernel, pairs=pairs, stride=s, Ho=Ho, Wo=Wo,
                          relu=relu, fuse_head=fuse_head),
        out_shape=jax.ShapeDtypeStruct((B, Ho * Wo, CH), out_dtype),
        grid=(B,),
        in_specs=in_specs,
        out_specs=pl.BlockSpec((None, Ho * Wo, CH), lambda bi: (bi, 0, 0)),
        scratch_shapes=[pltpu.VMEM((Ho * Wo, CH), jnp.float32)],
        compiler_params=pltpu.CompilerParams(
            dimension_semantics=("parallel",),          # B=2 -> both v7x TCs busy
            vmem_limit_bytes=_VMEM_LIMIT),
    )(*inputs)
    return out.reshape(B, Ho, Wo, CH)


# ---------------------------------------------------------------------------
# Pallas kernel 3: fused 2-layer detection head  relu(x@w1+b1)@w2+b2  (one launch)
# ---------------------------------------------------------------------------

def _mlp_head_kernel(x_ref, w1_ref, b1_ref, w2_ref, b2_ref, o_ref):
    h = jnp.dot(x_ref[...], w1_ref[...],
                preferred_element_type=jnp.float32) + b1_ref[...]
    h = jnp.maximum(h, 0.0)
    out = jnp.dot(h.astype(jnp.bfloat16), w2_ref[...],
                  preferred_element_type=jnp.float32) + b2_ref[...]
    o_ref[...] = out.astype(o_ref.dtype)


def mlp_head_pallas(x, w1, b1, w2, b2):
    """Fused detection head; M=B is tiny so both GEMMs share a single launch."""
    M, K = x.shape
    K1, N1 = w1.shape
    K2, N2 = w2.shape
    assert K <= CH and N1 <= CH and N2 <= CH
    Mp = _round_up(max(M, 8), 8)
    xp = jnp.zeros((Mp, CH), jnp.bfloat16).at[:M, :K].set(x.astype(jnp.bfloat16))
    w1p = jnp.zeros((CH, CH), jnp.bfloat16).at[:K1, :N1].set(w1.astype(jnp.bfloat16))
    b1p = jnp.zeros((1, CH), jnp.float32).at[0, :N1].set(b1.astype(jnp.float32))
    w2p = jnp.zeros((CH, CH), jnp.bfloat16).at[:K2, :N2].set(w2.astype(jnp.bfloat16))
    b2p = jnp.zeros((1, CH), jnp.float32).at[0, :N2].set(b2.astype(jnp.float32))
    out = pl.pallas_call(
        _mlp_head_kernel,
        out_shape=jax.ShapeDtypeStruct((Mp, CH), jnp.float32),
        grid=(1,),
        in_specs=[pl.BlockSpec((Mp, CH), lambda i: (0, 0)),
                  pl.BlockSpec((CH, CH), lambda i: (0, 0)),
                  pl.BlockSpec((1, CH), lambda i: (0, 0)),
                  pl.BlockSpec((CH, CH), lambda i: (0, 0)),
                  pl.BlockSpec((1, CH), lambda i: (0, 0))],
        out_specs=pl.BlockSpec((Mp, CH), lambda i: (0, 0)),
        compiler_params=pltpu.CompilerParams(
            dimension_semantics=("arbitrary",),
            vmem_limit_bytes=_VMEM_LIMIT),
    )(xp, w1p, b1p, w2p, b2p)
    return out[:M, :N2]


# ---------------------------------------------------------------------------
# Pallas kernel 4: bbox delta application on packed (8, N) component-major boxes
# ---------------------------------------------------------------------------

def _apply_deltas_kernel(p_ref, o_ref, *, img_w, img_h):
    p = p_ref[...]                       # (8, Np): rows 0-3 box, 4-7 delta
    x1, y1, x2, y2 = p[0:1], p[1:2], p[2:3], p[3:4]
    dx, dy = p[4:5], p[5:6]
    dw = jnp.minimum(p[6:7], _BBOX_CLIP)
    dh = jnp.minimum(p[7:8], _BBOX_CLIP)
    w = x2 - x1
    h = y2 - y1
    cx = x1 + 0.5 * w
    cy = y1 + 0.5 * h
    pcx = dx * w + cx
    pcy = dy * h + cy
    pw = jnp.exp(dw) * w
    ph = jnp.exp(dh) * h
    # Individual row stores: no sublane-axis concatenate / relayout.
    o_ref[0:1, :] = jnp.clip(pcx - 0.5 * pw, 0.0, img_w)
    o_ref[1:2, :] = jnp.clip(pcy - 0.5 * ph, 0.0, img_h)
    o_ref[2:3, :] = jnp.clip(pcx + 0.5 * pw, 0.0, img_w)
    o_ref[3:4, :] = jnp.clip(pcy + 0.5 * ph, 0.0, img_h)


def apply_deltas_pallas(boxes_4n, deltas_4n, img_w, img_h):
    """boxes_4n, deltas_4n: (4, N) component-major -> clipped boxes (4, N)."""
    N = boxes_4n.shape[1]
    Np = _round_up(N, 128)
    packed = jnp.concatenate([boxes_4n, deltas_4n], axis=0).astype(jnp.float32)
    if Np != N:
        packed = jnp.pad(packed, ((0, 0), (0, Np - N)))
    out = pl.pallas_call(
        functools.partial(_apply_deltas_kernel,
                          img_w=float(img_w), img_h=float(img_h)),
        out_shape=jax.ShapeDtypeStruct((4, Np), jnp.float32),
        grid=(1,),                               # single step: whole array is tiny
        in_specs=[pl.BlockSpec((8, Np), lambda i: (0, 0))],
        out_specs=pl.BlockSpec((4, Np), lambda i: (0, 0)),
        compiler_params=pltpu.CompilerParams(
            dimension_semantics=("arbitrary",),
            vmem_limit_bytes=_VMEM_LIMIT),
    )(packed)
    return out[:, :N]


# ---------------------------------------------------------------------------
# Plain-JAX glue (anchors, tiny detection tail)
# ---------------------------------------------------------------------------

def generate_anchors_4xA(image_w, image_h, num_x, num_y, ratios, sizes):
    """Anchors directly in (4, A) component-major layout (loc-major, anchor-minor)."""
    cx = (jnp.arange(num_x, dtype=jnp.float32) + 0.5) * (image_w / num_x)
    cy = (jnp.arange(num_y, dtype=jnp.float32) + 0.5) * (image_h / num_y)
    cyg, cxg = jnp.meshgrid(cy, cx, indexing="ij")            # (num_y, num_x)
    cxf, cyf = cxg.reshape(-1), cyg.reshape(-1)               # (L,)
    ws, hs = [], []
    for r in ratios:
        for s in sizes:
            hs.append(s * (r ** 0.5))
            ws.append(s / (r ** 0.5))
    wk = jnp.asarray(ws, jnp.float32)
    hk = jnp.asarray(hs, jnp.float32)                         # (K,)
    x1 = (cxf[:, None] - 0.5 * wk[None, :]).reshape(-1)
    y1 = (cyf[:, None] - 0.5 * hk[None, :]).reshape(-1)
    x2 = (cxf[:, None] + 0.5 * wk[None, :]).reshape(-1)
    y2 = (cyf[:, None] + 0.5 * hk[None, :]).reshape(-1)
    return jnp.stack([x1, y1, x2, y2], axis=0)                # (4, L*K)


def _apply_deltas_xla(boxes_n4, deltas_n4, img_w, img_h):
    """Tiny tail (32 boxes): plain XLA — a Pallas launch would be pure overhead."""
    w = boxes_n4[:, 2] - boxes_n4[:, 0]
    h = boxes_n4[:, 3] - boxes_n4[:, 1]
    cx = boxes_n4[:, 0] + 0.5 * w
    cy = boxes_n4[:, 1] + 0.5 * h
    dx, dy = deltas_n4[:, 0], deltas_n4[:, 1]
    dw = jnp.minimum(deltas_n4[:, 2], _BBOX_CLIP)
    dh = jnp.minimum(deltas_n4[:, 3], _BBOX_CLIP)
    pcx = dx * w + cx
    pcy = dy * h + cy
    pw = jnp.exp(dw) * w
    ph = jnp.exp(dh) * h
    x1 = jnp.clip(pcx - 0.5 * pw, 0.0, img_w)
    y1 = jnp.clip(pcy - 0.5 * ph, 0.0, img_h)
    x2 = jnp.clip(pcx + 0.5 * pw, 0.0, img_w)
    y2 = jnp.clip(pcy + 0.5 * ph, 0.0, img_h)
    return jnp.stack([x1, y1, x2, y2], axis=1)


# ---------------------------------------------------------------------------
# Model (inference forward pass)
# ---------------------------------------------------------------------------

class PallasFasterRCNN:
    def __init__(self, key, num_classes, anchor_ratios, anchor_sizes,
                 rpn_pre_nms_top_n, rpn_post_nms_top_n):
        self.num_classes = num_classes
        self.ratios = anchor_ratios
        self.sizes = anchor_sizes
        self.pre_nms = rpn_pre_nms_top_n
        self.post_nms = rpn_post_nms_top_n
        self.num_anchors = len(anchor_ratios) * len(anchor_sizes)

        c1, c_feat, n_hidden = 16, 32, 64
        self.c_feat, self.n_hidden = c_feat, n_hidden
        ks = jax.random.split(key, 10)
        s = 0.05
        # backbone (ResNet stub: two stride-2 convs). Frozen BatchNorm in the
        # reference is eval-mode affine; folded into conv bias here.
        self.w1 = s * jax.random.normal(ks[0], (3, 3, 3, c1), jnp.float32)
        self.b1 = jnp.zeros((c1,), jnp.float32)
        self.w2 = s * jax.random.normal(ks[1], (3, 3, c1, c_feat), jnp.float32)
        self.b2 = jnp.zeros((c_feat,), jnp.float32)
        # RPN head
        self.wr = s * jax.random.normal(ks[2], (3, 3, c_feat, c_feat), jnp.float32)
        self.br = jnp.zeros((c_feat,), jnp.float32)
        self.wc = s * jax.random.normal(ks[3], (c_feat, self.num_anchors * 2), jnp.float32)
        self.bc = jnp.zeros((self.num_anchors * 2,), jnp.float32)
        self.wd = 0.01 * jax.random.normal(ks[4], (c_feat, self.num_anchors * 4), jnp.float32)
        self.bd = jnp.zeros((self.num_anchors * 4,), jnp.float32)
        # Detection head
        self.wh = s * jax.random.normal(ks[5], (c_feat, n_hidden), jnp.float32)
        self.bh = jnp.zeros((n_hidden,), jnp.float32)
        self.wcls = s * jax.random.normal(ks[6], (n_hidden, num_classes), jnp.float32)
        self.bcls = jnp.zeros((num_classes,), jnp.float32)
        self.wbox = 0.01 * jax.random.normal(ks[7], (n_hidden, num_classes * 4), jnp.float32)
        self.bbox = jnp.zeros((num_classes * 4,), jnp.float32)

    def forward(self, image_batch_nchw):
        B, _, image_h, image_w = image_batch_nchw.shape
        x = jnp.transpose(image_batch_nchw, (0, 2, 3, 1))      # NCHW -> NHWC
        nA, nc = self.num_anchors, self.num_classes

        # ---- backbone features ----
        # conv1: im2col GEMM (no 3->128 channel pad of the raw image), bf16 output.
        f1 = conv1_im2col_pallas(x, self.w1, self.b1, stride=2, padding=1)
        # conv2: tap-streaming conv kernel on lane-dense bf16 activations.
        feat = conv2d_pallas(f1, self.w2, self.b2, stride=2, padding=1, relu=True,
                             out_dtype=jnp.bfloat16)
        _, Hf, Wf, _ = feat.shape
        A = Hf * Wf * nA

        # ---- anchors, built directly in (4, A) layout ----
        anchors4 = generate_anchors_4xA(image_w, image_h, Wf, Hf, self.ratios, self.sizes)
        anchors_b4 = jnp.tile(anchors4, (1, B))                # (4, B*A) batch-major

        # ---- RPN: 3x3 conv + fused cls|delta 1x1 heads in one kernel ----
        rpn_head_w = jnp.concatenate([self.wc, self.wd], axis=1)   # (C, nA*6)
        rpn_head_b = jnp.concatenate([self.bc, self.bd], axis=0)
        rpn_out = conv2d_pallas(feat, self.wr, self.br, stride=1, padding=1, relu=True,
                                out_dtype=jnp.float32,
                                head_w=rpn_head_w, head_b=rpn_head_b)
        rpn_flat = rpn_out.reshape(B, Hf * Wf, CH)
        cls2 = rpn_flat[:, :, :nA * 2].reshape(B, A, 2)
        delta = rpn_flat[:, :, nA * 2:nA * 6].reshape(B * A, 4)

        # 2-class softmax foreground prob == sigmoid(s1 - s0): no reduce kernel needed.
        fg_prob = jax.nn.sigmoid(cls2[..., 1] - cls2[..., 0])  # (B, A)

        # ---- proposals ----
        prop4 = apply_deltas_pallas(anchors_b4, delta.T, image_w, image_h)   # (4, B*A)
        prop = prop4.reshape(4, B, A)
        # TODO(synk): NMS has no clean Pallas equivalent; proposals are the
        # score-ordered top-k (pre_nms then post_nms truncation) instead.
        _, top_idx = jax.lax.top_k(fg_prob, self.pre_nms)
        top_idx = top_idx[:, :self.post_nms]                   # (B, P)
        P = self.post_nms
        proposals4 = jnp.take_along_axis(
            prop, jnp.broadcast_to(top_idx[None], (4, B, P)), axis=2)        # (4, B, P)

        # ---- detection head (one fused Pallas launch, shared across proposals) ----
        # TODO(synk): RoI Align (data-dependent gather) replaced with per-image
        # global-average-pooled backbone features shared across proposals.
        pooled = jnp.mean(feat.astype(jnp.float32).reshape(B, Hf * Wf, CH), axis=1)
        wcb = jnp.concatenate([self.wcls, self.wbox], axis=1)                # (nh, nc*5)
        bcb = jnp.concatenate([self.bcls, self.bbox], axis=0)
        head_out = mlp_head_pallas(pooled, self.wh, self.bh, wcb, bcb)       # (B, nc*5)
        cls_b = head_out[:, :nc]
        box_b = head_out[:, nc:nc * 5]

        # ---- detections (tiny tail kept in XLA) ----
        probs_b = jax.nn.softmax(cls_b, axis=-1)               # (B, nc)
        fg = probs_b[:, 1:]                                    # skip background class 0
        det_class_b = jnp.argmax(fg, axis=-1).astype(jnp.int32) + 1
        det_prob_b = jnp.max(fg, axis=-1)
        deltas_pc = box_b.reshape(B, nc, 4)
        sel_delta_b = deltas_pc[jnp.arange(B), det_class_b]                  # (B, 4)

        proposals_n4 = proposals4.reshape(4, B * P).T                        # (B*P, 4)
        deltas_n4 = jnp.repeat(sel_delta_b, P, axis=0)                       # (B*P, 4)
        detection_bboxes = _apply_deltas_xla(proposals_n4, deltas_n4, image_w, image_h)
        detection_classes = jnp.repeat(det_class_b, P)
        detection_probs = jnp.repeat(det_prob_b, P)
        detection_batch_indices = jnp.repeat(jnp.arange(B, dtype=jnp.int32), P)
        return detection_bboxes, detection_classes, detection_probs, detection_batch_indices


if __name__ == "__main__":
    key = jax.random.PRNGKey(0)
    k_param, k_img = jax.random.split(key)

    model = PallasFasterRCNN(
        k_param,
        num_classes=5,
        anchor_ratios=[0.5, 1.0, 2.0],
        anchor_sizes=[8.0, 16.0],
        rpn_pre_nms_top_n=64,
        rpn_post_nms_top_n=16,
    )

    # Small NCHW image batch, consistent with the PyTorch module's input.
    image_batch = jax.random.normal(k_img, (2, 3, 32, 32), jnp.float32)

    fwd = jax.jit(model.forward)
    bboxes, classes, probs, batch_idx = fwd(image_batch)
    jax.block_until_ready((bboxes, classes, probs, batch_idx))

    assert bboxes.shape == (32, 4)
    assert classes.shape == (32,)
    assert probs.shape == (32,)
    assert batch_idx.shape == (32,)
    print("KERNEL_OK")
</pallas_src>

<mosaic_0001>
module attributes {stable_mosaic.version = 11 : i64} {
  func.func @_matmul_bias_kernel(%arg0: i32, %arg1: i32, %arg2: i32, %arg3: memref<128x128xbf16, #tpu.memory_space<vmem>>, %arg4: memref<128x128xbf16, #tpu.memory_space<vmem>>, %arg5: memref<1x128xf32, #tpu.memory_space<vmem>>, %arg6: memref<128x128xbf16, #tpu.memory_space<vmem>>, %arg7: memref<128x128xf32, #tpu.memory_space<vmem>>) attributes {dimension_semantics = [#tpu.dimension_semantics<parallel>, #tpu.dimension_semantics<parallel>, #tpu.dimension_semantics<arbitrary>], iteration_bounds = array<i64: 4, 1, 1>, scalar_prefetch = 0 : i64, scratch_operands = 1 : i64, tpu.core_type = #tpu.core_type<tc>, window_params = [{transform_indices = @transform_0, window_bounds = array<i64: 128, 128>}, {transform_indices = @transform_1, window_bounds = array<i64: 128, 128>}, {transform_indices = @transform_2, window_bounds = array<i64: 1, 128>}, {transform_indices = @transform_3, window_bounds = array<i64: 128, 128>}]} {
    %c0_i32 = arith.constant 0 : i32
    %0 = arith.cmpi eq, %arg2, %c0_i32 : i32
    %1 = arith.extui %0 : i1 to i32
    %c0_i32_0 = arith.constant 0 : i32
    %2 = arith.cmpi ne, %1, %c0_i32_0 : i32
    scf.if %2 {
      %cst_10 = arith.constant 0.000000e+00 : f32
      %12 = vector.broadcast %cst_10 : f32 to vector<128x128xf32>
      %c0_11 = arith.constant 0 : index
      %c0_12 = arith.constant 0 : index
      %13 = vector.load %arg7[%c0_11, %c0_12] : memref<128x128xf32, #tpu.memory_space<vmem>>, vector<128x128xf32>
      tpu.vector_store %arg7[%c0_11, %c0_12], %12 {strides = array<i32>} : memref<128x128xf32, #tpu.memory_space<vmem>>, vector<128x128xf32>,
    } else {
    }
    %c0 = arith.constant 0 : index
    %c0_1 = arith.constant 0 : index
    %3 = vector.load %arg7[%c0, %c0_1] : memref<128x128xf32, #tpu.memory_space<vmem>>, vector<128x128xf32>
    %c0_2 = arith.constant 0 : index
    %c0_3 = arith.constant 0 : index
    %4 = vector.load %arg3[%c0_2, %c0_3] : memref<128x128xbf16, #tpu.memory_space<vmem>>, vector<128x128xbf16>
    %c0_4 = arith.constant 0 : index
    %c0_5 = arith.constant 0 : index
    %5 = vector.load %arg4[%c0_4, %c0_5] : memref<128x128xbf16, #tpu.memory_space<vmem>>, vector<128x128xbf16>
    %cst = arith.constant dense<0.000000e+00> : vector<128x128xf32>
    %6 = tpu.matmul %4, %5, %cst {dimension_numbers = #tpu.dot_dimension_numbers<[1], [0], [0], [1], [0, 0, 1, 1], [], []>} : vector<128x128xbf16>, vector<128x128xbf16>, vector<128x128xf32> -> vector<128x128xf32>
    %7 = arith.addf %3, %6 : vector<128x128xf32>
    %c0_6 = arith.constant 0 : index
    %c0_7 = arith.constant 0 : index
    %8 = vector.load %arg7[%c0_6, %c0_7] : memref<128x128xf32, #tpu.memory_space<vmem>>, vector<128x128xf32>
    tpu.vector_store %arg7[%c0_6, %c0_7], %7 {strides = array<i32>} : memref<128x128xf32, #tpu.memory_space<vmem>>, vector<128x128xf32>,
    %c0_i32_8 = arith.constant 0 : i32
    %9 = arith.cmpi eq, %arg2, %c0_i32_8 : i32
    %10 = arith.extui %9 : i1 to i32
    %c0_i32_9 = arith.constant 0 : i32
    %11 = arith.cmpi ne, %10, %c0_i32_9 : i32
    scf.if %11 {
      %c0_10 = arith.constant 0 : index
      %c0_11 = arith.constant 0 : index
      %12 = vector.load %arg7[%c0_10, %c0_11] : memref<128x128xf32, #tpu.memory_space<vmem>>, vector<128x128xf32>
      %c0_12 = arith.constant 0 : index
      %c0_13 = arith.constant 0 : index
      %13 = vector.load %arg5[%c0_12, %c0_13] : memref<1x128xf32, #tpu.memory_space<vmem>>, vector<1x128xf32>
      %14 = vector.broadcast %13 : vector<1x128xf32> to vector<128x128xf32>
      %15 = arith.addf %12, %14 : vector<128x128xf32>
      %cst_14 = arith.constant 0.000000e+00 : f32
      %16 = vector.broadcast %cst_14 : f32 to vector<128x128xf32>
      %17 = arith.maximumf %15, %16 : vector<128x128xf32>
      %18 = arith.truncf %17 : vector<128x128xf32> to vector<128x128xbf16>
      %c0_15 = arith.constant 0 : index
      %c0_16 = arith.constant 0 : index
      %19 = vector.load %arg6[%c0_15, %c0_16] : memref<128x128xbf16, #tpu.memory_space<vmem>>, vector<128x128xbf16>
      tpu.vector_store %arg6[%c0_15, %c0_16], %18 {strides = array<i32>} : memref<128x128xbf16, #tpu.memory_space<vmem>>, vector<128x128xbf16>,
    } else {
    }
    return
  }
  func.func @transform_0(%arg0: i32, %arg1: i32, %arg2: i32) -> (i32, i32) {
    %c0_i32 = arith.constant 0 : i32
    return %arg0, %arg2 : i32, i32
  }
  func.func @transform_1(%arg0: i32, %arg1: i32, %arg2: i32) -> (i32, i32) {
    %c0_i32 = arith.constant 0 : i32
    return %arg2, %arg1 : i32, i32
  }
  func.func @transform_2(%arg0: i32, %arg1: i32, %arg2: i32) -> (i32, i32) {
    %c0_i32 = arith.constant 0 : i32
    %c0_i32_0 = arith.constant 0 : i32
    return %c0_i32, %arg1 : i32, i32
  }
  func.func @transform_3(%arg0: i32, %arg1: i32, %arg2: i32) -> (i32, i32) {
    %c0_i32 = arith.constant 0 : i32
    return %arg0, %arg1 : i32, i32
  }
}

module attributes {stable_mosaic.version = 11 : i64} {
  func.func @_conv_pair_kernel(%arg0: i32, %arg1: memref<4x9x9x128xbf16, #tpu.memory_space<vmem>>, %arg2: memref<5x256x128xbf16, #tpu.memory_space<vmem>>, %arg3: memref<1x128xf32, #tpu.memory_space<vmem>>, %arg4: memref<1x64x128xbf16, #tpu.memory_space<vmem>>, %arg5: memref<64x128xf32, #tpu.memory_space<vmem>>) attributes {dimension_semantics = [#tpu.dimension_semantics<parallel>], iteration_bounds = array<i64: 2>, scalar_prefetch = 0 : i64, scratch_operands = 1 : i64, tpu.core_type = #tpu.core_type<tc>, window_params = [{transform_indices = @transform_0, window_bounds = array<i64: 4, 9, 9, 128>}, {pipeline_mode = #tpu.pipeline_mode<synchronous>, transform_indices = @transform_1, window_bounds = array<i64: 5, 256, 128>}, {pipeline_mode = #tpu.pipeline_mode<synchronous>, transform_indices = @transform_2, window_bounds = array<i64: 1, 128>}, {transform_indices = @transform_3, window_bounds = array<i64: 1, 64, 128>}]} {
    %cst = arith.constant 0.000000e+00 : f32
    %0 = vector.broadcast %cst : f32 to vector<64x128xf32>
    %c0 = arith.constant 0 : index
    %c0_0 = arith.constant 0 : index
    %1 = vector.load %arg5[%c0, %c0_0] : memref<64x128xf32, #tpu.memory_space<vmem>>, vector<64x128xf32>
    tpu.vector_store %arg5[%c0, %c0_0], %0 {strides = array<i32>} : memref<64x128xf32, #tpu.memory_space<vmem>>, vector<64x128xf32>,
    %c0_1 = arith.constant 0 : index
    %c0_2 = arith.constant 0 : index
    %c0_3 = arith.constant 0 : index
    %c0_4 = arith.constant 0 : index
    %2 = vector.load %arg1[%c0_1, %c0_2, %c0_3, %c0_4] : memref<4x9x9x128xbf16, #tpu.memory_space<vmem>>, vector<1x8x8x128xbf16>
    %3 = vector.shape_cast %2 : vector<1x8x8x128xbf16> to vector<8x8x128xbf16>
    %4 = vector.shape_cast %3 : vector<8x8x128xbf16> to vector<64x128xbf16>
    %c1 = arith.constant 1 : index
    %c0_5 = arith.constant 0 : index
    %c0_6 = arith.constant 0 : index
    %c0_7 = arith.constant 0 : index
    %5 = vector.load %arg1[%c1, %c0_5, %c0_6, %c0_7] : memref<4x9x9x128xbf16, #tpu.memory_space<vmem>>, vector<1x8x8x128xbf16>
    %6 = vector.shape_cast %5 : vector<1x8x8x128xbf16> to vector<8x8x128xbf16>
    %7 = vector.shape_cast %6 : vector<8x8x128xbf16> to vector<64x128xbf16>
    %8 = tpu.concatenate %4, %7 in 1 : vector<64x128xbf16>, vector<64x128xbf16> -> vector<64x256xbf16>
    %c0_8 = arith.constant 0 : index
    %c0_9 = arith.constant 0 : index
    %9 = vector.load %arg5[%c0_8, %c0_9] : memref<64x128xf32, #tpu.memory_space<vmem>>, vector<64x128xf32>
    %c0_10 = arith.constant 0 : index
    %c0_11 = arith.constant 0 : index
    %c0_12 = arith.constant 0 : index
    %10 = vector.load %arg2[%c0_10, %c0_11, %c0_12] : memref<5x256x128xbf16, #tpu.memory_space<vmem>>, vector<1x256x128xbf16>
    %11 = vector.shape_cast %10 : vector<1x256x128xbf16> to vector<256x128xbf16>
    %cst_13 = arith.constant dense<0.000000e+00> : vector<64x128xf32>
    %12 = tpu.matmul %8, %11, %cst_13 {dimension_numbers = #tpu.dot_dimension_numbers<[1], [0], [0], [1], [0, 0, 1, 1], [], []>} : vector<64x256xbf16>, vector<256x128xbf16>, vector<64x128xf32> -> vector<64x128xf32>
    %13 = arith.addf %9, %12 : vector<64x128xf32>
    %c0_14 = arith.constant 0 : index
    %c0_15 = arith.constant 0 : index
    %14 = vector.load %arg5[%c0_14, %c0_15] : memref<64x128xf32, #tpu.memory_space<vmem>>, vector<64x128xf32>
    tpu.vector_store %arg5[%c0_14, %c0_15], %13 {strides = array<i32>} : memref<64x128xf32, #tpu.memory_space<vmem>>, vector<64x128xf32>,
    %c0_16 = arith.constant 0 : index
    %c0_17 = arith.constant 0 : index
    %c1_18 = arith.constant 1 : index
    %c0_19 = arith.constant 0 : index
    %15 = vector.load %arg1[%c0_16, %c0_17, %c1_18, %c0_19] : memref<4x9x9x128xbf16, #tpu.memory_space<vmem>>, vector<1x8x8x128xbf16>
    %16 = vector.shape_cast %15 : vector<1x8x8x128xbf16> to vector<8x8x128xbf16>
    %17 = vector.shape_cast %16 : vector<8x8x128xbf16> to vector<64x128xbf16>
    %c2 = arith.constant 2 : index
    %c0_20 = arith.constant 0 : index
    %c0_21 = arith.constant 0 : index
    %c0_22 = arith.constant 0 : index
    %18 = vector.load %arg1[%c2, %c0_20, %c0_21, %c0_22] : memref<4x9x9x128xbf16, #tpu.memory_space<vmem>>, vector<1x8x8x128xbf16>
    %19 = vector.shape_cast %18 : vector<1x8x8x128xbf16> to vector<8x8x128xbf16>
    %20 = vector.shape_cast %19 : vector<8x8x128xbf16> to vector<64x128xbf16>
    %21 = tpu.concatenate %17, %20 in 1 : vector<64x128xbf16>, vector<64x128xbf16> -> vector<64x256xbf16>
    %c0_23 = arith.constant 0 : index
    %c0_24 = arith.constant 0 : index
    %22 = vector.load %arg5[%c0_23, %c0_24] : memref<64x128xf32, #tpu.memory_space<vmem>>, vector<64x128xf32>
    %c1_25 = arith.constant 1 : index
    %c0_26 = arith.constant 0 : index
    %c0_27 = arith.constant 0 : index
    %23 = vector.load %arg2[%c1_25, %c0_26, %c0_27] : memref<5x256x128xbf16, #tpu.memory_space<vmem>>, vector<1x256x128xbf16>
    %24 = vector.shape_cast %23 : vector<1x256x128xbf16> to vector<256x128xbf16>
    %cst_28 = arith.constant dense<0.000000e+00> : vector<64x128xf32>
    %25 = tpu.matmul %21, %24, %cst_28 {dimension_numbers = #tpu.dot_dimension_numbers<[1], [0], [0], [1], [0, 0, 1, 1], [], []>} : vector<64x256xbf16>, vector<256x128xbf16>, vector<64x128xf32> -> vector<64x128xf32>
    %26 = arith.addf %22, %25 : vector<64x128xf32>
    %c0_29 = arith.constant 0 : index
    %c0_30 = arith.constant 0 : index
    %27 = vector.load %arg5[%c0_29, %c0_30] : memref<64x128xf32, #tpu.memory_space<vmem>>, vector<64x128xf32>
    tpu.vector_store %arg5[%c0_29, %c0_30], %26 {strides = array<i32>} : memref<64x128xf32, #tpu.memory_space<vmem>>, vector<64x128xf32>,
    %c3 = arith.constant 3 : index
    %c0_31 = arith.constant 0 : index
    %c0_32 = arith.constant 0 : index
    %c0_33 = arith.constant 0 : index
    %28 = vector.load %arg1[%c3, %c0_31, %c0_32, %c0_33] : memref<4x9x9x128xbf16, #tpu.memory_space<vmem>>, vector<1x8x8x128xbf16>
    %29 = vector.shape_cast %28 : vector<1x8x8x128xbf16> to vector<8x8x128xbf16>
    %30 = vector.shape_cast %29 : vector<8x8x128xbf16> to vector<64x128xbf16>
    %c2_34 = arith.constant 2 : index
    %c0_35 = arith.constant 0 : index
    %c1_36 = arith.constant 1 : index
    %c0_37 = arith.constant 0 : index
    %31 = vector.load %arg1[%c2_34, %c0_35, %c1_36, %c0_37] : memref<4x9x9x128xbf16, #tpu.memory_space<vmem>>, vector<1x8x8x128xbf16>
    %32 = vector.shape_cast %31 : vector<1x8x8x128xbf16> to vector<8x8x128xbf16>
    %33 = vector.shape_cast %32 : vector<8x8x128xbf16> to vector<64x128xbf16>
    %34 = tpu.concatenate %30, %33 in 1 : vector<64x128xbf16>, vector<64x128xbf16> -> vector<64x256xbf16>
    %c0_38 = arith.constant 0 : index
    %c0_39 = arith.constant 0 : index
    %35 = vector.load %arg5[%c0_38, %c0_39] : memref<64x128xf32, #tpu.memory_space<vmem>>, vector<64x128xf32>
    %c2_40 = arith.constant 2 : index
    %c0_41 = arith.constant 0 : index
    %c0_42 = arith.constant 0 : index
    %36 = vector.load %arg2[%c2_40, %c0_41, %c0_42] : memref<5x256x128xbf16, #tpu.memory_space<vmem>>, vector<1x256x128xbf16>
    %37 = vector.shape_cast %36 : vector<1x256x128xbf16> to vector<256x128xbf16>
    %cst_43 = arith.constant dense<0.000000e+00> : vector<64x128xf32>
    %38 = tpu.matmul %34, %37, %cst_43 {dimension_numbers = #tpu.dot_dimension_numbers<[1], [0], [0], [1], [0, 0, 1, 1], [], []>} : vector<64x256xbf16>, vector<256x128xbf16>, vector<64x128xf32> -> vector<64x128xf32>
    %39 = arith.addf %35, %38 : vector<64x128xf32>
    %c0_44 = arith.constant 0 : index
    %c0_45 = arith.constant 0 : index
    %40 = vector.load %arg5[%c0_44, %c0_45] : memref<64x128xf32, #tpu.memory_space<vmem>>, vector<64x128xf32>
    tpu.vector_store %arg5[%c0_44, %c0_45], %39 {strides = array<i32>} : memref<64x128xf32, #tpu.memory_space<vmem>>, vector<64x128xf32>,
    %c0_46 = arith.constant 0 : index
    %c1_47 = arith.constant 1 : index
    %c0_48 = arith.constant 0 : index
    %c0_49 = arith.constant 0 : index
    %41 = vector.load %arg1[%c0_46, %c1_47, %c0_48, %c0_49] : memref<4x9x9x128xbf16, #tpu.memory_space<vmem>>, vector<1x8x8x128xbf16>
    %42 = vector.shape_cast %41 : vector<1x8x8x128xbf16> to vector<8x8x128xbf16>
    %43 = vector.shape_cast %42 : vector<8x8x128xbf16> to vector<64x128xbf16>
    %c1_50 = arith.constant 1 : index
    %c1_51 = arith.constant 1 : index
    %c0_52 = arith.constant 0 : index
    %c0_53 = arith.constant 0 : index
    %44 = vector.load %arg1[%c1_50, %c1_51, %c0_52, %c0_53] : memref<4x9x9x128xbf16, #tpu.memory_space<vmem>>, vector<1x8x8x128xbf16>
    %45 = vector.shape_cast %44 : vector<1x8x8x128xbf16> to vector<8x8x128xbf16>
    %46 = vector.shape_cast %45 : vector<8x8x128xbf16> to vector<64x128xbf16>
    %47 = tpu.concatenate %43, %46 in 1 : vector<64x128xbf16>, vector<64x128xbf16> -> vector<64x256xbf16>
    %c0_54 = arith.constant 0 : index
    %c0_55 = arith.constant 0 : index
    %48 = vector.load %arg5[%c0_54, %c0_55] : memref<64x128xf32, #tpu.memory_space<vmem>>, vector<64x128xf32>
    %c3_56 = arith.constant 3 : index
    %c0_57 = arith.constant 0 : index
    %c0_58 = arith.constant 0 : index
    %49 = vector.load %arg2[%c3_56, %c0_57, %c0_58] : memref<5x256x128xbf16, #tpu.memory_space<vmem>>, vector<1x256x128xbf16>
    %50 = vector.shape_cast %49 : vector<1x256x128xbf16> to vector<256x128xbf16>
    %cst_59 = arith.constant dense<0.000000e+00> : vector<64x128xf32>
    %51 = tpu.matmul %47, %50, %cst_59 {dimension_numbers = #tpu.dot_dimension_numbers<[1], [0], [0], [1], [0, 0, 1, 1], [], []>} : vector<64x256xbf16>, vector<256x128xbf16>, vector<64x128xf32> -> vector<64x128xf32>
    %52 = arith.addf %48, %51 : vector<64x128xf32>
    %c0_60 = arith.constant 0 : index
    %c0_61 = arith.constant 0 : index
    %53 = vector.load %arg5[%c0_60, %c0_61] : memref<64x128xf32, #tpu.memory_space<vmem>>, vector<64x128xf32>
    tpu.vector_store %arg5[%c0_60, %c0_61], %52 {strides = array<i32>} : memref<64x128xf32, #tpu.memory_space<vmem>>, vector<64x128xf32>,
    %c0_62 = arith.constant 0 : index
    %c1_63 = arith.constant 1 : index
    %c1_64 = arith.constant 1 : index
    %c0_65 = arith.constant 0 : index
    %54 = vector.load %arg1[%c0_62, %c1_63, %c1_64, %c0_65] : memref<4x9x9x128xbf16, #tpu.memory_space<vmem>>, vector<1x8x8x128xbf16>
    %55 = vector.shape_cast %54 : vector<1x8x8x128xbf16> to vector<8x8x128xbf16>
    %56 = vector.shape_cast %55 : vector<8x8x128xbf16> to vector<64x128xbf16>
    %c0_66 = arith.constant 0 : index
    %c1_67 = arith.constant 1 : index
    %c1_68 = arith.constant 1 : index
    %c0_69 = arith.constant 0 : index
    %57 = vector.load %arg1[%c0_66, %c1_67, %c1_68, %c0_69] : memref<4x9x9x128xbf16, #tpu.memory_space<vmem>>, vector<1x8x8x128xbf16>
    %58 = vector.shape_cast %57 : vector<1x8x8x128xbf16> to vector<8x8x128xbf16>
    %59 = vector.shape_cast %58 : vector<8x8x128xbf16> to vector<64x128xbf16>
    %60 = tpu.concatenate %56, %59 in 1 : vector<64x128xbf16>, vector<64x128xbf16> -> vector<64x256xbf16>
    %c0_70 = arith.constant 0 : index
    %c0_71 = arith.constant 0 : index
    %61 = vector.load %arg5[%c0_70, %c0_71] : memref<64x128xf32, #tpu.memory_space<vmem>>, vector<64x128xf32>
    %c4 = arith.constant 4 : index
    %c0_72 = arith.constant 0 : index
    %c0_73 = arith.constant 0 : index
    %62 = vector.load %arg2[%c4, %c0_72, %c0_73] : memref<5x256x128xbf16, #tpu.memory_space<vmem>>, vector<1x256x128xbf16>
    %63 = vector.shape_cast %62 : vector<1x256x128xbf16> to vector<256x128xbf16>
    %cst_74 = arith.constant dense<0.000000e+00> : vector<64x128xf32>
    %64 = tpu.matmul %60, %63, %cst_74 {dimension_numbers = #tpu.dot_dimension_numbers<[1], [0], [0], [1], [0, 0, 1, 1], [], []>} : vector<64x256xbf16>, vector<256x128xbf16>, vector<64x128xf32> -> vector<64x128xf32>
    %65 = arith.addf %61, %64 : vector<64x128xf32>
    %c0_75 = arith.constant 0 : index
    %c0_76 = arith.constant 0 : index
    %66 = vector.load %arg5[%c0_75, %c0_76] : memref<64x128xf32, #tpu.memory_space<vmem>>, vector<64x128xf32>
    tpu.vector_store %arg5[%c0_75, %c0_76], %65 {strides = array<i32>} : memref<64x128xf32, #tpu.memory_space<vmem>>, vector<64x128xf32>,
    %c0_77 = arith.constant 0 : index
    %c0_78 = arith.constant 0 : index
    %67 = vector.load %arg5[%c0_77, %c0_78] : memref<64x128xf32, #tpu.memory_space<vmem>>, vector<64x128xf32>
    %c0_79 = arith.constant 0 : index
    %c0_80 = arith.constant 0 : index
    %68 = vector.load %arg3[%c0_79, %c0_80] : memref<1x128xf32, #tpu.memory_space<vmem>>, vector<1x128xf32>
    %69 = vector.broadcast %68 : vector<1x128xf32> to vector<64x128xf32>
    %70 = arith.addf %67, %69 : vector<64x128xf32>
    %cst_81 = arith.constant 0.000000e+00 : f32
    %71 = vector.broadcast %cst_81 : f32 to vector<64x128xf32>
    %72 = arith.maximumf %70, %71 : vector<64x128xf32>
    %73 = arith.truncf %72 : vector<64x128xf32> to vector<64x128xbf16>
    %c0_82 = arith.constant 0 : index
    %c0_83 = arith.constant 0 : index
    %c0_84 = arith.constant 0 : index
    %74 = vector.load %arg4[%c0_82, %c0_83, %c0_84] : memref<1x64x128xbf16, #tpu.memory_space<vmem>>, vector<1x64x128xbf16>
    %75 = vector.shape_cast %74 : vector<1x64x128xbf16> to vector<64x128xbf16>
    %76 = vector.shape_cast %73 : vector<64x128xbf16> to vector<1x64x128xbf16>
    tpu.vector_store %arg4[%c0_82, %c0_83, %c0_84], %76 {strides = array<i32>} : memref<1x64x128xbf16, #tpu.memory_space<vmem>>, vector<1x64x128xbf16>,
    return
  }
  func.func @transform_0(%arg0: i32) -> (i32, i32, i32, i32) {
    %c0_i32 = arith.constant 0 : i32
    %c0_i32_0 = arith.constant 0 : i32
    %c0_i32_1 = arith.constant 0 : i32
    %c0_i32_2 = arith.constant 0 : i32
    return %arg0, %c0_i32, %c0_i32_0, %c0_i32_1 : i32, i32, i32, i32
  }
  func.func @transform_1(%arg0: i32) -> (i32, i32, i32) {
    %c0_i32 = arith.constant 0 : i32
    %c0_i32_0 = arith.constant 0 : i32
    %c0_i32_1 = arith.constant 0 : i32
    %c0_i32_2 = arith.constant 0 : i32
    return %c0_i32, %c0_i32_0, %c0_i32_1 : i32, i32, i32
  }
  func.func @transform_2(%arg0: i32) -> (i32, i32) {
    %c0_i32 = arith.constant 0 : i32
    %c0_i32_0 = arith.constant 0 : i32
    %c0_i32_1 = arith.constant 0 : i32
    return %c0_i32, %c0_i32_0 : i32, i32
  }
  func.func @transform_3(%arg0: i32) -> (i32, i32, i32) {
    %c0_i32 = arith.constant 0 : i32
    %c0_i32_0 = arith.constant 0 : i32
    %c0_i32_1 = arith.constant 0 : i32
    return %arg0, %c0_i32, %c0_i32_0 : i32, i32, i32
  }
}

module attributes {stable_mosaic.version = 11 : i64} {
  func.func @_mlp_head_kernel(%arg0: i32, %arg1: memref<8x128xbf16, #tpu.memory_space<vmem>>, %arg2: memref<128x128xbf16, #tpu.memory_space<vmem>>, %arg3: memref<1x128xf32, #tpu.memory_space<vmem>>, %arg4: memref<128x128xbf16, #tpu.memory_space<vmem>>, %arg5: memref<1x128xf32, #tpu.memory_space<vmem>>, %arg6: memref<8x128xf32, #tpu.memory_space<vmem>>) attributes {dimension_semantics = [#tpu.dimension_semantics<arbitrary>], iteration_bounds = array<i64: 1>, scalar_prefetch = 0 : i64, scratch_operands = 0 : i64, tpu.core_type = #tpu.core_type<tc>, window_params = [{pipeline_mode = #tpu.pipeline_mode<synchronous>, transform_indices = @transform_0, window_bounds = array<i64: 8, 128>}, {pipeline_mode = #tpu.pipeline_mode<synchronous>, transform_indices = @transform_1, window_bounds = array<i64: 128, 128>}, {pipeline_mode = #tpu.pipeline_mode<synchronous>, transform_indices = @transform_2, window_bounds = array<i64: 1, 128>}, {pipeline_mode = #tpu.pipeline_mode<synchronous>, transform_indices = @transform_3, window_bounds = array<i64: 128, 128>}, {pipeline_mode = #tpu.pipeline_mode<synchronous>, transform_indices = @transform_4, window_bounds = array<i64: 1, 128>}, {pipeline_mode = #tpu.pipeline_mode<synchronous>, transform_indices = @transform_5, window_bounds = array<i64: 8, 128>}]} {
    %c0 = arith.constant 0 : index
    %c0_0 = arith.constant 0 : index
    %0 = vector.load %arg1[%c0, %c0_0] : memref<8x128xbf16, #tpu.memory_space<vmem>>, vector<8x128xbf16>
    %c0_1 = arith.constant 0 : index
    %c0_2 = arith.constant 0 : index
    %1 = vector.load %arg2[%c0_1, %c0_2] : memref<128x128xbf16, #tpu.memory_space<vmem>>, vector<128x128xbf16>
    %cst = arith.constant dense<0.000000e+00> : vector<8x128xf32>
    %2 = tpu.matmul %0, %1, %cst {dimension_numbers = #tpu.dot_dimension_numbers<[1], [0], [0], [1], [0, 0, 1, 1], [], []>} : vector<8x128xbf16>, vector<128x128xbf16>, vector<8x128xf32> -> vector<8x128xf32>
    %c0_3 = arith.constant 0 : index
    %c0_4 = arith.constant 0 : index
    %3 = vector.load %arg3[%c0_3, %c0_4] : memref<1x128xf32, #tpu.memory_space<vmem>>, vector<1x128xf32>
    %4 = vector.broadcast %3 : vector<1x128xf32> to vector<8x128xf32>
    %5 = arith.addf %2, %4 : vector<8x128xf32>
    %cst_5 = arith.constant 0.000000e+00 : f32
    %6 = vector.broadcast %cst_5 : f32 to vector<8x128xf32>
    %7 = arith.maximumf %5, %6 : vector<8x128xf32>
    %8 = arith.truncf %7 : vector<8x128xf32> to vector<8x128xbf16>
    %c0_6 = arith.constant 0 : index
    %c0_7 = arith.constant 0 : index
    %9 = vector.load %arg4[%c0_6, %c0_7] : memref<128x128xbf16, #tpu.memory_space<vmem>>, vector<128x128xbf16>
    %cst_8 = arith.constant dense<0.000000e+00> : vector<8x128xf32>
    %10 = tpu.matmul %8, %9, %cst_8 {dimension_numbers = #tpu.dot_dimension_numbers<[1], [0], [0], [1], [0, 0, 1, 1], [], []>} : vector<8x128xbf16>, vector<128x128xbf16>, vector<8x128xf32> -> vector<8x128xf32>
    %c0_9 = arith.constant 0 : index
    %c0_10 = arith.constant 0 : index
    %11 = vector.load %arg5[%c0_9, %c0_10] : memref<1x128xf32, #tpu.memory_space<vmem>>, vector<1x128xf32>
    %12 = vector.broadcast %11 : vector<1x128xf32> to vector<8x128xf32>
    %13 = arith.addf %10, %12 : vector<8x128xf32>
    %c0_11 = arith.constant 0 : index
    %c0_12 = arith.constant 0 : index
    %14 = vector.load %arg6[%c0_11, %c0_12] : memref<8x128xf32, #tpu.memory_space<vmem>>, vector<8x128xf32>
    tpu.vector_store %arg6[%c0_11, %c0_12], %13 {strides = array<i32>} : memref<8x128xf32, #tpu.memory_space<vmem>>, vector<8x128xf32>,
    return
  }
  func.func @transform_0(%arg0: i32) -> (i32, i32) {
    %c0_i32 = arith.constant 0 : i32
    %c0_i32_0 = arith.constant 0 : i32
    %c0_i32_1 = arith.constant 0 : i32
    return %c0_i32, %c0_i32_0 : i32, i32
  }
  func.func @transform_1(%arg0: i32) -> (i32, i32) {
    %c0_i32 = arith.constant 0 : i32
    %c0_i32_0 = arith.constant 0 : i32
    %c0_i32_1 = arith.constant 0 : i32
    return %c0_i32, %c0_i32_0 : i32, i32
  }
  func.func @transform_2(%arg0: i32) -> (i32, i32) {
    %c0_i32 = arith.constant 0 : i32
    %c0_i32_0 = arith.constant 0 : i32
    %c0_i32_1 = arith.constant 0 : i32
    return %c0_i32, %c0_i32_0 : i32, i32
  }
  func.func @transform_3(%arg0: i32) -> (i32, i32) {
    %c0_i32 = arith.constant 0 : i32
    %c0_i32_0 = arith.constant 0 : i32
    %c0_i32_1 = arith.constant 0 : i32
    return %c0_i32, %c0_i32_0 : i32, i32
  }
  func.func @transform_4(%arg0: i32) -> (i32, i32) {
    %c0_i32 = arith.constant 0 : i32
    %c0_i32_0 = arith.constant 0 : i32
    %c0_i32_1 = arith.constant 0 : i32
    return %c0_i32, %c0_i32_0 : i32, i32
  }
  func.func @transform_5(%arg0: i32) -> (i32, i32) {
    %c0_i32 = arith.constant 0 : i32
    %c0_i32_0 = arith.constant 0 : i32
    %c0_i32_1 = arith.constant 0 : i32
    return %c0_i32, %c0_i32_0 : i32, i32
  }
}

module attributes {stable_mosaic.version = 11 : i64} {
  func.func @_conv_pair_kernel(%arg0: i32, %arg1: memref<1x10x10x128xbf16, #tpu.memory_space<vmem>>, %arg2: memref<5x256x128xbf16, #tpu.memory_space<vmem>>, %arg3: memref<1x128xf32, #tpu.memory_space<vmem>>, %arg4: memref<128x128xbf16, #tpu.memory_space<vmem>>, %arg5: memref<1x128xf32, #tpu.memory_space<vmem>>, %arg6: memref<1x64x128xf32, #tpu.memory_space<vmem>>, %arg7: memref<64x128xf32, #tpu.memory_space<vmem>>) attributes {dimension_semantics = [#tpu.dimension_semantics<parallel>], iteration_bounds = array<i64: 2>, scalar_prefetch = 0 : i64, scratch_operands = 1 : i64, tpu.core_type = #tpu.core_type<tc>, window_params = [{transform_indices = @transform_0, window_bounds = array<i64: 1, 10, 10, 128>}, {pipeline_mode = #tpu.pipeline_mode<synchronous>, transform_indices = @transform_1, window_bounds = array<i64: 5, 256, 128>}, {pipeline_mode = #tpu.pipeline_mode<synchronous>, transform_indices = @transform_2, window_bounds = array<i64: 1, 128>}, {pipeline_mode = #tpu.pipeline_mode<synchronous>, transform_indices = @transform_3, window_bounds = array<i64: 128, 128>}, {pipeline_mode = #tpu.pipeline_mode<synchronous>, transform_indices = @transform_4, window_bounds = array<i64: 1, 128>}, {transform_indices = @transform_5, window_bounds = array<i64: 1, 64, 128>}]} {
    %cst = arith.constant 0.000000e+00 : f32
    %0 = vector.broadcast %cst : f32 to vector<64x128xf32>
    %c0 = arith.constant 0 : index
    %c0_0 = arith.constant 0 : index
    %1 = vector.load %arg7[%c0, %c0_0] : memref<64x128xf32, #tpu.memory_space<vmem>>, vector<64x128xf32>
    tpu.vector_store %arg7[%c0, %c0_0], %0 {strides = array<i32>} : memref<64x128xf32, #tpu.memory_space<vmem>>, vector<64x128xf32>,
    %c0_1 = arith.constant 0 : index
    %c0_2 = arith.constant 0 : index
    %c0_3 = arith.constant 0 : index
    %c0_4 = arith.constant 0 : index
    %2 = vector.load %arg1[%c0_1, %c0_2, %c0_3, %c0_4] : memref<1x10x10x128xbf16, #tpu.memory_space<vmem>>, vector<1x8x8x128xbf16>
    %3 = vector.shape_cast %2 : vector<1x8x8x128xbf16> to vector<8x8x128xbf16>
    %4 = vector.shape_cast %3 : vector<8x8x128xbf16> to vector<64x128xbf16>
    %c0_5 = arith.constant 0 : index
    %c0_6 = arith.constant 0 : index
    %c1 = arith.constant 1 : index
    %c0_7 = arith.constant 0 : index
    %5 = vector.load %arg1[%c0_5, %c0_6, %c1, %c0_7] : memref<1x10x10x128xbf16, #tpu.memory_space<vmem>>, vector<1x8x8x128xbf16>
    %6 = vector.shape_cast %5 : vector<1x8x8x128xbf16> to vector<8x8x128xbf16>
    %7 = vector.shape_cast %6 : vector<8x8x128xbf16> to vector<64x128xbf16>
    %8 = tpu.concatenate %4, %7 in 1 : vector<64x128xbf16>, vector<64x128xbf16> -> vector<64x256xbf16>
    %c0_8 = arith.constant 0 : index
    %c0_9 = arith.constant 0 : index
    %9 = vector.load %arg7[%c0_8, %c0_9] : memref<64x128xf32, #tpu.memory_space<vmem>>, vector<64x128xf32>
    %c0_10 = arith.constant 0 : index
    %c0_11 = arith.constant 0 : index
    %c0_12 = arith.constant 0 : index
    %10 = vector.load %arg2[%c0_10, %c0_11, %c0_12] : memref<5x256x128xbf16, #tpu.memory_space<vmem>>, vector<1x256x128xbf16>
    %11 = vector.shape_cast %10 : vector<1x256x128xbf16> to vector<256x128xbf16>
    %cst_13 = arith.constant dense<0.000000e+00> : vector<64x128xf32>
    %12 = tpu.matmul %8, %11, %cst_13 {dimension_numbers = #tpu.dot_dimension_numbers<[1], [0], [0], [1], [0, 0, 1, 1], [], []>} : vector<64x256xbf16>, vector<256x128xbf16>, vector<64x128xf32> -> vector<64x128xf32>
    %13 = arith.addf %9, %12 : vector<64x128xf32>
    %c0_14 = arith.constant 0 : index
    %c0_15 = arith.constant 0 : index
    %14 = vector.load %arg7[%c0_14, %c0_15] : memref<64x128xf32, #tpu.memory_space<vmem>>, vector<64x128xf32>
    tpu.vector_store %arg7[%c0_14, %c0_15], %13 {strides = array<i32>} : memref<64x128xf32, #tpu.memory_space<vmem>>, vector<64x128xf32>,
    %c0_16 = arith.constant 0 : index
    %c0_17 = arith.constant 0 : index
    %c2 = arith.constant 2 : index
    %c0_18 = arith.constant 0 : index
    %15 = vector.load %arg1[%c0_16, %c0_17, %c2, %c0_18] : memref<1x10x10x128xbf16, #tpu.memory_space<vmem>>, vector<1x8x8x128xbf16>
    %16 = vector.shape_cast %15 : vector<1x8x8x128xbf16> to vector<8x8x128xbf16>
    %17 = vector.shape_cast %16 : vector<8x8x128xbf16> to vector<64x128xbf16>
    %c0_19 = arith.constant 0 : index
    %c1_20 = arith.constant 1 : index
    %c0_21 = arith.constant 0 : index
    %c0_22 = arith.constant 0 : index
    %18 = vector.load %arg1[%c0_19, %c1_20, %c0_21, %c0_22] : memref<1x10x10x128xbf16, #tpu.memory_space<vmem>>, vector<1x8x8x128xbf16>
    %19 = vector.shape_cast %18 : vector<1x8x8x128xbf16> to vector<8x8x128xbf16>
    %20 = vector.shape_cast %19 : vector<8x8x128xbf16> to vector<64x128xbf16>
    %21 = tpu.concatenate %17, %20 in 1 : vector<64x128xbf16>, vector<64x128xbf16> -> vector<64x256xbf16>
    %c0_23 = arith.constant 0 : index
    %c0_24 = arith.constant 0 : index
    %22 = vector.load %arg7[%c0_23, %c0_24] : memref<64x128xf32, #tpu.memory_space<vmem>>, vector<64x128xf32>
    %c1_25 = arith.constant 1 : index
    %c0_26 = arith.constant 0 : index
    %c0_27 = arith.constant 0 : index
    %23 = vector.load %arg2[%c1_25, %c0_26, %c0_27] : memref<5x256x128xbf16, #tpu.memory_space<vmem>>, vector<1x256x128xbf16>
    %24 = vector.shape_cast %23 : vector<1x256x128xbf16> to vector<256x128xbf16>
    %cst_28 = arith.constant dense<0.000000e+00> : vector<64x128xf32>
    %25 = tpu.matmul %21, %24, %cst_28 {dimension_numbers = #tpu.dot_dimension_numbers<[1], [0], [0], [1], [0, 0, 1, 1], [], []>} : vector<64x256xbf16>, vector<256x128xbf16>, vector<64x128xf32> -> vector<64x128xf32>
    %26 = arith.addf %22, %25 : vector<64x128xf32>
    %c0_29 = arith.constant 0 : index
    %c0_30 = arith.constant 0 : index
    %27 = vector.load %arg7[%c0_29, %c0_30] : memref<64x128xf32, #tpu.memory_space<vmem>>, vector<64x128xf32>
    tpu.vector_store %arg7[%c0_29, %c0_30], %26 {strides = array<i32>} : memref<64x128xf32, #tpu.memory_space<vmem>>, vector<64x128xf32>,
    %c0_31 = arith.constant 0 : index
    %c1_32 = arith.constant 1 : index
    %c1_33 = arith.constant 1 : index
    %c0_34 = arith.constant 0 : index
    %28 = vector.load %arg1[%c0_31, %c1_32, %c1_33, %c0_34] : memref<1x10x10x128xbf16, #tpu.memory_space<vmem>>, vector<1x8x8x128xbf16>
    %29 = vector.shape_cast %28 : vector<1x8x8x128xbf16> to vector<8x8x128xbf16>
    %30 = vector.shape_cast %29 : vector<8x8x128xbf16> to vector<64x128xbf16>
    %c0_35 = arith.constant 0 : index
    %c1_36 = arith.constant 1 : index
    %c2_37 = arith.constant 2 : index
    %c0_38 = arith.constant 0 : index
    %31 = vector.load %arg1[%c0_35, %c1_36, %c2_37, %c0_38] : memref<1x10x10x128xbf16, #tpu.memory_space<vmem>>, vector<1x8x8x128xbf16>
    %32 = vector.shape_cast %31 : vector<1x8x8x128xbf16> to vector<8x8x128xbf16>
    %33 = vector.shape_cast %32 : vector<8x8x128xbf16> to vector<64x128xbf16>
    %34 = tpu.concatenate %30, %33 in 1 : vector<64x128xbf16>, vector<64x128xbf16> -> vector<64x256xbf16>
    %c0_39 = arith.constant 0 : index
    %c0_40 = arith.constant 0 : index
    %35 = vector.load %arg7[%c0_39, %c0_40] : memref<64x128xf32, #tpu.memory_space<vmem>>, vector<64x128xf32>
    %c2_41 = arith.constant 2 : index
    %c0_42 = arith.constant 0 : index
    %c0_43 = arith.constant 0 : index
    %36 = vector.load %arg2[%c2_41, %c0_42, %c0_43] : memref<5x256x128xbf16, #tpu.memory_space<vmem>>, vector<1x256x128xbf16>
    %37 = vector.shape_cast %36 : vector<1x256x128xbf16> to vector<256x128xbf16>
    %cst_44 = arith.constant dense<0.000000e+00> : vector<64x128xf32>
    %38 = tpu.matmul %34, %37, %cst_44 {dimension_numbers = #tpu.dot_dimension_numbers<[1], [0], [0], [1], [0, 0, 1, 1], [], []>} : vector<64x256xbf16>, vector<256x128xbf16>, vector<64x128xf32> -> vector<64x128xf32>
    %39 = arith.addf %35, %38 : vector<64x128xf32>
    %c0_45 = arith.constant 0 : index
    %c0_46 = arith.constant 0 : index
    %40 = vector.load %arg7[%c0_45, %c0_46] : memref<64x128xf32, #tpu.memory_space<vmem>>, vector<64x128xf32>
    tpu.vector_store %arg7[%c0_45, %c0_46], %39 {strides = array<i32>} : memref<64x128xf32, #tpu.memory_space<vmem>>, vector<64x128xf32>,
    %c0_47 = arith.constant 0 : index
    %c2_48 = arith.constant 2 : index
    %c0_49 = arith.constant 0 : index
    %c0_50 = arith.constant 0 : index
    %41 = vector.load %arg1[%c0_47, %c2_48, %c0_49, %c0_50] : memref<1x10x10x128xbf16, #tpu.memory_space<vmem>>, vector<1x8x8x128xbf16>
    %42 = vector.shape_cast %41 : vector<1x8x8x128xbf16> to vector<8x8x128xbf16>
    %43 = vector.shape_cast %42 : vector<8x8x128xbf16> to vector<64x128xbf16>
    %c0_51 = arith.constant 0 : index
    %c2_52 = arith.constant 2 : index
    %c1_53 = arith.constant 1 : index
    %c0_54 = arith.constant 0 : index
    %44 = vector.load %arg1[%c0_51, %c2_52, %c1_53, %c0_54] : memref<1x10x10x128xbf16, #tpu.memory_space<vmem>>, vector<1x8x8x128xbf16>
    %45 = vector.shape_cast %44 : vector<1x8x8x128xbf16> to vector<8x8x128xbf16>
    %46 = vector.shape_cast %45 : vector<8x8x128xbf16> to vector<64x128xbf16>
    %47 = tpu.concatenate %43, %46 in 1 : vector<64x128xbf16>, vector<64x128xbf16> -> vector<64x256xbf16>
    %c0_55 = arith.constant 0 : index
    %c0_56 = arith.constant 0 : index
    %48 = vector.load %arg7[%c0_55, %c0_56] : memref<64x128xf32, #tpu.memory_space<vmem>>, vector<64x128xf32>
    %c3 = arith.constant 3 : index
    %c0_57 = arith.constant 0 : index
    %c0_58 = arith.constant 0 : index
    %49 = vector.load %arg2[%c3, %c0_57, %c0_58] : memref<5x256x128xbf16, #tpu.memory_space<vmem>>, vector<1x256x128xbf16>
    %50 = vector.shape_cast %49 : vector<1x256x128xbf16> to vector<256x128xbf16>
    %cst_59 = arith.constant dense<0.000000e+00> : vector<64x128xf32>
    %51 = tpu.matmul %47, %50, %cst_59 {dimension_numbers = #tpu.dot_dimension_numbers<[1], [0], [0], [1], [0, 0, 1, 1], [], []>} : vector<64x256xbf16>, vector<256x128xbf16>, vector<64x128xf32> -> vector<64x128xf32>
    %52 = arith.addf %48, %51 : vector<64x128xf32>
    %c0_60 = arith.constant 0 : index
    %c0_61 = arith.constant 0 : index
    %53 = vector.load %arg7[%c0_60, %c0_61] : memref<64x128xf32, #tpu.memory_space<vmem>>, vector<64x128xf32>
    tpu.vector_store %arg7[%c0_60, %c0_61], %52 {strides = array<i32>} : memref<64x128xf32, #tpu.memory_space<vmem>>, vector<64x128xf32>,
    %c0_62 = arith.constant 0 : index
    %c2_63 = arith.constant 2 : index
    %c2_64 = arith.constant 2 : index
    %c0_65 = arith.constant 0 : index
    %54 = vector.load %arg1[%c0_62, %c2_63, %c2_64, %c0_65] : memref<1x10x10x128xbf16, #tpu.memory_space<vmem>>, vector<1x8x8x128xbf16>
    %55 = vector.shape_cast %54 : vector<1x8x8x128xbf16> to vector<8x8x128xbf16>
    %56 = vector.shape_cast %55 : vector<8x8x128xbf16> to vector<64x128xbf16>
    %c0_66 = arith.constant 0 : index
    %c2_67 = arith.constant 2 : index
    %c2_68 = arith.constant 2 : index
    %c0_69 = arith.constant 0 : index
    %57 = vector.load %arg1[%c0_66, %c2_67, %c2_68, %c0_69] : memref<1x10x10x128xbf16, #tpu.memory_space<vmem>>, vector<1x8x8x128xbf16>
    %58 = vector.shape_cast %57 : vector<1x8x8x128xbf16> to vector<8x8x128xbf16>
    %59 = vector.shape_cast %58 : vector<8x8x128xbf16> to vector<64x128xbf16>
    %60 = tpu.concatenate %56, %59 in 1 : vector<64x128xbf16>, vector<64x128xbf16> -> vector<64x256xbf16>
    %c0_70 = arith.constant 0 : index
    %c0_71 = arith.constant 0 : index
    %61 = vector.load %arg7[%c0_70, %c0_71] : memref<64x128xf32, #tpu.memory_space<vmem>>, vector<64x128xf32>
    %c4 = arith.constant 4 : index
    %c0_72 = arith.constant 0 : index
    %c0_73 = arith.constant 0 : index
    %62 = vector.load %arg2[%c4, %c0_72, %c0_73] : memref<5x256x128xbf16, #tpu.memory_space<vmem>>, vector<1x256x128xbf16>
    %63 = vector.shape_cast %62 : vector<1x256x128xbf16> to vector<256x128xbf16>
    %cst_74 = arith.constant dense<0.000000e+00> : vector<64x128xf32>
    %64 = tpu.matmul %60, %63, %cst_74 {dimension_numbers = #tpu.dot_dimension_numbers<[1], [0], [0], [1], [0, 0, 1, 1], [], []>} : vector<64x256xbf16>, vector<256x128xbf16>, vector<64x128xf32> -> vector<64x128xf32>
    %65 = arith.addf %61, %64 : vector<64x128xf32>
    %c0_75 = arith.constant 0 : index
    %c0_76 = arith.constant 0 : index
    %66 = vector.load %arg7[%c0_75, %c0_76] : memref<64x128xf32, #tpu.memory_space<vmem>>, vector<64x128xf32>
    tpu.vector_store %arg7[%c0_75, %c0_76], %65 {strides = array<i32>} : memref<64x128xf32, #tpu.memory_space<vmem>>, vector<64x128xf32>,
    %c0_77 = arith.constant 0 : index
    %c0_78 = arith.constant 0 : index
    %67 = vector.load %arg7[%c0_77, %c0_78] : memref<64x128xf32, #tpu.memory_space<vmem>>, vector<64x128xf32>
    %c0_79 = arith.constant 0 : index
    %c0_80 = arith.constant 0 : index
    %68 = vector.load %arg3[%c0_79, %c0_80] : memref<1x128xf32, #tpu.memory_space<vmem>>, vector<1x128xf32>
    %69 = vector.broadcast %68 : vector<1x128xf32> to vector<64x128xf32>
    %70 = arith.addf %67, %69 : vector<64x128xf32>
    %cst_81 = arith.constant 0.000000e+00 : f32
    %71 = vector.broadcast %cst_81 : f32 to vector<64x128xf32>
    %72 = arith.maximumf %70, %71 : vector<64x128xf32>
    %73 = arith.truncf %72 : vector<64x128xf32> to vector<64x128xbf16>
    %c0_82 = arith.constant 0 : index
    %c0_83 = arith.constant 0 : index
    %74 = vector.load %arg4[%c0_82, %c0_83] : memref<128x128xbf16, #tpu.memory_space<vmem>>, vector<128x128xbf16>
    %cst_84 = arith.constant dense<0.000000e+00> : vector<64x128xf32>
    %75 = tpu.matmul %73, %74, %cst_84 {dimension_numbers = #tpu.dot_dimension_numbers<[1], [0], [0], [1], [0, 0, 1, 1], [], []>} : vector<64x128xbf16>, vector<128x128xbf16>, vector<64x128xf32> -> vector<64x128xf32>
    %c0_85 = arith.constant 0 : index
    %c0_86 = arith.constant 0 : index
    %76 = vector.load %arg5[%c0_85, %c0_86] : memref<1x128xf32, #tpu.memory_space<vmem>>, vector<1x128xf32>
    %77 = vector.broadcast %76 : vector<1x128xf32> to vector<64x128xf32>
    %78 = arith.addf %75, %77 : vector<64x128xf32>
    %c0_87 = arith.constant 0 : index
    %c0_88 = arith.constant 0 : index
    %c0_89 = arith.constant 0 : index
    %79 = vector.load %arg6[%c0_87, %c0_88, %c0_89] : memref<1x64x128xf32, #tpu.memory_space<vmem>>, vector<1x64x128xf32>
    %80 = vector.shape_cast %79 : vector<1x64x128xf32> to vector<64x128xf32>
    %81 = vector.shape_cast %78 : vector<64x128xf32> to vector<1x64x128xf32>
    tpu.vector_store %arg6[%c0_87, %c0_88, %c0_89], %81 {strides = array<i32>} : memref<1x64x128xf32, #tpu.memory_space<vmem>>, vector<1x64x128xf32>,
    return
  }
  func.func @transform_0(%arg0: i32) -> (i32, i32, i32, i32) {
    %c0_i32 = arith.constant 0 : i32
    %c0_i32_0 = arith.constant 0 : i32
    %c0_i32_1 = arith.constant 0 : i32
    %c0_i32_2 = arith.constant 0 : i32
    return %arg0, %c0_i32, %c0_i32_0, %c0_i32_1 : i32, i32, i32, i32
  }
  func.func @transform_1(%arg0: i32) -> (i32, i32, i32) {
    %c0_i32 = arith.constant 0 : i32
    %c0_i32_0 = arith.constant 0 : i32
    %c0_i32_1 = arith.constant 0 : i32
    %c0_i32_2 = arith.constant 0 : i32
    return %c0_i32, %c0_i32_0, %c0_i32_1 : i32, i32, i32
  }
  func.func @transform_2(%arg0: i32) -> (i32, i32) {
    %c0_i32 = arith.constant 0 : i32
    %c0_i32_0 = arith.constant 0 : i32
    %c0_i32_1 = arith.constant 0 : i32
    return %c0_i32, %c0_i32_0 : i32, i32
  }
  func.func @transform_3(%arg0: i32) -> (i32, i32) {
    %c0_i32 = arith.constant 0 : i32
    %c0_i32_0 = arith.constant 0 : i32
    %c0_i32_1 = arith.constant 0 : i32
    return %c0_i32, %c0_i32_0 : i32, i32
  }
  func.func @transform_4(%arg0: i32) -> (i32, i32) {
    %c0_i32 = arith.constant 0 : i32
    %c0_i32_0 = arith.constant 0 : i32
    %c0_i32_1 = arith.constant 0 : i32
    return %c0_i32, %c0_i32_0 : i32, i32
  }
  func.func @transform_5(%arg0: i32) -> (i32, i32, i32) {
    %c0_i32 = arith.constant 0 : i32
    %c0_i32_0 = arith.constant 0 : i32
    %c0_i32_1 = arith.constant 0 : i32
    return %arg0, %c0_i32, %c0_i32_0 : i32, i32, i32
  }
}

module attributes {stable_mosaic.version = 11 : i64} {
  func.func @_apply_deltas_kernel(%arg0: i32, %arg1: memref<8x768xf32, #tpu.memory_space<vmem>>, %arg2: memref<4x768xf32, #tpu.memory_space<vmem>>) attributes {dimension_semantics = [#tpu.dimension_semantics<arbitrary>], iteration_bounds = array<i64: 1>, scalar_prefetch = 0 : i64, scratch_operands = 0 : i64, tpu.core_type = #tpu.core_type<tc>, window_params = [{pipeline_mode = #tpu.pipeline_mode<synchronous>, transform_indices = @transform_0, window_bounds = array<i64: 8, 768>}, {pipeline_mode = #tpu.pipeline_mode<synchronous>, transform_indices = @transform_1, window_bounds = array<i64: 4, 768>}]} {
    %c0 = arith.constant 0 : index
    %c0_0 = arith.constant 0 : index
    %0 = vector.load %arg1[%c0, %c0_0] : memref<8x768xf32, #tpu.memory_space<vmem>>, vector<8x768xf32>
    %1 = vector.extract_strided_slice %0 {offsets = [0, 0], sizes = [1, 768], strides = [1, 1]} : vector<8x768xf32> to vector<1x768xf32>
    %2 = vector.extract_strided_slice %0 {offsets = [1, 0], sizes = [1, 768], strides = [1, 1]} : vector<8x768xf32> to vector<1x768xf32>
    %3 = vector.extract_strided_slice %0 {offsets = [2, 0], sizes = [1, 768], strides = [1, 1]} : vector<8x768xf32> to vector<1x768xf32>
    %4 = vector.extract_strided_slice %0 {offsets = [3, 0], sizes = [1, 768], strides = [1, 1]} : vector<8x768xf32> to vector<1x768xf32>
    %5 = vector.extract_strided_slice %0 {offsets = [4, 0], sizes = [1, 768], strides = [1, 1]} : vector<8x768xf32> to vector<1x768xf32>
    %6 = vector.extract_strided_slice %0 {offsets = [5, 0], sizes = [1, 768], strides = [1, 1]} : vector<8x768xf32> to vector<1x768xf32>
    %7 = vector.extract_strided_slice %0 {offsets = [6, 0], sizes = [1, 768], strides = [1, 1]} : vector<8x768xf32> to vector<1x768xf32>
    %cst = arith.constant 4.13516665 : f32
    %8 = vector.broadcast %cst : f32 to vector<1x768xf32>
    %9 = arith.minimumf %7, %8 : vector<1x768xf32>
    %10 = vector.extract_strided_slice %0 {offsets = [7, 0], sizes = [1, 768], strides = [1, 1]} : vector<8x768xf32> to vector<1x768xf32>
    %cst_1 = arith.constant 4.13516665 : f32
    %11 = vector.broadcast %cst_1 : f32 to vector<1x768xf32>
    %12 = arith.minimumf %10, %11 : vector<1x768xf32>
    %13 = arith.subf %3, %1 : vector<1x768xf32>
    %14 = arith.subf %4, %2 : vector<1x768xf32>
    %cst_2 = arith.constant 5.000000e-01 : f32
    %15 = vector.broadcast %cst_2 : f32 to vector<1x768xf32>
    %16 = arith.mulf %15, %13 : vector<1x768xf32>
    %17 = arith.addf %1, %16 : vector<1x768xf32>
    %cst_3 = arith.constant 5.000000e-01 : f32
    %18 = vector.broadcast %cst_3 : f32 to vector<1x768xf32>
    %19 = arith.mulf %18, %14 : vector<1x768xf32>
    %20 = arith.addf %2, %19 : vector<1x768xf32>
    %21 = arith.mulf %5, %13 : vector<1x768xf32>
    %22 = arith.addf %21, %17 : vector<1x768xf32>
    %23 = arith.mulf %6, %14 : vector<1x768xf32>
    %24 = arith.addf %23, %20 : vector<1x768xf32>
    %25 = math.exp %9 : vector<1x768xf32>
    %26 = arith.mulf %25, %13 : vector<1x768xf32>
    %27 = math.exp %12 : vector<1x768xf32>
    %28 = arith.mulf %27, %14 : vector<1x768xf32>
    %cst_4 = arith.constant 5.000000e-01 : f32
    %29 = vector.broadcast %cst_4 : f32 to vector<1x768xf32>
    %30 = arith.mulf %29, %26 : vector<1x768xf32>
    %31 = arith.subf %22, %30 : vector<1x768xf32>
    %cst_5 = arith.constant 0.000000e+00 : f32
    %cst_6 = arith.constant 3.200000e+01 : f32
    %32 = vector.broadcast %cst_5 : f32 to vector<1x768xf32>
    %33 = arith.maximumf %32, %31 : vector<1x768xf32>
    %34 = vector.broadcast %cst_6 : f32 to vector<1x768xf32>
    %35 = arith.minimumf %34, %33 : vector<1x768xf32>
    %c0_7 = arith.constant 0 : index
    %c0_8 = arith.constant 0 : index
    %36 = vector.load %arg2[%c0_7, %c0_8] : memref<4x768xf32, #tpu.memory_space<vmem>>, vector<1x768xf32>
    tpu.vector_store %arg2[%c0_7, %c0_8], %35 {strides = array<i32>} : memref<4x768xf32, #tpu.memory_space<vmem>>, vector<1x768xf32>,
    %cst_9 = arith.constant 5.000000e-01 : f32
    %37 = vector.broadcast %cst_9 : f32 to vector<1x768xf32>
    %38 = arith.mulf %37, %28 : vector<1x768xf32>
    %39 = arith.subf %24, %38 : vector<1x768xf32>
    %cst_10 = arith.constant 0.000000e+00 : f32
    %cst_11 = arith.constant 3.200000e+01 : f32
    %40 = vector.broadcast %cst_10 : f32 to vector<1x768xf32>
    %41 = arith.maximumf %40, %39 : vector<1x768xf32>
    %42 = vector.broadcast %cst_11 : f32 to vector<1x768xf32>
    %43 = arith.minimumf %42, %41 : vector<1x768xf32>
    %c1 = arith.constant 1 : index
    %c0_12 = arith.constant 0 : index
    %44 = vector.load %arg2[%c1, %c0_12] : memref<4x768xf32, #tpu.memory_space<vmem>>, vector<1x768xf32>
    tpu.vector_store %arg2[%c1, %c0_12], %43 {strides = array<i32>} : memref<4x768xf32, #tpu.memory_space<vmem>>, vector<1x768xf32>,
    %cst_13 = arith.constant 5.000000e-01 : f32
    %45 = vector.broadcast %cst_13 : f32 to vector<1x768xf32>
    %46 = arith.mulf %45, %26 : vector<1x768xf32>
    %47 = arith.addf %22, %46 : vector<1x768xf32>
    %cst_14 = arith.constant 0.000000e+00 : f32
    %cst_15 = arith.constant 3.200000e+01 : f32
    %48 = vector.broadcast %cst_14 : f32 to vector<1x768xf32>
    %49 = arith.maximumf %48, %47 : vector<1x768xf32>
    %50 = vector.broadcast %cst_15 : f32 to vector<1x768xf32>
    %51 = arith.minimumf %50, %49 : vector<1x768xf32>
    %c2 = arith.constant 2 : index
    %c0_16 = arith.constant 0 : index
    %52 = vector.load %arg2[%c2, %c0_16] : memref<4x768xf32, #tpu.memory_space<vmem>>, vector<1x768xf32>
    tpu.vector_store %arg2[%c2, %c0_16], %51 {strides = array<i32>} : memref<4x768xf32, #tpu.memory_space<vmem>>, vector<1x768xf32>,
    %cst_17 = arith.constant 5.000000e-01 : f32
    %53 = vector.broadcast %cst_17 : f32 to vector<1x768xf32>
    %54 = arith.mulf %53, %28 : vector<1x768xf32>
    %55 = arith.addf %24, %54 : vector<1x768xf32>
    %cst_18 = arith.constant 0.000000e+00 : f32
    %cst_19 = arith.constant 3.200000e+01 : f32
    %56 = vector.broadcast %cst_18 : f32 to vector<1x768xf32>
    %57 = arith.maximumf %56, %55 : vector<1x768xf32>
    %58 = vector.broadcast %cst_19 : f32 to vector<1x768xf32>
    %59 = arith.minimumf %58, %57 : vector<1x768xf32>
    %c3 = arith.constant 3 : index
    %c0_20 = arith.constant 0 : index
    %60 = vector.load %arg2[%c3, %c0_20] : memref<4x768xf32, #tpu.memory_space<vmem>>, vector<1x768xf32>
    tpu.vector_store %arg2[%c3, %c0_20], %59 {strides = array<i32>} : memref<4x768xf32, #tpu.memory_space<vmem>>, vector<1x768xf32>,
    return
  }
  func.func @transform_0(%arg0: i32) -> (i32, i32) {
    %c0_i32 = arith.constant 0 : i32
    %c0_i32_0 = arith.constant 0 : i32
    %c0_i32_1 = arith.constant 0 : i32
    return %c0_i32, %c0_i32_0 : i32, i32
  }
  func.func @transform_1(%arg0: i32) -> (i32, i32) {
    %c0_i32 = arith.constant 0 : i32
    %c0_i32_0 = arith.constant 0 : i32
    %c0_i32_1 = arith.constant 0 : i32
    return %c0_i32, %c0_i32_0 : i32, i32
  }
}

</mosaic_0001>

<llo_original>
// kernel: forward.5
$region0: #{forward.5}
  #allocation0 [shape = 'u32[]', space=smem, size = 0x4, offset = 0x4, fixed_abs, tag = 'smem constant byte address 0x4 - core index']
  #allocation1 [shape = 'u32[72,128]{1,0:T(1,128)}', space=vmem, size = 0x9000, scoped, tag = 'internal scratch']
  #allocation2 [shape = 'f32[128,128]{1,0:T(8,128)}', space=vmem, size = 0x10000, scoped, tag = 'scratch operand']
  %s0 = inlined_call_operand.vmem [shape: bf16[512,128], index: 0, kind: input, shape index: {}]
  %s1 = inlined_call_operand.vmem [shape: bf16[128,128], index: 1, kind: input, shape index: {}]
  %s2 = inlined_call_operand.vmem [shape: f32[1,128], index: 2, kind: input, shape index: {}]
  %s3 = inlined_call_operand.vmem [shape: bf16[512,128], index: 3, kind: output, shape index: {}]
  %s4 = sld [smem:[#allocation0]]
  $region53: #{forward.5} parent=0
    _
  %s6 = ssub.s32 1, %s4
  %s7 = scalar_select 0, %s6, %s4
  loop: start=0, step=1, limit=6
  $region2: #{forward.5} parent=0 // loop_pre_header
    _
  $region3: #{forward.5} parent=0 // loop_header
    %s9 = sphi 0, %s13
    %p10 = scmp.ge.s32.totalorder %s9, 6
    %s16 = sphi 0, %s35
    %s17 = sphi 0, %s31
    %s18 = sphi 0, %s27
    %s19 = sphi 0, %s16
    %s20 = sphi 0, %s17
    %s21 = sphi 0, %s18
    %s22 = sphi 0, %s19
    %s23 = sphi 0, %s20
    %s24 = sphi 0, %s21
    %s40 = sphi 0, %s42
    %s43 = sphi 0, %s40
    %s44 = sphi 0, %s43
    %s60 = sphi 0, %s44
    %s68 = sphi 0, %s70
    %s71 = sphi 0, %s68
    %s72 = sphi 0, %s71
    %s88 = sphi 0, %s72
    %s94 = sphi 0, %s96
    %s97 = sphi 0, %s94
    %s98 = sphi 0, %s97
    %s114 = sphi 0, %s98
    %s122 = sphi 0, %s124
    %s125 = sphi 0, %s122
    %s126 = sphi 0, %s125
    %s142 = sphi 0, %s126
  $region4: #{forward.5} parent=0 // loop_header_branch
    %12 = sbr.rel (%p10) target = $region8
  $region5: #{forward.5} parent=0 // loop_body
    %s14 = ssub.s32 %s9, 1
    %s15 = ssub.s32 %s9, 2
    %s25 = sadd.s32 1, %s18
    %p26 = scmp.ge.s32.totalorder %s25, 1
    %s27 = scalar_select %p26, 0, %s25
    %s28 = sadd.s32 1, %s17
    %s29 = scalar_select %p26, %s28, %s17
    %p30 = scmp.ge.s32.totalorder %s29, 1
    %s31 = scalar_select %p30, 0, %s29
    %s32 = sadd.s32 1, %s16
    %s33 = scalar_select %p30, %s32, %s16
    %p34 = scmp.ge.s32.totalorder %s33, 4
    %s35 = scalar_select %p34, 0, %s33
    %s36 = ssub.s32 %s16, %s35
    %s37 = ssub.s32 %s18, %s27
    %s38 = sor.u32 %s36, %s37
    %p39 = scmp.eq.s32.totalorder %s38, 0
    %s41 = sadd.s32 %s40, 1
    %s42 = scalar_select %p39, %s40, %s41
    %p45 = pneg %p39
    %p46 = scmp.eq.s32.totalorder %s9, 3
    %p47 = por %p45, %p46
    %p48 = scmp.ne.s32.totalorder %s40, %s43
    %p49 = scmp.eq.s32.totalorder %s9, 0
    %p50 = por %p48, %p49
    %p51 = scmp.ne.s32.totalorder %s40, %s43
    %p52 = scmp.eq.s32.totalorder %s14, 3
    %p53 = por %p51, %p52
    %p54 = scmp.ne.s32.totalorder %s43, %s44
    %p55 = scmp.eq.s32.totalorder %s14, 0
    %p56 = por %p54, %p55
    %p57 = scmp.ne.s32.totalorder %s43, %s44
    %p58 = scmp.eq.s32.totalorder %s15, 3
    %p59 = por %p57, %p58
    %p61 = scmp.ne.s32.totalorder %s44, %s60
    %p62 = scmp.eq.s32.totalorder %s15, 0
    %p63 = por %p61, %p62
    %s64 = ssub.s32 %s18, %s27
    %s65 = ssub.s32 %s17, %s31
    %s66 = sor.u32 %s64, %s65
    %p67 = scmp.eq.s32.totalorder %s66, 0
    %s69 = sadd.s32 %s68, 1
    %s70 = scalar_select %p67, %s68, %s69
    %p73 = pneg %p67
    %p74 = scmp.eq.s32.totalorder %s9, 3
    %p75 = por %p73, %p74
    %p76 = scmp.ne.s32.totalorder %s68, %s71
    %p77 = scmp.eq.s32.totalorder %s9, 0
    %p78 = por %p76, %p77
    %p79 = scmp.ne.s32.totalorder %s68, %s71
    %p80 = scmp.eq.s32.totalorder %s14, 3
    %p81 = por %p79, %p80
    %p82 = scmp.ne.s32.totalorder %s71, %s72
    %p83 = scmp.eq.s32.totalorder %s14, 0
    %p84 = por %p82, %p83
    %p85 = scmp.ne.s32.totalorder %s71, %s72
    %p86 = scmp.eq.s32.totalorder %s15, 3
    %p87 = por %p85, %p86
    %p89 = scmp.ne.s32.totalorder %s72, %s88
    %p90 = scmp.eq.s32.totalorder %s15, 0
    %p91 = por %p89, %p90
    %s92 = ssub.s32 %s17, %s31
    %p93 = scmp.eq.s32.totalorder %s92, 0
    %s95 = sadd.s32 %s94, 1
    %s96 = scalar_select %p93, %s94, %s95
    %p99 = pneg %p93
    %p100 = scmp.eq.s32.totalorder %s9, 3
    %p101 = por %p99, %p100
    %p102 = scmp.ne.s32.totalorder %s94, %s97
    %p103 = scmp.eq.s32.totalorder %s9, 0
    %p104 = por %p102, %p103
    %p105 = scmp.ne.s32.totalorder %s94, %s97
    %p106 = scmp.eq.s32.totalorder %s14, 3
    %p107 = por %p105, %p106
    %p108 = scmp.ne.s32.totalorder %s97, %s98
    %p109 = scmp.eq.s32.totalorder %s14, 0
    %p110 = por %p108, %p109
    %p111 = scmp.ne.s32.totalorder %s97, %s98
    %p112 = scmp.eq.s32.totalorder %s15, 3
    %p113 = por %p111, %p112
    %p115 = scmp.ne.s32.totalorder %s98, %s114
    %p116 = scmp.eq.s32.totalorder %s15, 0
    %p117 = por %p115, %p116
    %s118 = ssub.s32 %s16, %s35
    %s119 = ssub.s32 %s17, %s31
    %s120 = sor.u32 %s118, %s119
    %p121 = scmp.eq.s32.totalorder %s120, 0
    %s123 = sadd.s32 %s122, 1
    %s124 = scalar_select %p121, %s122, %s123
    %p127 = pneg %p121
    %p128 = scmp.eq.s32.totalorder %s9, 3
    %p129 = por %p127, %p128
    %p130 = scmp.ne.s32.totalorder %s122, %s125
    %p131 = scmp.eq.s32.totalorder %s9, 0
    %p132 = por %p130, %p131
    %p133 = scmp.ne.s32.totalorder %s122, %s125
    %p134 = scmp.eq.s32.totalorder %s14, 3
    %p135 = por %p133, %p134
    %p136 = scmp.ne.s32.totalorder %s125, %s126
    %p137 = scmp.eq.s32.totalorder %s14, 0
    %p138 = por %p136, %p137
    %p139 = scmp.ne.s32.totalorder %s125, %s126
    %p140 = scmp.eq.s32.totalorder %s15, 3
    %p141 = por %p139, %p140
    %p143 = scmp.ne.s32.totalorder %s126, %s142
    %p144 = scmp.eq.s32.totalorder %s15, 0
    %p145 = por %p143, %p144
    %p146 = scmp.le.s32.totalorder 1, %s9
    %p147 = scmp.lt.s32.totalorder %s9, 5
    %p148 = pnand %p146, %p147
    %p149 = pneg %p148
    // Predicated region
    $region9: #{forward.5} parent=5 // pred_check
      _
    $region10: #{forward.5} parent=5 // pred_check_branch
      %151 = sbr.rel (%p148) target = $region12
    $region11: #{forward.5} parent=5 // pred_region
      %s152 = ssub.s32 %s9, 1
      // Predicated region
      $region13: #{forward.5} parent=11 // pred_check
        %p153 = pneg %p84
      $region14: #{forward.5} parent=11 // pred_check_branch
        %155 = sbr.rel (%p153) target = $region16
      $region15: #{forward.5} parent=11 // pred_region
        %s156 = smul.u32 16, %s21
        %p157 = scmp.lt.s32.totalorder %s156, 15
        %s158 = scalar_select %p157, %s156, 15
        %p159 = scmp.lt.s32.totalorder %s20, 0
        %s160 = scalar_select %p159, %s20, 0
        %s161 = sadd.s32 %s160, %s158
        %s162 = smul.addr %s161, 4
        %s163 = scalar_lea.vmem %s1, %s162
        %s164 = smul.u32 16, %s21
      $region16: #{forward.5} parent=11 // pred_fallthru
        _
      // Predicated region
      $region17: #{forward.5} parent=11 // pred_check
        %p165 = pneg %p110
      $region18: #{forward.5} parent=11 // pred_check_branch
        %167 = sbr.rel (%p165) target = $region20
      $region19: #{forward.5} parent=11 // pred_region
        %p168 = scmp.lt.s32.totalorder %s20, 0
        %s169 = scalar_select %p168, %s20, 0
        %s170 = scalar_lea.vmem %s2, %s169
      $region20: #{forward.5} parent=11 // pred_fallthru
        _
    $region12: #{forward.5} parent=5 // pred_fallthru
      _
    %p171 = scmp.lt.s32.totalorder %s9, 4
    // Predicated region
    $region21: #{forward.5} parent=5 // pred_check
      %p172 = pneg %p171
    $region22: #{forward.5} parent=5 // pred_check_branch
      %174 = sbr.rel (%p172) target = $region24
    $region23: #{forward.5} parent=5 // pred_region
      // Predicated region
      $region25: #{forward.5} parent=23 // pred_check
        %p175 = pneg %p50
      $region26: #{forward.5} parent=23 // pred_check_branch
        %177 = sbr.rel (%p175) target = $region28
      $region27: #{forward.5} parent=23 // pred_region
        %s178 = smul.u32 16, %s16
        %p179 = scmp.lt.s32.totalorder %s178, 63
        %s180 = scalar_select %p179, %s178, 63
        %p181 = scmp.lt.s32.totalorder %s18, 0
        %s182 = scalar_select %p181, %s18, 0
        %s183 = sadd.s32 %s182, %s180
        %s184 = smul.addr %s183, 4
        %s185 = scalar_lea.vmem %s0, %s184
        %s186 = smul.u32 16, %s16
      $region28: #{forward.5} parent=23 // pred_fallthru
        _
    $region24: #{forward.5} parent=5 // pred_fallthru
      _
    %p187 = scmp.le.s32.totalorder 1, %s9
    %p188 = scmp.lt.s32.totalorder %s9, 5
    %p189 = pnand %p187, %p188
    %p190 = pneg %p189
    // Predicated region
    $region29: #{forward.5} parent=5 // pred_check
      _
    $region30: #{forward.5} parent=5 // pred_check_branch
      %192 = sbr.rel (%p189) target = $region32
    $region31: #{forward.5} parent=5 // pred_region
      %s193 = ssub.s32 %s9, 1
      %s194 = smul.u32 16, %s19
      %p195 = scmp.lt.s32.totalorder %s194, 63
      %s196 = scalar_select %p195, %s194, 63
      %p197 = scmp.lt.s32.totalorder %s21, 0
      %s198 = scalar_select %p197, %s21, 0
      %s199 = sadd.s32 %s198, %s196
      %s200 = smul.addr %s199, 4
      %s201 = scalar_lea.vmem %s0, %s200
      %p202 = pneg %p56
      %p203 = pneg %p53
      %s204 = smul.u32 16, %s21
      %p205 = scmp.lt.s32.totalorder %s204, 15
      %s206 = scalar_select %p205, %s204, 15
      %p207 = scmp.lt.s32.totalorder %s20, 0
      %s208 = scalar_select %p207, %s20, 0
      %s209 = sadd.s32 %s208, %s206
      %s210 = smul.addr %s209, 4
      %s211 = scalar_lea.vmem %s1, %s210
      %p212 = pneg %p84
      %p213 = pneg %p81
      %p214 = scmp.lt.s32.totalorder %s20, 0
      %s215 = scalar_select %p214, %s20, 0
      %s216 = scalar_lea.vmem %s2, %s215
      %p217 = pneg %p110
      %p218 = pneg %p107
      %p219 = pneg %p138
      %p220 = pneg %p135
      %s221 = smul.u32 16, %s19
      %p222 = scmp.lt.s32.totalorder %s221, 63
      %s223 = scalar_select %p222, %s221, 63
      %p224 = scmp.lt.s32.totalorder %s20, 0
      %s225 = scalar_select %p224, %s20, 0
      %s226 = sadd.s32 %s225, %s223
      %s227 = smul.addr %s226, 4
      %s228 = scalar_lea.vmem %s3, %s227
      %s229 = smul.u32 16, %s19
      %p230 = scmp.lt.s32.totalorder %s229, 63
      %s231 = scalar_select %p230, %s229, 63
      %p232 = scmp.lt.s32.totalorder %s21, 0
      %s233 = scalar_select %p232, %s21, 0
      %s234 = sadd.s32 %s233, %s231
      %s235 = smul.addr %s234, 4
      %s236 = scalar_lea.vmem %s0, %s235
      %s237 = smul.u32 16, %s19
      %s238 = smul.u32 16, %s21
      %p239 = scmp.lt.s32.totalorder %s238, 15
      %s240 = scalar_select %p239, %s238, 15
      %p241 = scmp.lt.s32.totalorder %s20, 0
      %s242 = scalar_select %p241, %s20, 0
      %s243 = sadd.s32 %s242, %s240
      %s244 = smul.addr %s243, 4
      %s245 = scalar_lea.vmem %s1, %s244
      %s246 = smul.u32 16, %s21
      %p247 = scmp.lt.s32.totalorder %s20, 0
      %s248 = scalar_select %p247, %s20, 0
      %s249 = scalar_lea.vmem %s2, %s248
      %s250 = smul.u32 16, %s19
      %p251 = scmp.lt.s32.totalorder %s250, 63
      %s252 = scalar_select %p251, %s250, 63
      %p253 = scmp.lt.s32.totalorder %s20, 0
      %s254 = scalar_select %p253, %s20, 0
      %s255 = sadd.s32 %s254, %s252
      %s256 = smul.addr %s255, 4
      %s257 = scalar_lea.vmem %s3, %s256
      %s258 = smul.u32 16, %s19
      %p259 = scmp.eq.s32.totalorder %s21, 0
      // Predicated region
      $region33: #{forward.5} parent=31 // pred_check
        %p260 = pneg %p259
      $region34: #{forward.5} parent=31 // pred_check_branch
        %262 = sbr.rel (%p260) target = $region36
      $region35: #{forward.5} parent=31 // pred_region
        %263 = vst [vmem:[#allocation2] sm:$0xff] 0.0
        %264 = vst [vmem:[#allocation2 + $0x8] sm:$0xff] 0.0
        %265 = vst [vmem:[#allocation2 + $0x10] sm:$0xff] 0.0
        %266 = vst [vmem:[#allocation2 + $0x18] sm:$0xff] 0.0
        %267 = vst [vmem:[#allocation2 + $0x20] sm:$0xff] 0.0
        %268 = vst [vmem:[#allocation2 + $0x28] sm:$0xff] 0.0
        %269 = vst [vmem:[#allocation2 + $0x30] sm:$0xff] 0.0
        %270 = vst [vmem:[#allocation2 + $0x38] sm:$0xff] 0.0
        %271 = vst [vmem:[#allocation2 + $0x40] sm:$0xff] 0.0
        %272 = vst [vmem:[#allocation2 + $0x48] sm:$0xff] 0.0
        %273 = vst [vmem:[#allocation2 + $0x50] sm:$0xff] 0.0
        %274 = vst [vmem:[#allocation2 + $0x58] sm:$0xff] 0.0
        %275 = vst [vmem:[#allocation2 + $0x60] sm:$0xff] 0.0
        %276 = vst [vmem:[#allocation2 + $0x68] sm:$0xff] 0.0
        %277 = vst [vmem:[#allocation2 + $0x70] sm:$0xff] 0.0
        %278 = vst [vmem:[#allocation2 + $0x78] sm:$0xff] 0.0
      $region36: #{forward.5} parent=31 // pred_fallthru
        _
      %v279 = vld [vmem:[#allocation2] sm:$0xff]
      %v280 = vld [vmem:[#allocation2 + $0x8] sm:$0xff]
      %v281 = vld [vmem:[#allocation2 + $0x10] sm:$0xff]
      %v282 = vld [vmem:[#allocation2 + $0x18] sm:$0xff]
      %v283 = vld [vmem:[#allocation2 + $0x20] sm:$0xff]
      %v284 = vld [vmem:[#allocation2 + $0x28] sm:$0xff]
      %v285 = vld [vmem:[#allocation2 + $0x30] sm:$0xff]
      %v286 = vld [vmem:[#allocation2 + $0x38] sm:$0xff]
      %v287 = vld [vmem:[#allocation2 + $0x40] sm:$0xff]
      %v288 = vld [vmem:[#allocation2 + $0x48] sm:$0xff]
      %v289 = vld [vmem:[#allocation2 + $0x50] sm:$0xff]
      %v290 = vld [vmem:[#allocation2 + $0x58] sm:$0xff]
      %v291 = vld [vmem:[#allocation2 + $0x60] sm:$0xff]
      %v292 = vld [vmem:[#allocation2 + $0x68] sm:$0xff]
      %v293 = vld [vmem:[#allocation2 + $0x70] sm:$0xff]
      %v294 = vld [vmem:[#allocation2 + $0x78] sm:$0xff]
      %v295 = vld [vmem:[%s236] sm:$0xf]
      %v296 = vld [vmem:[%s236 + $0x4] sm:$0xf]
      %v297 = vld [vmem:[%s236 + $0x8] sm:$0xf]
      %v298 = vld [vmem:[%s236 + $0xc] sm:$0xf]
      %v299 = vld [vmem:[%s236 + $0x10] sm:$0xf]
      %v300 = vld [vmem:[%s236 + $0x14] sm:$0xf]
      %v301 = vld [vmem:[%s236 + $0x18] sm:$0xf]
      %v302 = vld [vmem:[%s236 + $0x1c] sm:$0xf]
      %v303 = vld [vmem:[%s236 + $0x20] sm:$0xf]
      %v304 = vld [vmem:[%s236 + $0x24] sm:$0xf]
      %v305 = vld [vmem:[%s236 + $0x28] sm:$0xf]
      %v306 = vld [vmem:[%s236 + $0x2c] sm:$0xf]
      %v307 = vld [vmem:[%s236 + $0x30] sm:$0xf]
      %v308 = vld [vmem:[%s236 + $0x34] sm:$0xf]
      %v309 = vld [vmem:[%s236 + $0x38] sm:$0xf]
      %v310 = vld [vmem:[%s236 + $0x3c] sm:$0xf]
      %v311 = vld [vmem:[%s245] sm:$0xf]
      %v312 = vld [vmem:[%s245 + $0x4] sm:$0xf]
      %v313 = vld [vmem:[%s245 + $0x8] sm:$0xf]
      %v314 = vld [vmem:[%s245 + $0xc] sm:$0xf]
      %v315 = vld [vmem:[%s245 + $0x10] sm:$0xf]
      %v316 = vld [vmem:[%s245 + $0x14] sm:$0xf]
      %v317 = vld [vmem:[%s245 + $0x18] sm:$0xf]
      %v318 = vld [vmem:[%s245 + $0x1c] sm:$0xf]
      %v319 = vld [vmem:[%s245 + $0x20] sm:$0xf]
      %v320 = vld [vmem:[%s245 + $0x24] sm:$0xf]
      %v321 = vld [vmem:[%s245 + $0x28] sm:$0xf]
      %v322 = vld [vmem:[%s245 + $0x2c] sm:$0xf]
      %v323 = vld [vmem:[%s245 + $0x30] sm:$0xf]
      %v324 = vld [vmem:[%s245 + $0x34] sm:$0xf]
      %v325 = vld [vmem:[%s245 + $0x38] sm:$0xf]
      %v326 = vld [vmem:[%s245 + $0x3c] sm:$0xf]
      %v343 = vunpack.c.l.b16 %v295
      %v344 = vunpack.c.l.b16 %v296
      %v345 = vunpack.c.l.b16 %v297
      %v346 = vunpack.c.l.b16 %v298
      %v347 = vunpack.c.l.b16 %v299
      %v348 = vunpack.c.l.b16 %v300
      %v349 = vunpack.c.l.b16 %v301
      %v350 = vunpack.c.l.b16 %v302
      %v351 = vunpack.c.l.b16 %v303
      %v352 = vunpack.c.l.b16 %v304
      %v353 = vunpack.c.l.b16 %v305
      %v354 = vunpack.c.l.b16 %v306
      %v355 = vunpack.c.l.b16 %v307
      %v356 = vunpack.c.l.b16 %v308
      %v357 = vunpack.c.l.b16 %v309
      %v358 = vunpack.c.l.b16 %v310
      %v359 = vpack.c.b16 %v344, %v343
      %v360 = vpack.c.b16 %v346, %v345
      %v361 = vpack.c.b16 %v348, %v347
      %v362 = vpack.c.b16 %v350, %v349
      %v363 = vpack.c.b16 %v352, %v351
      %v364 = vpack.c.b16 %v354, %v353
      %v365 = vpack.c.b16 %v356, %v355
      %v366 = vpack.c.b16 %v358, %v357
      %v391 = vunpack.c.l.b16 %v311
      %v392 = vunpack.c.l.b16 %v312
      %v393 = vunpack.c.l.b16 %v313
      %v394 = vunpack.c.l.b16 %v314
      %v395 = vunpack.c.l.b16 %v315
      %v396 = vunpack.c.l.b16 %v316
      %v397 = vunpack.c.l.b16 %v317
      %v398 = vunpack.c.l.b16 %v318
      %v399 = vunpack.c.l.b16 %v319
      %v400 = vunpack.c.l.b16 %v320
      %v401 = vunpack.c.l.b16 %v321
      %v402 = vunpack.c.l.b16 %v322
      %v403 = vunpack.c.l.b16 %v323
      %v404 = vunpack.c.l.b16 %v324
      %v405 = vunpack.c.l.b16 %v325
      %v406 = vunpack.c.l.b16 %v326
      %v407 = vpack.c.b16 %v392, %v391
      %v408 = vpack.c.b16 %v394, %v393
      %v409 = vpack.c.b16 %v396, %v395
      %v410 = vpack.c.b16 %v398, %v397
      %v411 = vpack.c.b16 %v400, %v399
      %v412 = vpack.c.b16 %v402, %v401
      %v413 = vpack.c.b16 %v404, %v403
      %v414 = vpack.c.b16 %v406, %v405
      %423 = vmatpush.bf16.msra.mxu0 %v414
      %424 = vmatpush.bf16.msra.mxu0 %v413
      %425 = vmatpush.bf16.msra.mxu0 %v412
      %426 = vmatpush.bf16.msra.mxu0 %v411
      %427 = vmatpush.bf16.msra.mxu0 %v410
      %428 = vmatpush.bf16.msra.mxu0 %v409
      %429 = vmatpush.bf16.msra.mxu0 %v408
      %430 = vmatpush.bf16.msra.mxu0 %v407
      %431 = vmatmul.bf16.gmra.mxu0 %v359
      %v432 = vpop.f32.mrf.mxu0
      %v433 = vadd.f32 0.0, %v432
      %v434 = vpop.f32.mrf.mxu0
      %v435 = vadd.f32 0.0, %v434
      %436 = vmatmul.bf16.gmra.mxu0 %v360
      %v437 = vpop.f32.mrf.mxu0
      %v438 = vadd.f32 0.0, %v437
      %v439 = vpop.f32.mrf.mxu0
      %v440 = vadd.f32 0.0, %v439
      %441 = vmatmul.bf16.gmra.mxu0 %v361
      %v442 = vpop.f32.mrf.mxu0
      %v443 = vadd.f32 0.0, %v442
      %v444 = vpop.f32.mrf.mxu0
      %v445 = vadd.f32 0.0, %v444
      %446 = vmatmul.bf16.gmra.mxu0 %v362
      %v447 = vpop.f32.mrf.mxu0
      %v448 = vadd.f32 0.0, %v447
      %v449 = vpop.f32.mrf.mxu0
      %v450 = vadd.f32 0.0, %v449
      %451 = vmatmul.bf16.gmra.mxu0 %v363
      %v452 = vpop.f32.mrf.mxu0
      %v453 = vadd.f32 0.0, %v452
      %v454 = vpop.f32.mrf.mxu0
      %v455 = vadd.f32 0.0, %v454
      %456 = vmatmul.bf16.gmra.mxu0 %v364
      %v457 = vpop.f32.mrf.mxu0
      %v458 = vadd.f32 0.0, %v457
      %v459 = vpop.f32.mrf.mxu0
      %v460 = vadd.f32 0.0, %v459
      %461 = vmatmul.bf16.gmra.mxu0 %v365
      %v462 = vpop.f32.mrf.mxu0
      %v463 = vadd.f32 0.0, %v462
      %v464 = vpop.f32.mrf.mxu0
      %v465 = vadd.f32 0.0, %v464
      %466 = vmatmul.bf16.gmra.mxu0 %v366
      %v467 = vpop.f32.mrf.mxu0
      %v468 = vadd.f32 0.0, %v467
      %v469 = vpop.f32.mrf.mxu0
      %v470 = vadd.f32 0.0, %v469
      %471 = vdwg.mxu0
      %v472 = vadd.f32 %v279, %v433
      %v473 = vadd.f32 %v280, %v435
      %v474 = vadd.f32 %v281, %v438
      %v475 = vadd.f32 %v282, %v440
      %v476 = vadd.f32 %v283, %v443
      %v477 = vadd.f32 %v284, %v445
      %v478 = vadd.f32 %v285, %v448
      %v479 = vadd.f32 %v286, %v450
      %v480 = vadd.f32 %v287, %v453
      %v481 = vadd.f32 %v288, %v455
      %v482 = vadd.f32 %v289, %v458
      %v483 = vadd.f32 %v290, %v460
      %v484 = vadd.f32 %v291, %v463
      %v485 = vadd.f32 %v292, %v465
      %v486 = vadd.f32 %v293, %v468
      %v487 = vadd.f32 %v294, %v470
      %488 = vst [vmem:[#allocation2] sm:$0xff] %v472
      %489 = vst [vmem:[#allocation2 + $0x8] sm:$0xff] %v473
      %490 = vst [vmem:[#allocation2 + $0x10] sm:$0xff] %v474
      %491 = vst [vmem:[#allocation2 + $0x18] sm:$0xff] %v475
      %492 = vst [vmem:[#allocation2 + $0x20] sm:$0xff] %v476
      %493 = vst [vmem:[#allocation2 + $0x28] sm:$0xff] %v477
      %494 = vst [vmem:[#allocation2 + $0x30] sm:$0xff] %v478
      %495 = vst [vmem:[#allocation2 + $0x38] sm:$0xff] %v479
      %496 = vst [vmem:[#allocation2 + $0x40] sm:$0xff] %v480
      %497 = vst [vmem:[#allocation2 + $0x48] sm:$0xff] %v481
      %498 = vst [vmem:[#allocation2 + $0x50] sm:$0xff] %v482
      %499 = vst [vmem:[#allocation2 + $0x58] sm:$0xff] %v483
      %500 = vst [vmem:[#allocation2 + $0x60] sm:$0xff] %v484
      %501 = vst [vmem:[#allocation2 + $0x68] sm:$0xff] %v485
      %502 = vst [vmem:[#allocation2 + $0x70] sm:$0xff] %v486
      %503 = vst [vmem:[#allocation2 + $0x78] sm:$0xff] %v487
      // Predicated region
      $region37: #{forward.5} parent=31 // pred_check
        %p504 = pneg %p259
      $region38: #{forward.5} parent=31 // pred_check_branch
        %506 = sbr.rel (%p504) target = $region40
      $region39: #{forward.5} parent=31 // pred_region
        %v507 = vld [vmem:[#allocation2] sm:$0xff]
        %v508 = vld [vmem:[#allocation2 + $0x8] sm:$0xff]
        %v509 = vld [vmem:[#allocation2 + $0x10] sm:$0xff]
        %v510 = vld [vmem:[#allocation2 + $0x18] sm:$0xff]
        %v511 = vld [vmem:[#allocation2 + $0x20] sm:$0xff]
        %v512 = vld [vmem:[#allocation2 + $0x28] sm:$0xff]
        %v513 = vld [vmem:[#allocation2 + $0x30] sm:$0xff]
        %v514 = vld [vmem:[#allocation2 + $0x38] sm:$0xff]
        %v515 = vld [vmem:[#allocation2 + $0x40] sm:$0xff]
        %v516 = vld [vmem:[#allocation2 + $0x48] sm:$0xff]
        %v517 = vld [vmem:[#allocation2 + $0x50] sm:$0xff]
        %v518 = vld [vmem:[#allocation2 + $0x58] sm:$0xff]
        %v519 = vld [vmem:[#allocation2 + $0x60] sm:$0xff]
        %v520 = vld [vmem:[#allocation2 + $0x68] sm:$0xff]
        %v521 = vld [vmem:[#allocation2 + $0x70] sm:$0xff]
        %v522 = vld [vmem:[#allocation2 + $0x78] sm:$0xff]
        %v523 = vld [vmem:[%s249] sm:$0x1]
        %v525 = vperm.slane %v523, 0
        %v527 = vadd.f32 %v507, %v525
        %v528 = vadd.f32 %v508, %v525
        %v529 = vadd.f32 %v509, %v525
        %v530 = vadd.f32 %v510, %v525
        %v531 = vadd.f32 %v511, %v525
        %v532 = vadd.f32 %v512, %v525
        %v533 = vadd.f32 %v513, %v525
        %v534 = vadd.f32 %v514, %v525
        %v535 = vadd.f32 %v515, %v525
        %v536 = vadd.f32 %v516, %v525
        %v537 = vadd.f32 %v517, %v525
        %v538 = vadd.f32 %v518, %v525
        %v539 = vadd.f32 %v519, %v525
        %v540 = vadd.f32 %v520, %v525
        %v541 = vadd.f32 %v521, %v525
        %v542 = vadd.f32 %v522, %v525
        %v543 = vmax.f32 %v527, 0.0
        %v544 = vmax.f32 %v528, 0.0
        %v545 = vmax.f32 %v529, 0.0
        %v546 = vmax.f32 %v530, 0.0
        %v547 = vmax.f32 %v531, 0.0
        %v548 = vmax.f32 %v532, 0.0
        %v549 = vmax.f32 %v533, 0.0
        %v550 = vmax.f32 %v534, 0.0
        %v551 = vmax.f32 %v535, 0.0
        %v552 = vmax.f32 %v536, 0.0
        %v553 = vmax.f32 %v537, 0.0
        %v554 = vmax.f32 %v538, 0.0
        %v555 = vmax.f32 %v539, 0.0
        %v556 = vmax.f32 %v540, 0.0
        %v557 = vmax.f32 %v541, 0.0
        %v558 = vmax.f32 %v542, 0.0
        %v559 = vpack.c.bf16 %v543, %v543
        %v560 = vpack.c.bf16 %v544, %v544
        %v561 = vpack.c.bf16 %v545, %v545
        %v562 = vpack.c.bf16 %v546, %v546
        %v563 = vpack.c.bf16 %v547, %v547
        %v564 = vpack.c.bf16 %v548, %v548
        %v565 = vpack.c.bf16 %v549, %v549
        %v566 = vpack.c.bf16 %v550, %v550
        %v567 = vpack.c.bf16 %v551, %v551
        %v568 = vpack.c.bf16 %v552, %v552
        %v569 = vpack.c.bf16 %v553, %v553
        %v570 = vpack.c.bf16 %v554, %v554
        %v571 = vpack.c.bf16 %v555, %v555
        %v572 = vpack.c.bf16 %v556, %v556
        %v573 = vpack.c.bf16 %v557, %v557
        %v574 = vpack.c.bf16 %v558, %v558
        %575 = vst [vmem:[%s257] sm:$0xf] %v559
        %576 = vst [vmem:[%s257 + $0x4] sm:$0xf] %v560
        %577 = vst [vmem:[%s257 + $0x8] sm:$0xf] %v561
        %578 = vst [vmem:[%s257 + $0xc] sm:$0xf] %v562
        %579 = vst [vmem:[%s257 + $0x10] sm:$0xf] %v563
        %580 = vst [vmem:[%s257 + $0x14] sm:$0xf] %v564
        %581 = vst [vmem:[%s257 + $0x18] sm:$0xf] %v565
        %582 = vst [vmem:[%s257 + $0x1c] sm:$0xf] %v566
        %583 = vst [vmem:[%s257 + $0x20] sm:$0xf] %v567
        %584 = vst [vmem:[%s257 + $0x24] sm:$0xf] %v568
        %585 = vst [vmem:[%s257 + $0x28] sm:$0xf] %v569
        %586 = vst [vmem:[%s257 + $0x2c] sm:$0xf] %v570
        %587 = vst [vmem:[%s257 + $0x30] sm:$0xf] %v571
        %588 = vst [vmem:[%s257 + $0x34] sm:$0xf] %v572
        %589 = vst [vmem:[%s257 + $0x38] sm:$0xf] %v573
        %590 = vst [vmem:[%s257 + $0x3c] sm:$0xf] %v574
      $region40: #{forward.5} parent=31 // pred_fallthru
        _
      %s591 = smul.u32 16, %s19
      %p592 = scmp.lt.s32.totalorder %s591, 63
      %s593 = scalar_select %p592, %s591, 63
      %p594 = scmp.lt.s32.totalorder %s20, 0
      %s595 = scalar_select %p594, %s20, 0
      %s596 = sadd.s32 %s595, %s593
      %s597 = smul.addr %s596, 4
      %s598 = scalar_lea.vmem %s3, %s597
      // Predicated region
      $region41: #{forward.5} parent=31 // pred_check
        %p599 = pneg %p135
      $region42: #{forward.5} parent=31 // pred_check_branch
        %601 = sbr.rel (%p599) target = $region44
      $region43: #{forward.5} parent=31 // pred_region
        %s602 = smul.u32 16, %s19
      $region44: #{forward.5} parent=31 // pred_fallthru
        _
    $region32: #{forward.5} parent=5 // pred_fallthru
      _
    %p603 = scmp.le.s32.totalorder 2, %s9
    // Predicated region
    $region45: #{forward.5} parent=5 // pred_check
      %p604 = pneg %p603
    $region46: #{forward.5} parent=5 // pred_check_branch
      %606 = sbr.rel (%p604) target = $region48
    $region47: #{forward.5} parent=5 // pred_region
      %s607 = ssub.s32 %s9, 2
      // Predicated region
      $region49: #{forward.5} parent=47 // pred_check
        %p608 = pneg %p141
      $region50: #{forward.5} parent=47 // pred_check_branch
        %610 = sbr.rel (%p608) target = $region52
      $region51: #{forward.5} parent=47 // pred_region
        %s611 = smul.u32 16, %s22
        %p612 = scmp.lt.s32.totalorder %s611, 63
        %s613 = scalar_select %p612, %s611, 63
        %p614 = scmp.lt.s32.totalorder %s23, 0
        %s615 = scalar_select %p614, %s23, 0
        %s616 = sadd.s32 %s615, %s613
        %s617 = smul.addr %s616, 4
        %s618 = scalar_lea.vmem %s3, %s617
      $region52: #{forward.5} parent=47 // pred_fallthru
        _
    $region48: #{forward.5} parent=5 // pred_fallthru
      _
  $region6: #{forward.5} parent=0 // loop_footer
    %s13 = sadd.s32 1, %s9
  $region7: #{forward.5} parent=0 // loop_footer_branch
    %8 = sbr.rel target = $region3
  $region8: #{forward.5} parent=0 // loop_exit
    _

// kernel: forward.9
$region0: #{forward.9}
  #allocation0 [shape = 'u32[]', space=smem, size = 0x4, offset = 0x4, fixed_abs, tag = 'smem constant byte address 0x4 - core index']
  #allocation1 [shape = 'u32[72,128]{1,0:T(1,128)}', space=vmem, size = 0x9000, scoped, tag = 'internal scratch']
  %s0 = inlined_call_operand.vmem [shape: bf16[8,128], index: 0, kind: input, shape index: {}]
  %s1 = inlined_call_operand.vmem [shape: bf16[128,128], index: 1, kind: input, shape index: {}]
  %s2 = inlined_call_operand.vmem [shape: f32[1,128], index: 2, kind: input, shape index: {}]
  %s3 = inlined_call_operand.vmem [shape: bf16[128,128], index: 3, kind: input, shape index: {}]
  %s4 = inlined_call_operand.vmem [shape: f32[1,128], index: 4, kind: input, shape index: {}]
  %s5 = inlined_call_operand.vmem [shape: f32[8,128], index: 5, kind: output, shape index: {}]
  %s6 = sld [smem:[#allocation0]]
  $region30: #{forward.9} parent=0
    _
  %s8 = ssub.s32 1, %s6
  %s9 = scalar_select 0, %s8, %s6
  // Predicated region
  $region2: #{forward.9} parent=0 // pred_check
    _
  $region3: #{forward.9} parent=0 // pred_check_branch
    %11 = sbr.rel (0) target = $region5
  $region4: #{forward.9} parent=0 // pred_region
    _
  $region5: #{forward.9} parent=0 // pred_fallthru
    _
  // Predicated region
  $region6: #{forward.9} parent=0 // pred_check
    _
  $region7: #{forward.9} parent=0 // pred_check_branch
    %13 = sbr.rel (0) target = $region9
  $region8: #{forward.9} parent=0 // pred_region
    _
  $region9: #{forward.9} parent=0 // pred_fallthru
    _
  // Predicated region
  $region10: #{forward.9} parent=0 // pred_check
    _
  $region11: #{forward.9} parent=0 // pred_check_branch
    %15 = sbr.rel (0) target = $region13
  $region12: #{forward.9} parent=0 // pred_region
    _
  $region13: #{forward.9} parent=0 // pred_fallthru
    _
  // Predicated region
  $region14: #{forward.9} parent=0 // pred_check
    _
  $region15: #{forward.9} parent=0 // pred_check_branch
    %17 = sbr.rel (0) target = $region17
  $region16: #{forward.9} parent=0 // pred_region
    _
  $region17: #{forward.9} parent=0 // pred_fallthru
    _
  // Predicated region
  $region18: #{forward.9} parent=0 // pred_check
    _
  $region19: #{forward.9} parent=0 // pred_check_branch
    %19 = sbr.rel (0) target = $region21
  $region20: #{forward.9} parent=0 // pred_region
    _
  $region21: #{forward.9} parent=0 // pred_fallthru
    _
  %v20 = vld [vmem:[%s0] sm:$0xf]
  %v21 = vld [vmem:[%s1] sm:$0xf]
  %v22 = vld [vmem:[%s1 + $0x4] sm:$0xf]
  %v23 = vld [vmem:[%s1 + $0x8] sm:$0xf]
  %v24 = vld [vmem:[%s1 + $0xc] sm:$0xf]
  %v25 = vld [vmem:[%s1 + $0x10] sm:$0xf]
  %v26 = vld [vmem:[%s1 + $0x14] sm:$0xf]
  %v27 = vld [vmem:[%s1 + $0x18] sm:$0xf]
  %v28 = vld [vmem:[%s1 + $0x1c] sm:$0xf]
  %v29 = vld [vmem:[%s1 + $0x20] sm:$0xf]
  %v30 = vld [vmem:[%s1 + $0x24] sm:$0xf]
  %v31 = vld [vmem:[%s1 + $0x28] sm:$0xf]
  %v32 = vld [vmem:[%s1 + $0x2c] sm:$0xf]
  %v33 = vld [vmem:[%s1 + $0x30] sm:$0xf]
  %v34 = vld [vmem:[%s1 + $0x34] sm:$0xf]
  %v35 = vld [vmem:[%s1 + $0x38] sm:$0xf]
  %v36 = vld [vmem:[%s1 + $0x3c] sm:$0xf]
  %v37 = vld [vmem:[%s2] sm:$0x1]
  %v39 = vperm.slane %v37, 0
  %v57 = vunpack.c.l.b16 %v21
  %v58 = vunpack.c.l.b16 %v22
  %v59 = vunpack.c.l.b16 %v23
  %v60 = vunpack.c.l.b16 %v24
  %v61 = vunpack.c.l.b16 %v25
  %v62 = vunpack.c.l.b16 %v26
  %v63 = vunpack.c.l.b16 %v27
  %v64 = vunpack.c.l.b16 %v28
  %v65 = vunpack.c.l.b16 %v29
  %v66 = vunpack.c.l.b16 %v30
  %v67 = vunpack.c.l.b16 %v31
  %v68 = vunpack.c.l.b16 %v32
  %v69 = vunpack.c.l.b16 %v33
  %v70 = vunpack.c.l.b16 %v34
  %v71 = vunpack.c.l.b16 %v35
  %v72 = vunpack.c.l.b16 %v36
  %v73 = vpack.c.b16 %v58, %v57
  %v74 = vpack.c.b16 %v60, %v59
  %v75 = vpack.c.b16 %v62, %v61
  %v76 = vpack.c.b16 %v64, %v63
  %v77 = vpack.c.b16 %v66, %v65
  %v78 = vpack.c.b16 %v68, %v67
  %v79 = vpack.c.b16 %v70, %v69
  %v80 = vpack.c.b16 %v72, %v71
  %89 = vmatpush.bf16.msra.mxu0 %v80
  %90 = vmatpush.bf16.msra.mxu0 %v79
  %91 = vmatpush.bf16.msra.mxu0 %v78
  %92 = vmatpush.bf16.msra.mxu0 %v77
  %93 = vmatpush.bf16.msra.mxu0 %v76
  %94 = vmatpush.bf16.msra.mxu0 %v75
  %95 = vmatpush.bf16.msra.mxu0 %v74
  %96 = vmatpush.bf16.msra.mxu0 %v73
  %97 = vmatmul.bf16.gmra.mxu0 %v20
  %v98 = vpop.f32.mrf.mxu0
  %v99 = vadd.f32 %v39, %v98
  %v100 = vpop.f32.mrf.mxu0
  %101 = vdwg.mxu0
  %v102 = vmax.f32 %v99, 0.0
  %v103 = vpack.c.bf16 %v102, %v102
  %v104 = vld [vmem:[%s3] sm:$0xf]
  %v105 = vld [vmem:[%s3 + $0x4] sm:$0xf]
  %v106 = vld [vmem:[%s3 + $0x8] sm:$0xf]
  %v107 = vld [vmem:[%s3 + $0xc] sm:$0xf]
  %v108 = vld [vmem:[%s3 + $0x10] sm:$0xf]
  %v109 = vld [vmem:[%s3 + $0x14] sm:$0xf]
  %v110 = vld [vmem:[%s3 + $0x18] sm:$0xf]
  %v111 = vld [vmem:[%s3 + $0x1c] sm:$0xf]
  %v112 = vld [vmem:[%s3 + $0x20] sm:$0xf]
  %v113 = vld [vmem:[%s3 + $0x24] sm:$0xf]
  %v114 = vld [vmem:[%s3 + $0x28] sm:$0xf]
  %v115 = vld [vmem:[%s3 + $0x2c] sm:$0xf]
  %v116 = vld [vmem:[%s3 + $0x30] sm:$0xf]
  %v117 = vld [vmem:[%s3 + $0x34] sm:$0xf]
  %v118 = vld [vmem:[%s3 + $0x38] sm:$0xf]
  %v119 = vld [vmem:[%s3 + $0x3c] sm:$0xf]
  %v120 = vld [vmem:[%s4] sm:$0x1]
  %v122 = vperm.slane %v120, 0
  %v140 = vunpack.c.l.b16 %v104
  %v141 = vunpack.c.l.b16 %v105
  %v142 = vunpack.c.l.b16 %v106
  %v143 = vunpack.c.l.b16 %v107
  %v144 = vunpack.c.l.b16 %v108
  %v145 = vunpack.c.l.b16 %v109
  %v146 = vunpack.c.l.b16 %v110
  %v147 = vunpack.c.l.b16 %v111
  %v148 = vunpack.c.l.b16 %v112
  %v149 = vunpack.c.l.b16 %v113
  %v150 = vunpack.c.l.b16 %v114
  %v151 = vunpack.c.l.b16 %v115
  %v152 = vunpack.c.l.b16 %v116
  %v153 = vunpack.c.l.b16 %v117
  %v154 = vunpack.c.l.b16 %v118
  %v155 = vunpack.c.l.b16 %v119
  %v156 = vpack.c.b16 %v141, %v140
  %v157 = vpack.c.b16 %v143, %v142
  %v158 = vpack.c.b16 %v145, %v144
  %v159 = vpack.c.b16 %v147, %v146
  %v160 = vpack.c.b16 %v149, %v148
  %v161 = vpack.c.b16 %v151, %v150
  %v162 = vpack.c.b16 %v153, %v152
  %v163 = vpack.c.b16 %v155, %v154
  %172 = vmatpush.bf16.msra.mxu0 %v163
  %173 = vmatpush.bf16.msra.mxu0 %v162
  %174 = vmatpush.bf16.msra.mxu0 %v161
  %175 = vmatpush.bf16.msra.mxu0 %v160
  %176 = vmatpush.bf16.msra.mxu0 %v159
  %177 = vmatpush.bf16.msra.mxu0 %v158
  %178 = vmatpush.bf16.msra.mxu0 %v157
  %179 = vmatpush.bf16.msra.mxu0 %v156
  %180 = vmatmul.bf16.gmra.mxu0 %v103
  %v181 = vpop.f32.mrf.mxu0
  %v182 = vadd.f32 %v122, %v181
  %v183 = vpop.f32.mrf.mxu0
  %184 = vdwg.mxu0
  %185 = vst [vmem:[%s5] sm:$0xff] %v182
  // Predicated region
  $region22: #{forward.9} parent=0 // pred_check
    _
  $region23: #{forward.9} parent=0 // pred_check_branch
    %187 = sbr.rel (0) target = $region25
  $region24: #{forward.9} parent=0 // pred_region
    _
  $region25: #{forward.9} parent=0 // pred_fallthru
    _
  // Predicated region
  $region26: #{forward.9} parent=0 // pred_check
    _
  $region27: #{forward.9} parent=0 // pred_check_branch
    %189 = sbr.rel (0) target = $region29
  $region28: #{forward.9} parent=0 // pred_region
    _
  $region29: #{forward.9} parent=0 // pred_fallthru
    _

// kernel: forward.6
$region0: #{forward.6}
  #allocation0 [shape = 'u32[]', space=smem, size = 0x4, offset = 0x4, fixed_abs, tag = 'smem constant byte address 0x4 - core index']
  #allocation1 [shape = 'u32[72,128]{1,0:T(1,128)}', space=vmem, size = 0x9000, scoped, tag = 'internal scratch']
  #allocation2 [shape = 'f32[64,128]{1,0:T(8,128)}', space=vmem, size = 0x8000, scoped, tag = 'scratch operand']
  %s0 = inlined_call_operand.vmem [shape: bf16[8,9,9,128], index: 0, kind: input, shape index: {}]
  %s1 = inlined_call_operand.vmem [shape: bf16[5,256,128], index: 1, kind: input, shape index: {}]
  %s2 = inlined_call_operand.vmem [shape: f32[1,128], index: 2, kind: input, shape index: {}]
  %s3 = inlined_call_operand.vmem [shape: bf16[2,64,128], index: 3, kind: output, shape index: {}]
  %s4 = sld [smem:[#allocation0]]
  $region45: #{forward.6} parent=0
    _
  %s6 = ssub.s32 1, %s4
  %s7 = scalar_select 0, %s6, %s4
  loop: start=0, step=1, limit=4
  $region2: #{forward.6} parent=0 // loop_pre_header
    _
  $region3: #{forward.6} parent=0 // loop_header
    %s9 = sphi 0, %s13
    %p10 = scmp.ge.s32.totalorder %s9, 4
    %s19 = sphi 0, %s21
    %s22 = sphi 0, %s19
    %s23 = sphi 0, %s22
    %s39 = sphi 0, %s23
    %s43 = sphi 0, %s43
    %s45 = sphi 0, %s43
    %s46 = sphi 0, %s45
    %s60 = sphi 0, %s46
    %s64 = sphi 0, %s64
    %s66 = sphi 0, %s64
    %s67 = sphi 0, %s66
    %s81 = sphi 0, %s67
    %s87 = sphi 0, %s89
    %s90 = sphi 0, %s87
    %s91 = sphi 0, %s90
    %s107 = sphi 0, %s91
  $region4: #{forward.6} parent=0 // loop_header_branch
    %12 = sbr.rel (%p10) target = $region8
  $region5: #{forward.6} parent=0 // loop_body
    %s14 = ssub.s32 %s9, 1
    %s15 = ssub.s32 %s9, 2
    %s16 = sadd.s32 %s9, 1
    %s17 = ssub.s32 %s9, %s16
    %p18 = scmp.eq.s32.totalorder %s17, 0
    %s20 = sadd.s32 %s19, 1
    %s21 = scalar_select %p18, %s19, %s20
    %p24 = pneg %p18
    %p25 = scmp.eq.s32.totalorder %s9, 1
    %p26 = por %p24, %p25
    %p27 = scmp.ne.s32.totalorder %s19, %s22
    %p28 = scmp.eq.s32.totalorder %s9, 0
    %p29 = por %p27, %p28
    %p30 = scmp.ne.s32.totalorder %s19, %s22
    %p31 = scmp.eq.s32.totalorder %s14, 1
    %p32 = por %p30, %p31
    %p33 = scmp.ne.s32.totalorder %s22, %s23
    %p34 = scmp.eq.s32.totalorder %s14, 0
    %p35 = por %p33, %p34
    %p36 = scmp.ne.s32.totalorder %s22, %s23
    %p37 = scmp.eq.s32.totalorder %s15, 1
    %p38 = por %p36, %p37
    %p40 = scmp.ne.s32.totalorder %s23, %s39
    %p41 = scmp.eq.s32.totalorder %s15, 0
    %p42 = por %p40, %p41
    %s44 = sadd.s32 %s43, 1
    %p47 = scmp.eq.s32.totalorder %s9, 1
    %p48 = scmp.ne.s32.totalorder %s43, %s45
    %p49 = scmp.eq.s32.totalorder %s9, 0
    %p50 = por %p48, %p49
    %p51 = scmp.ne.s32.totalorder %s43, %s45
    %p52 = scmp.eq.s32.totalorder %s14, 1
    %p53 = por %p51, %p52
    %p54 = scmp.ne.s32.totalorder %s45, %s46
    %p55 = scmp.eq.s32.totalorder %s14, 0
    %p56 = por %p54, %p55
    %p57 = scmp.ne.s32.totalorder %s45, %s46
    %p58 = scmp.eq.s32.totalorder %s15, 1
    %p59 = por %p57, %p58
    %p61 = scmp.ne.s32.totalorder %s46, %s60
    %p62 = scmp.eq.s32.totalorder %s15, 0
    %p63 = por %p61, %p62
    %s65 = sadd.s32 %s64, 1
    %p68 = scmp.eq.s32.totalorder %s9, 1
    %p69 = scmp.ne.s32.totalorder %s64, %s66
    %p70 = scmp.eq.s32.totalorder %s9, 0
    %p71 = por %p69, %p70
    %p72 = scmp.ne.s32.totalorder %s64, %s66
    %p73 = scmp.eq.s32.totalorder %s14, 1
    %p74 = por %p72, %p73
    %p75 = scmp.ne.s32.totalorder %s66, %s67
    %p76 = scmp.eq.s32.totalorder %s14, 0
    %p77 = por %p75, %p76
    %p78 = scmp.ne.s32.totalorder %s66, %s67
    %p79 = scmp.eq.s32.totalorder %s15, 1
    %p80 = por %p78, %p79
    %p82 = scmp.ne.s32.totalorder %s67, %s81
    %p83 = scmp.eq.s32.totalorder %s15, 0
    %p84 = por %p82, %p83
    %s85 = ssub.s32 %s9, %s16
    %p86 = scmp.eq.s32.totalorder %s85, 0
    %s88 = sadd.s32 %s87, 1
    %s89 = scalar_select %p86, %s87, %s88
    %p92 = pneg %p86
    %p93 = scmp.eq.s32.totalorder %s9, 1
    %p94 = por %p92, %p93
    %p95 = scmp.ne.s32.totalorder %s87, %s90
    %p96 = scmp.eq.s32.totalorder %s9, 0
    %p97 = por %p95, %p96
    %p98 = scmp.ne.s32.totalorder %s87, %s90
    %p99 = scmp.eq.s32.totalorder %s14, 1
    %p100 = por %p98, %p99
    %p101 = scmp.ne.s32.totalorder %s90, %s91
    %p102 = scmp.eq.s32.totalorder %s14, 0
    %p103 = por %p101, %p102
    %p104 = scmp.ne.s32.totalorder %s90, %s91
    %p105 = scmp.eq.s32.totalorder %s15, 1
    %p106 = por %p104, %p105
    %p108 = scmp.ne.s32.totalorder %s91, %s107
    %p109 = scmp.eq.s32.totalorder %s15, 0
    %p110 = por %p108, %p109
    %p111 = scmp.le.s32.totalorder 1, %s9
    %p112 = scmp.lt.s32.totalorder %s9, 3
    %p113 = pnand %p111, %p112
    %p114 = pneg %p113
    // Predicated region
    $region9: #{forward.6} parent=5 // pred_check
      _
    $region10: #{forward.6} parent=5 // pred_check_branch
      %116 = sbr.rel (%p113) target = $region12
    $region11: #{forward.6} parent=5 // pred_region
      %s117 = ssub.s32 %s9, 1
      // Predicated region
      $region13: #{forward.6} parent=11 // pred_check
        %p118 = pneg %p56
      $region14: #{forward.6} parent=11 // pred_check_branch
        %120 = sbr.rel (%p118) target = $region16
      $region15: #{forward.6} parent=11 // pred_region
        _
      $region16: #{forward.6} parent=11 // pred_fallthru
        _
      // Predicated region
      $region17: #{forward.6} parent=11 // pred_check
        %p121 = pneg %p77
      $region18: #{forward.6} parent=11 // pred_check_branch
        %123 = sbr.rel (%p121) target = $region20
      $region19: #{forward.6} parent=11 // pred_region
        _
      $region20: #{forward.6} parent=11 // pred_fallthru
        _
    $region12: #{forward.6} parent=5 // pred_fallthru
      _
    %p124 = scmp.lt.s32.totalorder %s9, 2
    // Predicated region
    $region21: #{forward.6} parent=5 // pred_check
      %p125 = pneg %p124
    $region22: #{forward.6} parent=5 // pred_check_branch
      %127 = sbr.rel (%p125) target = $region24
    $region23: #{forward.6} parent=5 // pred_region
      // Predicated region
      $region25: #{forward.6} parent=23 // pred_check
        %p128 = pneg %p29
      $region26: #{forward.6} parent=23 // pred_check_branch
        %130 = sbr.rel (%p128) target = $region28
      $region27: #{forward.6} parent=23 // pred_region
        %s131 = smul.u32 4, %s9
        %p132 = scmp.lt.s32.totalorder %s131, 7
        %s133 = scalar_select %p132, %s131, 7
        %s134 = smul.addr %s133, 18
        %s135 = smul.addr %s134, 4
        %s136 = scalar_lea.vmem %s0, %s135
        %s137 = smul.u32 4, %s9
      $region28: #{forward.6} parent=23 // pred_fallthru
        _
    $region24: #{forward.6} parent=5 // pred_fallthru
      _
    %p138 = scmp.le.s32.totalorder 1, %s9
    %p139 = scmp.lt.s32.totalorder %s9, 3
    %p140 = pnand %p138, %p139
    %p141 = pneg %p140
    // Predicated region
    $region29: #{forward.6} parent=5 // pred_check
      _
    $region30: #{forward.6} parent=5 // pred_check_branch
      %143 = sbr.rel (%p140) target = $region32
    $region31: #{forward.6} parent=5 // pred_region
      %s144 = ssub.s32 %s9, 1
      %s145 = smul.u32 4, %s14
      %p146 = scmp.lt.s32.totalorder %s145, 7
      %s147 = scalar_select %p146, %s145, 7
      %s148 = smul.addr %s147, 18
      %s149 = smul.addr %s148, 4
      %s150 = scalar_lea.vmem %s0, %s149
      %p151 = pneg %p35
      %p152 = pneg %p32
      %p153 = pneg %p56
      %p154 = pneg %p53
      %p155 = pneg %p77
      %p156 = pneg %p74
      %p157 = pneg %p103
      %p158 = pneg %p100
      %p159 = scmp.lt.s32.totalorder %s14, 1
      %s160 = scalar_select %p159, %s14, 1
      %s161 = smul.addr %s160, 8
      %s162 = smul.addr %s161, 4
      %s163 = scalar_lea.vmem %s3, %s162
      %s164 = smul.u32 4, %s14
      %p165 = scmp.lt.s32.totalorder %s164, 7
      %s166 = scalar_select %p165, %s164, 7
      %s167 = smul.addr %s166, 18
      %s168 = smul.addr %s167, 4
      %s169 = scalar_lea.vmem %s0, %s168
      %s170 = smul.u32 4, %s14
      %p171 = scmp.lt.s32.totalorder %s14, 1
      %s172 = scalar_select %p171, %s14, 1
      %s173 = smul.addr %s172, 8
      %s174 = smul.addr %s173, 4
      %s175 = scalar_lea.vmem %s3, %s174
      %176 = vst [vmem:[#allocation2] sm:$0xff] 0.0
      %177 = vst [vmem:[#allocation2 + $0x8] sm:$0xff] 0.0
      %178 = vst [vmem:[#allocation2 + $0x10] sm:$0xff] 0.0
      %179 = vst [vmem:[#allocation2 + $0x18] sm:$0xff] 0.0
      %180 = vst [vmem:[#allocation2 + $0x20] sm:$0xff] 0.0
      %181 = vst [vmem:[#allocation2 + $0x28] sm:$0xff] 0.0
      %182 = vst [vmem:[#allocation2 + $0x30] sm:$0xff] 0.0
      %183 = vst [vmem:[#allocation2 + $0x38] sm:$0xff] 0.0
      %v184 = vld [vmem:[%s169] sm:$0xf]
      %v185 = vld [vmem:[%s169 + $0x8] sm:$0xf]
      %v186 = vld [vmem:[%s169 + $0x10] sm:$0xf]
      %v187 = vld [vmem:[%s169 + $0x18] sm:$0xf]
      %v188 = vld [vmem:[%s169 + $0x20] sm:$0xf]
      %v189 = vld [vmem:[%s169 + $0x28] sm:$0xf]
      %v190 = vld [vmem:[%s169 + $0x30] sm:$0xf]
      %v191 = vld [vmem:[%s169 + $0x38] sm:$0xf]
      %s192 = scalar_lea.vmem %s169, 72
      %v193 = vld [vmem:[%s192] sm:$0xf]
      %v194 = vld [vmem:[%s192 + $0x8] sm:$0xf]
      %v195 = vld [vmem:[%s192 + $0x10] sm:$0xf]
      %v196 = vld [vmem:[%s192 + $0x18] sm:$0xf]
      %v197 = vld [vmem:[%s192 + $0x20] sm:$0xf]
      %v198 = vld [vmem:[%s192 + $0x28] sm:$0xf]
      %v199 = vld [vmem:[%s192 + $0x30] sm:$0xf]
      %v200 = vld [vmem:[%s192 + $0x38] sm:$0xf]
      %v209 = vunpack.c.l.b16 %v184
      %v210 = vunpack.c.l.b16 %v185
      %v211 = vunpack.c.l.b16 %v186
      %v212 = vunpack.c.l.b16 %v187
      %v213 = vunpack.c.l.b16 %v188
      %v214 = vunpack.c.l.b16 %v189
      %v215 = vunpack.c.l.b16 %v190
      %v216 = vunpack.c.l.b16 %v191
      %v217 = vpack.c.b16 %v210, %v209
      %v218 = vpack.c.b16 %v212, %v211
      %v219 = vpack.c.b16 %v214, %v213
      %v220 = vpack.c.b16 %v216, %v215
      %v233 = vunpack.c.l.b16 %v193
      %v234 = vunpack.c.l.b16 %v194
      %v235 = vunpack.c.l.b16 %v195
      %v236 = vunpack.c.l.b16 %v196
      %v237 = vunpack.c.l.b16 %v197
      %v238 = vunpack.c.l.b16 %v198
      %v239 = vunpack.c.l.b16 %v199
      %v240 = vunpack.c.l.b16 %v200
      %v241 = vpack.c.b16 %v234, %v233
      %v242 = vpack.c.b16 %v236, %v235
      %v243 = vpack.c.b16 %v238, %v237
      %v244 = vpack.c.b16 %v240, %v239
      %v249 = vld [vmem:[#allocation2] sm:$0xff]
      %v250 = vld [vmem:[#allocation2 + $0x8] sm:$0xff]
      %v251 = vld [vmem:[#allocation2 + $0x10] sm:$0xff]
      %v252 = vld [vmem:[#allocation2 + $0x18] sm:$0xff]
      %v253 = vld [vmem:[#allocation2 + $0x20] sm:$0xff]
      %v254 = vld [vmem:[#allocation2 + $0x28] sm:$0xff]
      %v255 = vld [vmem:[#allocation2 + $0x30] sm:$0xff]
      %v256 = vld [vmem:[#allocation2 + $0x38] sm:$0xff]
      %v257 = vld [vmem:[%s1] sm:$0xf]
      %v258 = vld [vmem:[%s1 + $0x4] sm:$0xf]
      %v259 = vld [vmem:[%s1 + $0x8] sm:$0xf]
      %v260 = vld [vmem:[%s1 + $0xc] sm:$0xf]
      %v261 = vld [vmem:[%s1 + $0x10] sm:$0xf]
      %v262 = vld [vmem:[%s1 + $0x14] sm:$0xf]
      %v263 = vld [vmem:[%s1 + $0x18] sm:$0xf]
      %v264 = vld [vmem:[%s1 + $0x1c] sm:$0xf]
      %v265 = vld [vmem:[%s1 + $0x20] sm:$0xf]
      %v266 = vld [vmem:[%s1 + $0x24] sm:$0xf]
      %v267 = vld [vmem:[%s1 + $0x28] sm:$0xf]
      %v268 = vld [vmem:[%s1 + $0x2c] sm:$0xf]
      %v269 = vld [vmem:[%s1 + $0x30] sm:$0xf]
      %v270 = vld [vmem:[%s1 + $0x34] sm:$0xf]
      %v271 = vld [vmem:[%s1 + $0x38] sm:$0xf]
      %v272 = vld [vmem:[%s1 + $0x3c] sm:$0xf]
      %v273 = vld [vmem:[%s1 + $0x40] sm:$0xf]
      %v274 = vld [vmem:[%s1 + $0x44] sm:$0xf]
      %v275 = vld [vmem:[%s1 + $0x48] sm:$0xf]
      %v276 = vld [vmem:[%s1 + $0x4c] sm:$0xf]
      %v277 = vld [vmem:[%s1 + $0x50] sm:$0xf]
      %v278 = vld [vmem:[%s1 + $0x54] sm:$0xf]
      %v279 = vld [vmem:[%s1 + $0x58] sm:$0xf]
      %v280 = vld [vmem:[%s1 + $0x5c] sm:$0xf]
      %v281 = vld [vmem:[%s1 + $0x60] sm:$0xf]
      %v282 = vld [vmem:[%s1 + $0x64] sm:$0xf]
      %v283 = vld [vmem:[%s1 + $0x68] sm:$0xf]
      %v284 = vld [vmem:[%s1 + $0x6c] sm:$0xf]
      %v285 = vld [vmem:[%s1 + $0x70] sm:$0xf]
      %v286 = vld [vmem:[%s1 + $0x74] sm:$0xf]
      %v287 = vld [vmem:[%s1 + $0x78] sm:$0xf]
      %v288 = vld [vmem:[%s1 + $0x7c] sm:$0xf]
      %v321 = vunpack.c.l.b16 %v257
      %v322 = vunpack.c.l.b16 %v258
      %v323 = vunpack.c.l.b16 %v259
      %v324 = vunpack.c.l.b16 %v260
      %v325 = vunpack.c.l.b16 %v261
      %v326 = vunpack.c.l.b16 %v262
      %v327 = vunpack.c.l.b16 %v263
      %v328 = vunpack.c.l.b16 %v264
      %v329 = vunpack.c.l.b16 %v265
      %v330 = vunpack.c.l.b16 %v266
      %v331 = vunpack.c.l.b16 %v267
      %v332 = vunpack.c.l.b16 %v268
      %v333 = vunpack.c.l.b16 %v269
      %v334 = vunpack.c.l.b16 %v270
      %v335 = vunpack.c.l.b16 %v271
      %v336 = vunpack.c.l.b16 %v272
      %v337 = vunpack.c.l.b16 %v273
      %v338 = vunpack.c.l.b16 %v274
      %v339 = vunpack.c.l.b16 %v275
      %v340 = vunpack.c.l.b16 %v276
      %v341 = vunpack.c.l.b16 %v277
      %v342 = vunpack.c.l.b16 %v278
      %v343 = vunpack.c.l.b16 %v279
      %v344 = vunpack.c.l.b16 %v280
      %v345 = vunpack.c.l.b16 %v281
      %v346 = vunpack.c.l.b16 %v282
      %v347 = vunpack.c.l.b16 %v283
      %v348 = vunpack.c.l.b16 %v284
      %v349 = vunpack.c.l.b16 %v285
      %v350 = vunpack.c.l.b16 %v286
      %v351 = vunpack.c.l.b16 %v287
      %v352 = vunpack.c.l.b16 %v288
      %v353 = vpack.c.b16 %v322, %v321
      %v354 = vpack.c.b16 %v324, %v323
      %v355 = vpack.c.b16 %v326, %v325
      %v356 = vpack.c.b16 %v328, %v327
      %v357 = vpack.c.b16 %v330, %v329
      %v358 = vpack.c.b16 %v332, %v331
      %v359 = vpack.c.b16 %v334, %v333
      %v360 = vpack.c.b16 %v336, %v335
      %v361 = vpack.c.b16 %v338, %v337
      %v362 = vpack.c.b16 %v340, %v339
      %v363 = vpack.c.b16 %v342, %v341
      %v364 = vpack.c.b16 %v344, %v343
      %v365 = vpack.c.b16 %v346, %v345
      %v366 = vpack.c.b16 %v348, %v347
      %v367 = vpack.c.b16 %v350, %v349
      %v368 = vpack.c.b16 %v352, %v351
      %385 = vmatpush.bf16.msra.mxu0 %v360
      %386 = vmatpush.bf16.msra.mxu0 %v359
      %387 = vmatpush.bf16.msra.mxu0 %v358
      %388 = vmatpush.bf16.msra.mxu0 %v357
      %389 = vmatpush.bf16.msra.mxu0 %v356
      %390 = vmatpush.bf16.msra.mxu0 %v355
      %391 = vmatpush.bf16.msra.mxu0 %v354
      %392 = vmatpush.bf16.msra.mxu0 %v353
      %393 = vmatmul.bf16.gmra.mxu0 %v217
      %v394 = vpop.f32.mrf.mxu0
      %v395 = vadd.f32 0.0, %v394
      %v396 = vpop.f32.mrf.mxu0
      %v397 = vadd.f32 0.0, %v396
      %398 = vmatmul.bf16.gmra.mxu0 %v218
      %v399 = vpop.f32.mrf.mxu0
      %v400 = vadd.f32 0.0, %v399
      %v401 = vpop.f32.mrf.mxu0
      %v402 = vadd.f32 0.0, %v401
      %403 = vmatmul.bf16.gmra.mxu0 %v219
      %v404 = vpop.f32.mrf.mxu0
      %v405 = vadd.f32 0.0, %v404
      %v406 = vpop.f32.mrf.mxu0
      %v407 = vadd.f32 0.0, %v406
      %408 = vmatmul.bf16.gmra.mxu0 %v220
      %v409 = vpop.f32.mrf.mxu0
      %v410 = vadd.f32 0.0, %v409
      %v411 = vpop.f32.mrf.mxu0
      %v412 = vadd.f32 0.0, %v411
      %413 = vdwg.mxu0
      %414 = vmatpush.bf16.msra.mxu0 %v368
      %415 = vmatpush.bf16.msra.mxu0 %v367
      %416 = vmatpush.bf16.msra.mxu0 %v366
      %417 = vmatpush.bf16.msra.mxu0 %v365
      %418 = vmatpush.bf16.msra.mxu0 %v364
      %419 = vmatpush.bf16.msra.mxu0 %v363
      %420 = vmatpush.bf16.msra.mxu0 %v362
      %421 = vmatpush.bf16.msra.mxu0 %v361
      %422 = vmatmul.bf16.gmra.mxu0 %v241
      %v423 = vpop.f32.mrf.mxu0
      %v424 = vadd.f32 %v395, %v423
      %v425 = vpop.f32.mrf.mxu0
      %v426 = vadd.f32 %v397, %v425
      %427 = vmatmul.bf16.gmra.mxu0 %v242
      %v428 = vpop.f32.mrf.mxu0
      %v429 = vadd.f32 %v400, %v428
      %v430 = vpop.f32.mrf.mxu0
      %v431 = vadd.f32 %v402, %v430
      %432 = vmatmul.bf16.gmra.mxu0 %v243
      %v433 = vpop.f32.mrf.mxu0
      %v434 = vadd.f32 %v405, %v433
      %v435 = vpop.f32.mrf.mxu0
      %v436 = vadd.f32 %v407, %v435
      %437 = vmatmul.bf16.gmra.mxu0 %v244
      %v438 = vpop.f32.mrf.mxu0
      %v439 = vadd.f32 %v410, %v438
      %v440 = vpop.f32.mrf.mxu0
      %v441 = vadd.f32 %v412, %v440
      %442 = vdwg.mxu0
      %v443 = vadd.f32 %v249, %v424
      %v444 = vadd.f32 %v250, %v426
      %v445 = vadd.f32 %v251, %v429
      %v446 = vadd.f32 %v252, %v431
      %v447 = vadd.f32 %v253, %v434
      %v448 = vadd.f32 %v254, %v436
      %v449 = vadd.f32 %v255, %v439
      %v450 = vadd.f32 %v256, %v441
      %451 = vst [vmem:[#allocation2] sm:$0xff] %v443
      %452 = vst [vmem:[#allocation2 + $0x8] sm:$0xff] %v444
      %453 = vst [vmem:[#allocation2 + $0x10] sm:$0xff] %v445
      %454 = vst [vmem:[#allocation2 + $0x18] sm:$0xff] %v446
      %455 = vst [vmem:[#allocation2 + $0x20] sm:$0xff] %v447
      %456 = vst [vmem:[#allocation2 + $0x28] sm:$0xff] %v448
      %457 = vst [vmem:[#allocation2 + $0x30] sm:$0xff] %v449
      %458 = vst [vmem:[#allocation2 + $0x38] sm:$0xff] %v450
      %v459 = vld [vmem:[%s169] sm:$0xf]
      %v460 = vld [vmem:[%s169 + $0x4] sm:$0x1]
      %v461 = vld [vmem:[%s169 + $0x8] sm:$0xf]
      %v462 = vld [vmem:[%s169 + $0xc] sm:$0x1]
      %v463 = vld [vmem:[%s169 + $0x10] sm:$0xf]
      %v464 = vld [vmem:[%s169 + $0x14] sm:$0x1]
      %v465 = vld [vmem:[%s169 + $0x18] sm:$0xf]
      %v466 = vld [vmem:[%s169 + $0x1c] sm:$0x1]
      %v467 = vld [vmem:[%s169 + $0x20] sm:$0xf]
      %v468 = vld [vmem:[%s169 + $0x24] sm:$0x1]
      %v469 = vld [vmem:[%s169 + $0x28] sm:$0xf]
      %v470 = vld [vmem:[%s169 + $0x2c] sm:$0x1]
      %v471 = vld [vmem:[%s169 + $0x30] sm:$0xf]
      %v472 = vld [vmem:[%s169 + $0x34] sm:$0x1]
      %v473 = vld [vmem:[%s169 + $0x38] sm:$0xf]
      %v474 = vld [vmem:[%s169 + $0x3c] sm:$0x1]
      %vm475 = vsmask.f32 3328
      %vm476 = vsmask.f32 7440
      %vm477 = vmor %vm475, %vm476
      %v479 = vshrl.u32 %v459, 16
      %v481 = vrot.slane %v479, 4
      %v482 = vshll.u32 %v459, 16
      %v484 = vrot.slane %v482, 5
      %v485 = vor.u32 %v481, %v484
      %v486 = vrot.slane %v485, 4
      %v488 = vshll.u32 %v460, 16
      %v490 = vrot.slane %v488, 5
      %v491 = vsel %vm477, %v486, %v490
      %v493 = vshrl.u32 %v461, 16
      %v495 = vrot.slane %v493, 4
      %v496 = vshll.u32 %v461, 16
      %v498 = vrot.slane %v496, 5
      %v499 = vor.u32 %v495, %v498
      %v500 = vrot.slane %v499, 4
      %v502 = vshll.u32 %v462, 16
      %v504 = vrot.slane %v502, 5
      %v505 = vsel %vm477, %v500, %v504
      %v507 = vshrl.u32 %v463, 16
      %v509 = vrot.slane %v507, 4
      %v510 = vshll.u32 %v463, 16
      %v512 = vrot.slane %v510, 5
      %v513 = vor.u32 %v509, %v512
      %v514 = vrot.slane %v513, 4
      %v516 = vshll.u32 %v464, 16
      %v518 = vrot.slane %v516, 5
      %v519 = vsel %vm477, %v514, %v518
      %v521 = vshrl.u32 %v465, 16
      %v523 = vrot.slane %v521, 4
      %v524 = vshll.u32 %v465, 16
      %v526 = vrot.slane %v524, 5
      %v527 = vor.u32 %v523, %v526
      %v528 = vrot.slane %v527, 4
      %v530 = vshll.u32 %v466, 16
      %v532 = vrot.slane %v530, 5
      %v533 = vsel %vm477, %v528, %v532
      %v535 = vshrl.u32 %v467, 16
      %v537 = vrot.slane %v535, 4
      %v538 = vshll.u32 %v467, 16
      %v540 = vrot.slane %v538, 5
      %v541 = vor.u32 %v537, %v540
      %v542 = vrot.slane %v541, 4
      %v544 = vshll.u32 %v468, 16
      %v546 = vrot.slane %v544, 5
      %v547 = vsel %vm477, %v542, %v546
      %v549 = vshrl.u32 %v469, 16
      %v551 = vrot.slane %v549, 4
      %v552 = vshll.u32 %v469, 16
      %v554 = vrot.slane %v552, 5
      %v555 = vor.u32 %v551, %v554
      %v556 = vrot.slane %v555, 4
      %v558 = vshll.u32 %v470, 16
      %v560 = vrot.slane %v558, 5
      %v561 = vsel %vm477, %v556, %v560
      %v563 = vshrl.u32 %v471, 16
      %v565 = vrot.slane %v563, 4
      %v566 = vshll.u32 %v471, 16
      %v568 = vrot.slane %v566, 5
      %v569 = vor.u32 %v565, %v568
      %v570 = vrot.slane %v569, 4
      %v572 = vshll.u32 %v472, 16
      %v574 = vrot.slane %v572, 5
      %v575 = vsel %vm477, %v570, %v574
      %v577 = vshrl.u32 %v473, 16
      %v579 = vrot.slane %v577, 4
      %v580 = vshll.u32 %v473, 16
      %v582 = vrot.slane %v580, 5
      %v583 = vor.u32 %v579, %v582
      %v584 = vrot.slane %v583, 4
      %v586 = vshll.u32 %v474, 16
      %v588 = vrot.slane %v586, 5
      %v589 = vsel %vm477, %v584, %v588
      %s590 = scalar_lea.vmem %s169, 144
      %v591 = vld [vmem:[%s590] sm:$0xf]
      %v592 = vld [vmem:[%s590 + $0x8] sm:$0xf]
      %v593 = vld [vmem:[%s590 + $0x10] sm:$0xf]
      %v594 = vld [vmem:[%s590 + $0x18] sm:$0xf]
      %v595 = vld [vmem:[%s590 + $0x20] sm:$0xf]
      %v596 = vld [vmem:[%s590 + $0x28] sm:$0xf]
      %v597 = vld [vmem:[%s590 + $0x30] sm:$0xf]
      %v598 = vld [vmem:[%s590 + $0x38] sm:$0xf]
      %v599 = vunpack.c.l.b16 %v491
      %v600 = vunpack.c.l.b16 %v505
      %v601 = vunpack.c.l.b16 %v519
      %v602 = vunpack.c.l.b16 %v533
      %v603 = vunpack.c.l.b16 %v547
      %v604 = vunpack.c.l.b16 %v561
      %v605 = vunpack.c.l.b16 %v575
      %v606 = vunpack.c.l.b16 %v589
      %v607 = vpack.c.b16 %v600, %v599
      %v608 = vpack.c.b16 %v602, %v601
      %v609 = vpack.c.b16 %v604, %v603
      %v610 = vpack.c.b16 %v606, %v605
      %v623 = vunpack.c.l.b16 %v591
      %v624 = vunpack.c.l.b16 %v592
      %v625 = vunpack.c.l.b16 %v593
      %v626 = vunpack.c.l.b16 %v594
      %v627 = vunpack.c.l.b16 %v595
      %v628 = vunpack.c.l.b16 %v596
      %v629 = vunpack.c.l.b16 %v597
      %v630 = vunpack.c.l.b16 %v598
      %v631 = vpack.c.b16 %v624, %v623
      %v632 = vpack.c.b16 %v626, %v625
      %v633 = vpack.c.b16 %v628, %v627
      %v634 = vpack.c.b16 %v630, %v629
      %v639 = vld [vmem:[#allocation2] sm:$0xff]
      %v640 = vld [vmem:[#allocation2 + $0x8] sm:$0xff]
      %v641 = vld [vmem:[#allocation2 + $0x10] sm:$0xff]
      %v642 = vld [vmem:[#allocation2 + $0x18] sm:$0xff]
      %v643 = vld [vmem:[#allocation2 + $0x20] sm:$0xff]
      %v644 = vld [vmem:[#allocation2 + $0x28] sm:$0xff]
      %v645 = vld [vmem:[#allocation2 + $0x30] sm:$0xff]
      %v646 = vld [vmem:[#allocation2 + $0x38] sm:$0xff]
      %s647 = scalar_lea.vmem %s1, 128
      %v648 = vld [vmem:[%s647] sm:$0xf]
      %v649 = vld [vmem:[%s647 + $0x4] sm:$0xf]
      %v650 = vld [vmem:[%s647 + $0x8] sm:$0xf]
      %v651 = vld [vmem:[%s647 + $0xc] sm:$0xf]
      %v652 = vld [vmem:[%s647 + $0x10] sm:$0xf]
      %v653 = vld [vmem:[%s647 + $0x14] sm:$0xf]
      %v654 = vld [vmem:[%s647 + $0x18] sm:$0xf]
      %v655 = vld [vmem:[%s647 + $0x1c] sm:$0xf]
      %v656 = vld [vmem:[%s647 + $0x20] sm:$0xf]
      %v657 = vld [vmem:[%s647 + $0x24] sm:$0xf]
      %v658 = vld [vmem:[%s647 + $0x28] sm:$0xf]
      %v659 = vld [vmem:[%s647 + $0x2c] sm:$0xf]
      %v660 = vld [vmem:[%s647 + $0x30] sm:$0xf]
      %v661 = vld [vmem:[%s647 + $0x34] sm:$0xf]
      %v662 = vld [vmem:[%s647 + $0x38] sm:$0xf]
      %v663 = vld [vmem:[%s647 + $0x3c] sm:$0xf]
      %v664 = vld [vmem:[%s647 + $0x40] sm:$0xf]
      %v665 = vld [vmem:[%s647 + $0x44] sm:$0xf]
      %v666 = vld [vmem:[%s647 + $0x48] sm:$0xf]
      %v667 = vld [vmem:[%s647 + $0x4c] sm:$0xf]
      %v668 = vld [vmem:[%s647 + $0x50] sm:$0xf]
      %v669 = vld [vmem:[%s647 + $0x54] sm:$0xf]
      %v670 = vld [vmem:[%s647 + $0x58] sm:$0xf]
      %v671 = vld [vmem:[%s647 + $0x5c] sm:$0xf]
      %v672 = vld [vmem:[%s647 + $0x60] sm:$0xf]
      %v673 = vld [vmem:[%s647 + $0x64] sm:$0xf]
      %v674 = vld [vmem:[%s647 + $0x68] sm:$0xf]
      %v675 = vld [vmem:[%s647 + $0x6c] sm:$0xf]
      %v676 = vld [vmem:[%s647 + $0x70] sm:$0xf]
      %v677 = vld [vmem:[%s647 + $0x74] sm:$0xf]
      %v678 = vld [vmem:[%s647 + $0x78] sm:$0xf]
      %v679 = vld [vmem:[%s647 + $0x7c] sm:$0xf]
      %v712 = vunpack.c.l.b16 %v648
      %v713 = vunpack.c.l.b16 %v649
      %v714 = vunpack.c.l.b16 %v650
      %v715 = vunpack.c.l.b16 %v651
      %v716 = vunpack.c.l.b16 %v652
      %v717 = vunpack.c.l.b16 %v653
      %v718 = vunpack.c.l.b16 %v654
      %v719 = vunpack.c.l.b16 %v655
      %v720 = vunpack.c.l.b16 %v656
      %v721 = vunpack.c.l.b16 %v657
      %v722 = vunpack.c.l.b16 %v658
      %v723 = vunpack.c.l.b16 %v659
      %v724 = vunpack.c.l.b16 %v660
      %v725 = vunpack.c.l.b16 %v661
      %v726 = vunpack.c.l.b16 %v662
      %v727 = vunpack.c.l.b16 %v663
      %v728 = vunpack.c.l.b16 %v664
      %v729 = vunpack.c.l.b16 %v665
      %v730 = vunpack.c.l.b16 %v666
      %v731 = vunpack.c.l.b16 %v667
      %v732 = vunpack.c.l.b16 %v668
      %v733 = vunpack.c.l.b16 %v669
      %v734 = vunpack.c.l.b16 %v670
      %v735 = vunpack.c.l.b16 %v671
      %v736 = vunpack.c.l.b16 %v672
      %v737 = vunpack.c.l.b16 %v673
      %v738 = vunpack.c.l.b16 %v674
      %v739 = vunpack.c.l.b16 %v675
      %v740 = vunpack.c.l.b16 %v676
      %v741 = vunpack.c.l.b16 %v677
      %v742 = vunpack.c.l.b16 %v678
      %v743 = vunpack.c.l.b16 %v679
      %v744 = vpack.c.b16 %v713, %v712
      %v745 = vpack.c.b16 %v715, %v714
      %v746 = vpack.c.b16 %v717, %v716
      %v747 = vpack.c.b16 %v719, %v718
      %v748 = vpack.c.b16 %v721, %v720
      %v749 = vpack.c.b16 %v723, %v722
      %v750 = vpack.c.b16 %v725, %v724
      %v751 = vpack.c.b16 %v727, %v726
      %v752 = vpack.c.b16 %v729, %v728
      %v753 = vpack.c.b16 %v731, %v730
      %v754 = vpack.c.b16 %v733, %v732
      %v755 = vpack.c.b16 %v735, %v734
      %v756 = vpack.c.b16 %v737, %v736
      %v757 = vpack.c.b16 %v739, %v738
      %v758 = vpack.c.b16 %v741, %v740
      %v759 = vpack.c.b16 %v743, %v742
      %776 = vmatpush.bf16.msra.mxu0 %v751
      %777 = vmatpush.bf16.msra.mxu0 %v750
      %778 = vmatpush.bf16.msra.mxu0 %v749
      %779 = vmatpush.bf16.msra.mxu0 %v748
      %780 = vmatpush.bf16.msra.mxu0 %v747
      %781 = vmatpush.bf16.msra.mxu0 %v746
      %782 = vmatpush.bf16.msra.mxu0 %v745
      %783 = vmatpush.bf16.msra.mxu0 %v744
      %784 = vmatmul.bf16.gmra.mxu0 %v607
      %v785 = vpop.f32.mrf.mxu0
      %v786 = vadd.f32 0.0, %v785
      %v787 = vpop.f32.mrf.mxu0
      %v788 = vadd.f32 0.0, %v787
      %789 = vmatmul.bf16.gmra.mxu0 %v608
      %v790 = vpop.f32.mrf.mxu0
      %v791 = vadd.f32 0.0, %v790
      %v792 = vpop.f32.mrf.mxu0
      %v793 = vadd.f32 0.0, %v792
      %794 = vmatmul.bf16.gmra.mxu0 %v609
      %v795 = vpop.f32.mrf.mxu0
      %v796 = vadd.f32 0.0, %v795
      %v797 = vpop.f32.mrf.mxu0
      %v798 = vadd.f32 0.0, %v797
      %799 = vmatmul.bf16.gmra.mxu0 %v610
      %v800 = vpop.f32.mrf.mxu0
      %v801 = vadd.f32 0.0, %v800
      %v802 = vpop.f32.mrf.mxu0
      %v803 = vadd.f32 0.0, %v802
      %804 = vdwg.mxu0
      %805 = vmatpush.bf16.msra.mxu0 %v759
      %806 = vmatpush.bf16.msra.mxu0 %v758
      %807 = vmatpush.bf16.msra.mxu0 %v757
      %808 = vmatpush.bf16.msra.mxu0 %v756
      %809 = vmatpush.bf16.msra.mxu0 %v755
      %810 = vmatpush.bf16.msra.mxu0 %v754
      %811 = vmatpush.bf16.msra.mxu0 %v753
      %812 = vmatpush.bf16.msra.mxu0 %v752
      %813 = vmatmul.bf16.gmra.mxu0 %v631
      %v814 = vpop.f32.mrf.mxu0
      %v815 = vadd.f32 %v786, %v814
      %v816 = vpop.f32.mrf.mxu0
      %v817 = vadd.f32 %v788, %v816
      %818 = vmatmul.bf16.gmra.mxu0 %v632
      %v819 = vpop.f32.mrf.mxu0
      %v820 = vadd.f32 %v791, %v819
      %v821 = vpop.f32.mrf.mxu0
      %v822 = vadd.f32 %v793, %v821
      %823 = vmatmul.bf16.gmra.mxu0 %v633
      %v824 = vpop.f32.mrf.mxu0
      %v825 = vadd.f32 %v796, %v824
      %v826 = vpop.f32.mrf.mxu0
      %v827 = vadd.f32 %v798, %v826
      %828 = vmatmul.bf16.gmra.mxu0 %v634
      %v829 = vpop.f32.mrf.mxu0
      %v830 = vadd.f32 %v801, %v829
      %v831 = vpop.f32.mrf.mxu0
      %v832 = vadd.f32 %v803, %v831
      %833 = vdwg.mxu0
      %v834 = vadd.f32 %v639, %v815
      %v835 = vadd.f32 %v640, %v817
      %v836 = vadd.f32 %v641, %v820
      %v837 = vadd.f32 %v642, %v822
      %v838 = vadd.f32 %v643, %v825
      %v839 = vadd.f32 %v644, %v827
      %v840 = vadd.f32 %v645, %v830
      %v841 = vadd.f32 %v646, %v832
      %842 = vst [vmem:[#allocation2] sm:$0xff] %v834
      %843 = vst [vmem:[#allocation2 + $0x8] sm:$0xff] %v835
      %844 = vst [vmem:[#allocation2 + $0x10] sm:$0xff] %v836
      %845 = vst [vmem:[#allocation2 + $0x18] sm:$0xff] %v837
      %846 = vst [vmem:[#allocation2 + $0x20] sm:$0xff] %v838
      %847 = vst [vmem:[#allocation2 + $0x28] sm:$0xff] %v839
      %848 = vst [vmem:[#allocation2 + $0x30] sm:$0xff] %v840
      %849 = vst [vmem:[#allocation2 + $0x38] sm:$0xff] %v841
      %s850 = scalar_lea.vmem %s169, 216
      %v851 = vld [vmem:[%s850] sm:$0xf]
      %v852 = vld [vmem:[%s850 + $0x8] sm:$0xf]
      %v853 = vld [vmem:[%s850 + $0x10] sm:$0xf]
      %v854 = vld [vmem:[%s850 + $0x18] sm:$0xf]
      %v855 = vld [vmem:[%s850 + $0x20] sm:$0xf]
      %v856 = vld [vmem:[%s850 + $0x28] sm:$0xf]
      %v857 = vld [vmem:[%s850 + $0x30] sm:$0xf]
      %v858 = vld [vmem:[%s850 + $0x38] sm:$0xf]
      %v859 = vld [vmem:[%s590] sm:$0xf]
      %v860 = vld [vmem:[%s590 + $0x4] sm:$0x1]
      %v861 = vld [vmem:[%s590 + $0x8] sm:$0xf]
      %v862 = vld [vmem:[%s590 + $0xc] sm:$0x1]
      %v863 = vld [vmem:[%s590 + $0x10] sm:$0xf]
      %v864 = vld [vmem:[%s590 + $0x14] sm:$0x1]
      %v865 = vld [vmem:[%s590 + $0x18] sm:$0xf]
      %v866 = vld [vmem:[%s590 + $0x1c] sm:$0x1]
      %v867 = vld [vmem:[%s590 + $0x20] sm:$0xf]
      %v868 = vld [vmem:[%s590 + $0x24] sm:$0x1]
      %v869 = vld [vmem:[%s590 + $0x28] sm:$0xf]
      %v870 = vld [vmem:[%s590 + $0x2c] sm:$0x1]
      %v871 = vld [vmem:[%s590 + $0x30] sm:$0xf]
      %v872 = vld [vmem:[%s590 + $0x34] sm:$0x1]
      %v873 = vld [vmem:[%s590 + $0x38] sm:$0xf]
      %v874 = vld [vmem:[%s590 + $0x3c] sm:$0x1]
      %v876 = vshrl.u32 %v859, 16
      %v878 = vrot.slane %v876, 4
      %v879 = vshll.u32 %v859, 16
      %v881 = vrot.slane %v879, 5
      %v882 = vor.u32 %v878, %v881
      %v883 = vrot.slane %v882, 4
      %v885 = vshll.u32 %v860, 16
      %v887 = vrot.slane %v885, 5
      %v888 = vsel %vm477, %v883, %v887
      %v890 = vshrl.u32 %v861, 16
      %v892 = vrot.slane %v890, 4
      %v893 = vshll.u32 %v861, 16
      %v895 = vrot.slane %v893, 5
      %v896 = vor.u32 %v892, %v895
      %v897 = vrot.slane %v896, 4
      %v899 = vshll.u32 %v862, 16
      %v901 = vrot.slane %v899, 5
      %v902 = vsel %vm477, %v897, %v901
      %v904 = vshrl.u32 %v863, 16
      %v906 = vrot.slane %v904, 4
      %v907 = vshll.u32 %v863, 16
      %v909 = vrot.slane %v907, 5
      %v910 = vor.u32 %v906, %v909
      %v911 = vrot.slane %v910, 4
      %v913 = vshll.u32 %v864, 16
      %v915 = vrot.slane %v913, 5
      %v916 = vsel %vm477, %v911, %v915
      %v918 = vshrl.u32 %v865, 16
      %v920 = vrot.slane %v918, 4
      %v921 = vshll.u32 %v865, 16
      %v923 = vrot.slane %v921, 5
      %v924 = vor.u32 %v920, %v923
      %v925 = vrot.slane %v924, 4
      %v927 = vshll.u32 %v866, 16
      %v929 = vrot.slane %v927, 5
      %v930 = vsel %vm477, %v925, %v929
      %v932 = vshrl.u32 %v867, 16
      %v934 = vrot.slane %v932, 4
      %v935 = vshll.u32 %v867, 16
      %v937 = vrot.slane %v935, 5
      %v938 = vor.u32 %v934, %v937
      %v939 = vrot.slane %v938, 4
      %v941 = vshll.u32 %v868, 16
      %v943 = vrot.slane %v941, 5
      %v944 = vsel %vm477, %v939, %v943
      %v946 = vshrl.u32 %v869, 16
      %v948 = vrot.slane %v946, 4
      %v949 = vshll.u32 %v869, 16
      %v951 = vrot.slane %v949, 5
      %v952 = vor.u32 %v948, %v951
      %v953 = vrot.slane %v952, 4
      %v955 = vshll.u32 %v870, 16
      %v957 = vrot.slane %v955, 5
      %v958 = vsel %vm477, %v953, %v957
      %v960 = vshrl.u32 %v871, 16
      %v962 = vrot.slane %v960, 4
      %v963 = vshll.u32 %v871, 16
      %v965 = vrot.slane %v963, 5
      %v966 = vor.u32 %v962, %v965
      %v967 = vrot.slane %v966, 4
      %v969 = vshll.u32 %v872, 16
      %v971 = vrot.slane %v969, 5
      %v972 = vsel %vm477, %v967, %v971
      %v974 = vshrl.u32 %v873, 16
      %v976 = vrot.slane %v974, 4
      %v977 = vshll.u32 %v873, 16
      %v979 = vrot.slane %v977, 5
      %v980 = vor.u32 %v976, %v979
      %v981 = vrot.slane %v980, 4
      %v983 = vshll.u32 %v874, 16
      %v985 = vrot.slane %v983, 5
      %v986 = vsel %vm477, %v981, %v985
      %v995 = vunpack.c.l.b16 %v851
      %v996 = vunpack.c.l.b16 %v852
      %v997 = vunpack.c.l.b16 %v853
      %v998 = vunpack.c.l.b16 %v854
      %v999 = vunpack.c.l.b16 %v855
      %v1000 = vunpack.c.l.b16 %v856
      %v1001 = vunpack.c.l.b16 %v857
      %v1002 = vunpack.c.l.b16 %v858
      %v1003 = vpack.c.b16 %v996, %v995
      %v1004 = vpack.c.b16 %v998, %v997
      %v1005 = vpack.c.b16 %v1000, %v999
      %v1006 = vpack.c.b16 %v1002, %v1001
      %v1011 = vunpack.c.l.b16 %v888
      %v1012 = vunpack.c.l.b16 %v902
      %v1013 = vunpack.c.l.b16 %v916
      %v1014 = vunpack.c.l.b16 %v930
      %v1015 = vunpack.c.l.b16 %v944
      %v1016 = vunpack.c.l.b16 %v958
      %v1017 = vunpack.c.l.b16 %v972
      %v1018 = vunpack.c.l.b16 %v986
      %v1019 = vpack.c.b16 %v1012, %v1011
      %v1020 = vpack.c.b16 %v1014, %v1013
      %v1021 = vpack.c.b16 %v1016, %v1015
      %v1022 = vpack.c.b16 %v1018, %v1017
      %v1027 = vld [vmem:[#allocation2] sm:$0xff]
      %v1028 = vld [vmem:[#allocation2 + $0x8] sm:$0xff]
      %v1029 = vld [vmem:[#allocation2 + $0x10] sm:$0xff]
      %v1030 = vld [vmem:[#allocation2 + $0x18] sm:$0xff]
      %v1031 = vld [vmem:[#allocation2 + $0x20] sm:$0xff]
      %v1032 = vld [vmem:[#allocation2 + $0x28] sm:$0xff]
      %v1033 = vld [vmem:[#allocation2 + $0x30] sm:$0xff]
      %v1034 = vld [vmem:[#allocation2 + $0x38] sm:$0xff]
      %s1035 = scalar_lea.vmem %s1, 256
      %v1036 = vld [vmem:[%s1035] sm:$0xf]
      %v1037 = vld [vmem:[%s1035 + $0x4] sm:$0xf]
      %v1038 = vld [vmem:[%s1035 + $0x8] sm:$0xf]
      %v1039 = vld [vmem:[%s1035 + $0xc] sm:$0xf]
      %v1040 = vld [vmem:[%s1035 + $0x10] sm:$0xf]
      %v1041 = vld [vmem:[%s1035 + $0x14] sm:$0xf]
      %v1042 = vld [vmem:[%s1035 + $0x18] sm:$0xf]
      %v1043 = vld [vmem:[%s1035 + $0x1c] sm:$0xf]
      %v1044 = vld [vmem:[%s1035 + $0x20] sm:$0xf]
      %v1045 = vld [vmem:[%s1035 + $0x24] sm:$0xf]
      %v1046 = vld [vmem:[%s1035 + $0x28] sm:$0xf]
      %v1047 = vld [vmem:[%s1035 + $0x2c] sm:$0xf]
      %v1048 = vld [vmem:[%s1035 + $0x30] sm:$0xf]
      %v1049 = vld [vmem:[%s1035 + $0x34] sm:$0xf]
      %v1050 = vld [vmem:[%s1035 + $0x38] sm:$0xf]
      %v1051 = vld [vmem:[%s1035 + $0x3c] sm:$0xf]
      %v1052 = vld [vmem:[%s1035 + $0x40] sm:$0xf]
      %v1053 = vld [vmem:[%s1035 + $0x44] sm:$0xf]
      %v1054 = vld [vmem:[%s1035 + $0x48] sm:$0xf]
      %v1055 = vld [vmem:[%s1035 + $0x4c] sm:$0xf]
      %v1056 = vld [vmem:[%s1035 + $0x50] sm:$0xf]
      %v1057 = vld [vmem:[%s1035 + $0x54] sm:$0xf]
      %v1058 = vld [vmem:[%s1035 + $0x58] sm:$0xf]
      %v1059 = vld [vmem:[%s1035 + $0x5c] sm:$0xf]
      %v1060 = vld [vmem:[%s1035 + $0x60] sm:$0xf]
      %v1061 = vld [vmem:[%s1035 + $0x64] sm:$0xf]
      %v1062 = vld [vmem:[%s1035 + $0x68] sm:$0xf]
      %v1063 = vld [vmem:[%s1035 + $0x6c] sm:$0xf]
      %v1064 = vld [vmem:[%s1035 + $0x70] sm:$0xf]
      %v1065 = vld [vmem:[%s1035 + $0x74] sm:$0xf]
      %v1066 = vld [vmem:[%s1035 + $0x78] sm:$0xf]
      %v1067 = vld [vmem:[%s1035 + $0x7c] sm:$0xf]
      %v1100 = vunpack.c.l.b16 %v1036
      %v1101 = vunpack.c.l.b16 %v1037
      %v1102 = vunpack.c.l.b16 %v1038
      %v1103 = vunpack.c.l.b16 %v1039
      %v1104 = vunpack.c.l.b16 %v1040
      %v1105 = vunpack.c.l.b16 %v1041
      %v1106 = vunpack.c.l.b16 %v1042
      %v1107 = vunpack.c.l.b16 %v1043
      %v1108 = vunpack.c.l.b16 %v1044
      %v1109 = vunpack.c.l.b16 %v1045
      %v1110 = vunpack.c.l.b16 %v1046
      %v1111 = vunpack.c.l.b16 %v1047
      %v1112 = vunpack.c.l.b16 %v1048
      %v1113 = vunpack.c.l.b16 %v1049
      %v1114 = vunpack.c.l.b16 %v1050
      %v1115 = vunpack.c.l.b16 %v1051
      %v1116 = vunpack.c.l.b16 %v1052
      %v1117 = vunpack.c.l.b16 %v1053
      %v1118 = vunpack.c.l.b16 %v1054
      %v1119 = vunpack.c.l.b16 %v1055
      %v1120 = vunpack.c.l.b16 %v1056
      %v1121 = vunpack.c.l.b16 %v1057
      %v1122 = vunpack.c.l.b16 %v1058
      %v1123 = vunpack.c.l.b16 %v1059
      %v1124 = vunpack.c.l.b16 %v1060
      %v1125 = vunpack.c.l.b16 %v1061
      %v1126 = vunpack.c.l.b16 %v1062
      %v1127 = vunpack.c.l.b16 %v1063
      %v1128 = vunpack.c.l.b16 %v1064
      %v1129 = vunpack.c.l.b16 %v1065
      %v1130 = vunpack.c.l.b16 %v1066
      %v1131 = vunpack.c.l.b16 %v1067
      %v1132 = vpack.c.b16 %v1101, %v1100
      %v1133 = vpack.c.b16 %v1103, %v1102
      %v1134 = vpack.c.b16 %v1105, %v1104
      %v1135 = vpack.c.b16 %v1107, %v1106
      %v1136 = vpack.c.b16 %v1109, %v1108
      %v1137 = vpack.c.b16 %v1111, %v1110
      %v1138 = vpack.c.b16 %v1113, %v1112
      %v1139 = vpack.c.b16 %v1115, %v1114
      %v1140 = vpack.c.b16 %v1117, %v1116
      %v1141 = vpack.c.b16 %v1119, %v1118
      %v1142 = vpack.c.b16 %v1121, %v1120
      %v1143 = vpack.c.b16 %v1123, %v1122
      %v1144 = vpack.c.b16 %v1125, %v1124
      %v1145 = vpack.c.b16 %v1127, %v1126
      %v1146 = vpack.c.b16 %v1129, %v1128
      %v1147 = vpack.c.b16 %v1131, %v1130
      %1164 = vmatpush.bf16.msra.mxu0 %v1139
      %1165 = vmatpush.bf16.msra.mxu0 %v1138
      %1166 = vmatpush.bf16.msra.mxu0 %v1137
      %1167 = vmatpush.bf16.msra.mxu0 %v1136
      %1168 = vmatpush.bf16.msra.mxu0 %v1135
      %1169 = vmatpush.bf16.msra.mxu0 %v1134
      %1170 = vmatpush.bf16.msra.mxu0 %v1133
      %1171 = vmatpush.bf16.msra.mxu0 %v1132
      %1172 = vmatmul.bf16.gmra.mxu0 %v1003
      %v1173 = vpop.f32.mrf.mxu0
      %v1174 = vadd.f32 0.0, %v1173
      %v1175 = vpop.f32.mrf.mxu0
      %v1176 = vadd.f32 0.0, %v1175
      %1177 = vmatmul.bf16.gmra.mxu0 %v1004
      %v1178 = vpop.f32.mrf.mxu0
      %v1179 = vadd.f32 0.0, %v1178
      %v1180 = vpop.f32.mrf.mxu0
      %v1181 = vadd.f32 0.0, %v1180
      %1182 = vmatmul.bf16.gmra.mxu0 %v1005
      %v1183 = vpop.f32.mrf.mxu0
      %v1184 = vadd.f32 0.0, %v1183
      %v1185 = vpop.f32.mrf.mxu0
      %v1186 = vadd.f32 0.0, %v1185
      %1187 = vmatmul.bf16.gmra.mxu0 %v1006
      %v1188 = vpop.f32.mrf.mxu0
      %v1189 = vadd.f32 0.0, %v1188
      %v1190 = vpop.f32.mrf.mxu0
      %v1191 = vadd.f32 0.0, %v1190
      %1192 = vdwg.mxu0
      %1193 = vmatpush.bf16.msra.mxu0 %v1147
      %1194 = vmatpush.bf16.msra.mxu0 %v1146
      %1195 = vmatpush.bf16.msra.mxu0 %v1145
      %1196 = vmatpush.bf16.msra.mxu0 %v1144
      %1197 = vmatpush.bf16.msra.mxu0 %v1143
      %1198 = vmatpush.bf16.msra.mxu0 %v1142
      %1199 = vmatpush.bf16.msra.mxu0 %v1141
      %1200 = vmatpush.bf16.msra.mxu0 %v1140
      %1201 = vmatmul.bf16.gmra.mxu0 %v1019
      %v1202 = vpop.f32.mrf.mxu0
      %v1203 = vadd.f32 %v1174, %v1202
      %v1204 = vpop.f32.mrf.mxu0
      %v1205 = vadd.f32 %v1176, %v1204
      %1206 = vmatmul.bf16.gmra.mxu0 %v1020
      %v1207 = vpop.f32.mrf.mxu0
      %v1208 = vadd.f32 %v1179, %v1207
      %v1209 = vpop.f32.mrf.mxu0
      %v1210 = vadd.f32 %v1181, %v1209
      %1211 = vmatmul.bf16.gmra.mxu0 %v1021
      %v1212 = vpop.f32.mrf.mxu0
      %v1213 = vadd.f32 %v1184, %v1212
      %v1214 = vpop.f32.mrf.mxu0
      %v1215 = vadd.f32 %v1186, %v1214
      %1216 = vmatmul.bf16.gmra.mxu0 %v1022
      %v1217 = vpop.f32.mrf.mxu0
      %v1218 = vadd.f32 %v1189, %v1217
      %v1219 = vpop.f32.mrf.mxu0
      %v1220 = vadd.f32 %v1191, %v1219
      %1221 = vdwg.mxu0
      %v1222 = vadd.f32 %v1027, %v1203
      %v1223 = vadd.f32 %v1028, %v1205
      %v1224 = vadd.f32 %v1029, %v1208
      %v1225 = vadd.f32 %v1030, %v1210
      %v1226 = vadd.f32 %v1031, %v1213
      %v1227 = vadd.f32 %v1032, %v1215
      %v1228 = vadd.f32 %v1033, %v1218
      %v1229 = vadd.f32 %v1034, %v1220
      %1230 = vst [vmem:[#allocation2] sm:$0xff] %v1222
      %1231 = vst [vmem:[#allocation2 + $0x8] sm:$0xff] %v1223
      %1232 = vst [vmem:[#allocation2 + $0x10] sm:$0xff] %v1224
      %1233 = vst [vmem:[#allocation2 + $0x18] sm:$0xff] %v1225
      %1234 = vst [vmem:[#allocation2 + $0x20] sm:$0xff] %v1226
      %1235 = vst [vmem:[#allocation2 + $0x28] sm:$0xff] %v1227
      %1236 = vst [vmem:[#allocation2 + $0x30] sm:$0xff] %v1228
      %1237 = vst [vmem:[#allocation2 + $0x38] sm:$0xff] %v1229
      %s1238 = scalar_lea.vmem %s169, 8
      %v1239 = vld [vmem:[%s1238] sm:$0xf]
      %v1240 = vld [vmem:[%s1238 + $0x8] sm:$0xf]
      %v1241 = vld [vmem:[%s1238 + $0x10] sm:$0xf]
      %v1242 = vld [vmem:[%s1238 + $0x18] sm:$0xf]
      %v1243 = vld [vmem:[%s1238 + $0x20] sm:$0xf]
      %v1244 = vld [vmem:[%s1238 + $0x28] sm:$0xf]
      %v1245 = vld [vmem:[%s1238 + $0x30] sm:$0xf]
      %v1246 = vld [vmem:[%s1238 + $0x38] sm:$0xf]
      %s1247 = scalar_lea.vmem %s169, 80
      %v1248 = vld [vmem:[%s1247] sm:$0xf]
      %v1249 = vld [vmem:[%s1247 + $0x8] sm:$0xf]
      %v1250 = vld [vmem:[%s1247 + $0x10] sm:$0xf]
      %v1251 = vld [vmem:[%s1247 + $0x18] sm:$0xf]
      %v1252 = vld [vmem:[%s1247 + $0x20] sm:$0xf]
      %v1253 = vld [vmem:[%s1247 + $0x28] sm:$0xf]
      %v1254 = vld [vmem:[%s1247 + $0x30] sm:$0xf]
      %v1255 = vld [vmem:[%s1247 + $0x38] sm:$0xf]
      %v1264 = vunpack.c.l.b16 %v1239
      %v1265 = vunpack.c.l.b16 %v1240
      %v1266 = vunpack.c.l.b16 %v1241
      %v1267 = vunpack.c.l.b16 %v1242
      %v1268 = vunpack.c.l.b16 %v1243
      %v1269 = vunpack.c.l.b16 %v1244
      %v1270 = vunpack.c.l.b16 %v1245
      %v1271 = vunpack.c.l.b16 %v1246
      %v1272 = vpack.c.b16 %v1265, %v1264
      %v1273 = vpack.c.b16 %v1267, %v1266
      %v1274 = vpack.c.b16 %v1269, %v1268
      %v1275 = vpack.c.b16 %v1271, %v1270
      %v1288 = vunpack.c.l.b16 %v1248
      %v1289 = vunpack.c.l.b16 %v1249
      %v1290 = vunpack.c.l.b16 %v1250
      %v1291 = vunpack.c.l.b16 %v1251
      %v1292 = vunpack.c.l.b16 %v1252
      %v1293 = vunpack.c.l.b16 %v1253
      %v1294 = vunpack.c.l.b16 %v1254
      %v1295 = vunpack.c.l.b16 %v1255
      %v1296 = vpack.c.b16 %v1289, %v1288
      %v1297 = vpack.c.b16 %v1291, %v1290
      %v1298 = vpack.c.b16 %v1293, %v1292
      %v1299 = vpack.c.b16 %v1295, %v1294
      %v1304 = vld [vmem:[#allocation2] sm:$0xff]
      %v1305 = vld [vmem:[#allocation2 + $0x8] sm:$0xff]
      %v1306 = vld [vmem:[#allocation2 + $0x10] sm:$0xff]
      %v1307 = vld [vmem:[#allocation2 + $0x18] sm:$0xff]
      %v1308 = vld [vmem:[#allocation2 + $0x20] sm:$0xff]
      %v1309 = vld [vmem:[#allocation2 + $0x28] sm:$0xff]
      %v1310 = vld [vmem:[#allocation2 + $0x30] sm:$0xff]
      %v1311 = vld [vmem:[#allocation2 + $0x38] sm:$0xff]
      %s1312 = scalar_lea.vmem %s1, 384
      %v1313 = vld [vmem:[%s1312] sm:$0xf]
      %v1314 = vld [vmem:[%s1312 + $0x4] sm:$0xf]
      %v1315 = vld [vmem:[%s1312 + $0x8] sm:$0xf]
      %v1316 = vld [vmem:[%s1312 + $0xc] sm:$0xf]
      %v1317 = vld [vmem:[%s1312 + $0x10] sm:$0xf]
      %v1318 = vld [vmem:[%s1312 + $0x14] sm:$0xf]
      %v1319 = vld [vmem:[%s1312 + $0x18] sm:$0xf]
      %v1320 = vld [vmem:[%s1312 + $0x1c] sm:$0xf]
      %v1321 = vld [vmem:[%s1312 + $0x20] sm:$0xf]
      %v1322 = vld [vmem:[%s1312 + $0x24] sm:$0xf]
      %v1323 = vld [vmem:[%s1312 + $0x28] sm:$0xf]
      %v1324 = vld [vmem:[%s1312 + $0x2c] sm:$0xf]
      %v1325 = vld [vmem:[%s1312 + $0x30] sm:$0xf]
      %v1326 = vld [vmem:[%s1312 + $0x34] sm:$0xf]
      %v1327 = vld [vmem:[%s1312 + $0x38] sm:$0xf]
      %v1328 = vld [vmem:[%s1312 + $0x3c] sm:$0xf]
      %v1329 = vld [vmem:[%s1312 + $0x40] sm:$0xf]
      %v1330 = vld [vmem:[%s1312 + $0x44] sm:$0xf]
      %v1331 = vld [vmem:[%s1312 + $0x48] sm:$0xf]
      %v1332 = vld [vmem:[%s1312 + $0x4c] sm:$0xf]
      %v1333 = vld [vmem:[%s1312 + $0x50] sm:$0xf]
      %v1334 = vld [vmem:[%s1312 + $0x54] sm:$0xf]
      %v1335 = vld [vmem:[%s1312 + $0x58] sm:$0xf]
      %v1336 = vld [vmem:[%s1312 + $0x5c] sm:$0xf]
      %v1337 = vld [vmem:[%s1312 + $0x60] sm:$0xf]
      %v1338 = vld [vmem:[%s1312 + $0x64] sm:$0xf]
      %v1339 = vld [vmem:[%s1312 + $0x68] sm:$0xf]
      %v1340 = vld [vmem:[%s1312 + $0x6c] sm:$0xf]
      %v1341 = vld [vmem:[%s1312 + $0x70] sm:$0xf]
      %v1342 = vld [vmem:[%s1312 + $0x74] sm:$0xf]
      %v1343 = vld [vmem:[%s1312 + $0x78] sm:$0xf]
      %v1344 = vld [vmem:[%s1312 + $0x7c] sm:$0xf]
      %v1377 = vunpack.c.l.b16 %v1313
      %v1378 = vunpack.c.l.b16 %v1314
      %v1379 = vunpack.c.l.b16 %v1315
      %v1380 = vunpack.c.l.b16 %v1316
      %v1381 = vunpack.c.l.b16 %v1317
      %v1382 = vunpack.c.l.b16 %v1318
      %v1383 = vunpack.c.l.b16 %v1319
      %v1384 = vunpack.c.l.b16 %v1320
      %v1385 = vunpack.c.l.b16 %v1321
      %v1386 = vunpack.c.l.b16 %v1322
      %v1387 = vunpack.c.l.b16 %v1323
      %v1388 = vunpack.c.l.b16 %v1324
      %v1389 = vunpack.c.l.b16 %v1325
      %v1390 = vunpack.c.l.b16 %v1326
      %v1391 = vunpack.c.l.b16 %v1327
      %v1392 = vunpack.c.l.b16 %v1328
      %v1393 = vunpack.c.l.b16 %v1329
      %v1394 = vunpack.c.l.b16 %v1330
      %v1395 = vunpack.c.l.b16 %v1331
      %v1396 = vunpack.c.l.b16 %v1332
      %v1397 = vunpack.c.l.b16 %v1333
      %v1398 = vunpack.c.l.b16 %v1334
      %v1399 = vunpack.c.l.b16 %v1335
      %v1400 = vunpack.c.l.b16 %v1336
      %v1401 = vunpack.c.l.b16 %v1337
      %v1402 = vunpack.c.l.b16 %v1338
      %v1403 = vunpack.c.l.b16 %v1339
      %v1404 = vunpack.c.l.b16 %v1340
      %v1405 = vunpack.c.l.b16 %v1341
      %v1406 = vunpack.c.l.b16 %v1342
      %v1407 = vunpack.c.l.b16 %v1343
      %v1408 = vunpack.c.l.b16 %v1344
      %v1409 = vpack.c.b16 %v1378, %v1377
      %v1410 = vpack.c.b16 %v1380, %v1379
      %v1411 = vpack.c.b16 %v1382, %v1381
      %v1412 = vpack.c.b16 %v1384, %v1383
      %v1413 = vpack.c.b16 %v1386, %v1385
      %v1414 = vpack.c.b16 %v1388, %v1387
      %v1415 = vpack.c.b16 %v1390, %v1389
      %v1416 = vpack.c.b16 %v1392, %v1391
      %v1417 = vpack.c.b16 %v1394, %v1393
      %v1418 = vpack.c.b16 %v1396, %v1395
      %v1419 = vpack.c.b16 %v1398, %v1397
      %v1420 = vpack.c.b16 %v1400, %v1399
      %v1421 = vpack.c.b16 %v1402, %v1401
      %v1422 = vpack.c.b16 %v1404, %v1403
      %v1423 = vpack.c.b16 %v1406, %v1405
      %v1424 = vpack.c.b16 %v1408, %v1407
      %1441 = vmatpush.bf16.msra.mxu0 %v1416
      %1442 = vmatpush.bf16.msra.mxu0 %v1415
      %1443 = vmatpush.bf16.msra.mxu0 %v1414
      %1444 = vmatpush.bf16.msra.mxu0 %v1413
      %1445 = vmatpush.bf16.msra.mxu0 %v1412
      %1446 = vmatpush.bf16.msra.mxu0 %v1411
      %1447 = vmatpush.bf16.msra.mxu0 %v1410
      %1448 = vmatpush.bf16.msra.mxu0 %v1409
      %1449 = vmatmul.bf16.gmra.mxu0 %v1272
      %v1450 = vpop.f32.mrf.mxu0
      %v1451 = vadd.f32 0.0, %v1450
      %v1452 = vpop.f32.mrf.mxu0
      %v1453 = vadd.f32 0.0, %v1452
      %1454 = vmatmul.bf16.gmra.mxu0 %v1273
      %v1455 = vpop.f32.mrf.mxu0
      %v1456 = vadd.f32 0.0, %v1455
      %v1457 = vpop.f32.mrf.mxu0
      %v1458 = vadd.f32 0.0, %v1457
      %1459 = vmatmul.bf16.gmra.mxu0 %v1274
      %v1460 = vpop.f32.mrf.mxu0
      %v1461 = vadd.f32 0.0, %v1460
      %v1462 = vpop.f32.mrf.mxu0
      %v1463 = vadd.f32 0.0, %v1462
      %1464 = vmatmul.bf16.gmra.mxu0 %v1275
      %v1465 = vpop.f32.mrf.mxu0
      %v1466 = vadd.f32 0.0, %v1465
      %v1467 = vpop.f32.mrf.mxu0
      %v1468 = vadd.f32 0.0, %v1467
      %1469 = vdwg.mxu0
      %1470 = vmatpush.bf16.msra.mxu0 %v1424
      %1471 = vmatpush.bf16.msra.mxu0 %v1423
      %1472 = vmatpush.bf16.msra.mxu0 %v1422
      %1473 = vmatpush.bf16.msra.mxu0 %v1421
      %1474 = vmatpush.bf16.msra.mxu0 %v1420
      %1475 = vmatpush.bf16.msra.mxu0 %v1419
      %1476 = vmatpush.bf16.msra.mxu0 %v1418
      %1477 = vmatpush.bf16.msra.mxu0 %v1417
      %1478 = vmatmul.bf16.gmra.mxu0 %v1296
      %v1479 = vpop.f32.mrf.mxu0
      %v1480 = vadd.f32 %v1451, %v1479
      %v1481 = vpop.f32.mrf.mxu0
      %v1482 = vadd.f32 %v1453, %v1481
      %1483 = vmatmul.bf16.gmra.mxu0 %v1297
      %v1484 = vpop.f32.mrf.mxu0
      %v1485 = vadd.f32 %v1456, %v1484
      %v1486 = vpop.f32.mrf.mxu0
      %v1487 = vadd.f32 %v1458, %v1486
      %1488 = vmatmul.bf16.gmra.mxu0 %v1298
      %v1489 = vpop.f32.mrf.mxu0
      %v1490 = vadd.f32 %v1461, %v1489
      %v1491 = vpop.f32.mrf.mxu0
      %v1492 = vadd.f32 %v1463, %v1491
      %1493 = vmatmul.bf16.gmra.mxu0 %v1299
      %v1494 = vpop.f32.mrf.mxu0
      %v1495 = vadd.f32 %v1466, %v1494
      %v1496 = vpop.f32.mrf.mxu0
      %v1497 = vadd.f32 %v1468, %v1496
      %1498 = vdwg.mxu0
      %v1499 = vadd.f32 %v1304, %v1480
      %v1500 = vadd.f32 %v1305, %v1482
      %v1501 = vadd.f32 %v1306, %v1485
      %v1502 = vadd.f32 %v1307, %v1487
      %v1503 = vadd.f32 %v1308, %v1490
      %v1504 = vadd.f32 %v1309, %v1492
      %v1505 = vadd.f32 %v1310, %v1495
      %v1506 = vadd.f32 %v1311, %v1497
      %1507 = vst [vmem:[#allocation2] sm:$0xff] %v1499
      %1508 = vst [vmem:[#allocation2 + $0x8] sm:$0xff] %v1500
      %1509 = vst [vmem:[#allocation2 + $0x10] sm:$0xff] %v1501
      %1510 = vst [vmem:[#allocation2 + $0x18] sm:$0xff] %v1502
      %1511 = vst [vmem:[#allocation2 + $0x20] sm:$0xff] %v1503
      %1512 = vst [vmem:[#allocation2 + $0x28] sm:$0xff] %v1504
      %1513 = vst [vmem:[#allocation2 + $0x30] sm:$0xff] %v1505
      %1514 = vst [vmem:[#allocation2 + $0x38] sm:$0xff] %v1506
      %v1515 = vld [vmem:[%s1238] sm:$0xf]
      %v1516 = vld [vmem:[%s1238 + $0x4] sm:$0x1]
      %v1517 = vld [vmem:[%s1238 + $0x8] sm:$0xf]
      %v1518 = vld [vmem:[%s1238 + $0xc] sm:$0x1]
      %v1519 = vld [vmem:[%s1238 + $0x10] sm:$0xf]
      %v1520 = vld [vmem:[%s1238 + $0x14] sm:$0x1]
      %v1521 = vld [vmem:[%s1238 + $0x18] sm:$0xf]
      %v1522 = vld [vmem:[%s1238 + $0x1c] sm:$0x1]
      %v1523 = vld [vmem:[%s1238 + $0x20] sm:$0xf]
      %v1524 = vld [vmem:[%s1238 + $0x24] sm:$0x1]
      %v1525 = vld [vmem:[%s1238 + $0x28] sm:$0xf]
      %v1526 = vld [vmem:[%s1238 + $0x2c] sm:$0x1]
      %v1527 = vld [vmem:[%s1238 + $0x30] sm:$0xf]
      %v1528 = vld [vmem:[%s1238 + $0x34] sm:$0x1]
      %v1529 = vld [vmem:[%s1238 + $0x38] sm:$0xf]
      %v1530 = vld [vmem:[%s1238 + $0x3c] sm:$0x1]
      %v1532 = vshrl.u32 %v1515, 16
      %v1534 = vrot.slane %v1532, 4
      %v1535 = vshll.u32 %v1515, 16
      %v1537 = vrot.slane %v1535, 5
      %v1538 = vor.u32 %v1534, %v1537
      %v1539 = vrot.slane %v1538, 4
      %v1541 = vshll.u32 %v1516, 16
      %v1543 = vrot.slane %v1541, 5
      %v1544 = vsel %vm477, %v1539, %v1543
      %v1546 = vshrl.u32 %v1517, 16
      %v1548 = vrot.slane %v1546, 4
      %v1549 = vshll.u32 %v1517, 16
      %v1551 = vrot.slane %v1549, 5
      %v1552 = vor.u32 %v1548, %v1551
      %v1553 = vrot.slane %v1552, 4
      %v1555 = vshll.u32 %v1518, 16
      %v1557 = vrot.slane %v1555, 5
      %v1558 = vsel %vm477, %v1553, %v1557
      %v1560 = vshrl.u32 %v1519, 16
      %v1562 = vrot.slane %v1560, 4
      %v1563 = vshll.u32 %v1519, 16
      %v1565 = vrot.slane %v1563, 5
      %v1566 = vor.u32 %v1562, %v1565
      %v1567 = vrot.slane %v1566, 4
      %v1569 = vshll.u32 %v1520, 16
      %v1571 = vrot.slane %v1569, 5
      %v1572 = vsel %vm477, %v1567, %v1571
      %v1574 = vshrl.u32 %v1521, 16
      %v1576 = vrot.slane %v1574, 4
      %v1577 = vshll.u32 %v1521, 16
      %v1579 = vrot.slane %v1577, 5
      %v1580 = vor.u32 %v1576, %v1579
      %v1581 = vrot.slane %v1580, 4
      %v1583 = vshll.u32 %v1522, 16
      %v1585 = vrot.slane %v1583, 5
      %v1586 = vsel %vm477, %v1581, %v1585
      %v1588 = vshrl.u32 %v1523, 16
      %v1590 = vrot.slane %v1588, 4
      %v1591 = vshll.u32 %v1523, 16
      %v1593 = vrot.slane %v1591, 5
      %v1594 = vor.u32 %v1590, %v1593
      %v1595 = vrot.slane %v1594, 4
      %v1597 = vshll.u32 %v1524, 16
      %v1599 = vrot.slane %v1597, 5
      %v1600 = vsel %vm477, %v1595, %v1599
      %v1602 = vshrl.u32 %v1525, 16
      %v1604 = vrot.slane %v1602, 4
      %v1605 = vshll.u32 %v1525, 16
      %v1607 = vrot.slane %v1605, 5
      %v1608 = vor.u32 %v1604, %v1607
      %v1609 = vrot.slane %v1608, 4
      %v1611 = vshll.u32 %v1526, 16
      %v1613 = vrot.slane %v1611, 5
      %v1614 = vsel %vm477, %v1609, %v1613
      %v1616 = vshrl.u32 %v1527, 16
      %v1618 = vrot.slane %v1616, 4
      %v1619 = vshll.u32 %v1527, 16
      %v1621 = vrot.slane %v1619, 5
      %v1622 = vor.u32 %v1618, %v1621
      %v1623 = vrot.slane %v1622, 4
      %v1625 = vshll.u32 %v1528, 16
      %v1627 = vrot.slane %v1625, 5
      %v1628 = vsel %vm477, %v1623, %v1627
      %v1630 = vshrl.u32 %v1529, 16
      %v1632 = vrot.slane %v1630, 4
      %v1633 = vshll.u32 %v1529, 16
      %v1635 = vrot.slane %v1633, 5
      %v1636 = vor.u32 %v1632, %v1635
      %v1637 = vrot.slane %v1636, 4
      %v1639 = vshll.u32 %v1530, 16
      %v1641 = vrot.slane %v1639, 5
      %v1642 = vsel %vm477, %v1637, %v1641
      %v1643 = vunpack.c.l.b16 %v1544
      %v1644 = vunpack.c.l.b16 %v1558
      %v1645 = vunpack.c.l.b16 %v1572
      %v1646 = vunpack.c.l.b16 %v1586
      %v1647 = vunpack.c.l.b16 %v1600
      %v1648 = vunpack.c.l.b16 %v1614
      %v1649 = vunpack.c.l.b16 %v1628
      %v1650 = vunpack.c.l.b16 %v1642
      %v1651 = vpack.c.b16 %v1644, %v1643
      %v1652 = vpack.c.b16 %v1646, %v1645
      %v1653 = vpack.c.b16 %v1648, %v1647
      %v1654 = vpack.c.b16 %v1650, %v1649
      %v1659 = vld [vmem:[#allocation2] sm:$0xff]
      %v1660 = vld [vmem:[#allocation2 + $0x8] sm:$0xff]
      %v1661 = vld [vmem:[#allocation2 + $0x10] sm:$0xff]
      %v1662 = vld [vmem:[#allocation2 + $0x18] sm:$0xff]
      %v1663 = vld [vmem:[#allocation2 + $0x20] sm:$0xff]
      %v1664 = vld [vmem:[#allocation2 + $0x28] sm:$0xff]
      %v1665 = vld [vmem:[#allocation2 + $0x30] sm:$0xff]
      %v1666 = vld [vmem:[#allocation2 + $0x38] sm:$0xff]
      %s1667 = scalar_lea.vmem %s1, 512
      %v1668 = vld [vmem:[%s1667] sm:$0xf]
      %v1669 = vld [vmem:[%s1667 + $0x4] sm:$0xf]
      %v1670 = vld [vmem:[%s1667 + $0x8] sm:$0xf]
      %v1671 = vld [vmem:[%s1667 + $0xc] sm:$0xf]
      %v1672 = vld [vmem:[%s1667 + $0x10] sm:$0xf]
      %v1673 = vld [vmem:[%s1667 + $0x14] sm:$0xf]
      %v1674 = vld [vmem:[%s1667 + $0x18] sm:$0xf]
      %v1675 = vld [vmem:[%s1667 + $0x1c] sm:$0xf]
      %v1676 = vld [vmem:[%s1667 + $0x20] sm:$0xf]
      %v1677 = vld [vmem:[%s1667 + $0x24] sm:$0xf]
      %v1678 = vld [vmem:[%s1667 + $0x28] sm:$0xf]
      %v1679 = vld [vmem:[%s1667 + $0x2c] sm:$0xf]
      %v1680 = vld [vmem:[%s1667 + $0x30] sm:$0xf]
      %v1681 = vld [vmem:[%s1667 + $0x34] sm:$0xf]
      %v1682 = vld [vmem:[%s1667 + $0x38] sm:$0xf]
      %v1683 = vld [vmem:[%s1667 + $0x3c] sm:$0xf]
      %v1684 = vld [vmem:[%s1667 + $0x40] sm:$0xf]
      %v1685 = vld [vmem:[%s1667 + $0x44] sm:$0xf]
      %v1686 = vld [vmem:[%s1667 + $0x48] sm:$0xf]
      %v1687 = vld [vmem:[%s1667 + $0x4c] sm:$0xf]
      %v1688 = vld [vmem:[%s1667 + $0x50] sm:$0xf]
      %v1689 = vld [vmem:[%s1667 + $0x54] sm:$0xf]
      %v1690 = vld [vmem:[%s1667 + $0x58] sm:$0xf]
      %v1691 = vld [vmem:[%s1667 + $0x5c] sm:$0xf]
      %v1692 = vld [vmem:[%s1667 + $0x60] sm:$0xf]
      %v1693 = vld [vmem:[%s1667 + $0x64] sm:$0xf]
      %v1694 = vld [vmem:[%s1667 + $0x68] sm:$0xf]
      %v1695 = vld [vmem:[%s1667 + $0x6c] sm:$0xf]
      %v1696 = vld [vmem:[%s1667 + $0x70] sm:$0xf]
      %v1697 = vld [vmem:[%s1667 + $0x74] sm:$0xf]
      %v1698 = vld [vmem:[%s1667 + $0x78] sm:$0xf]
      %v1699 = vld [vmem:[%s1667 + $0x7c] sm:$0xf]
      %v1732 = vunpack.c.l.b16 %v1668
      %v1733 = vunpack.c.l.b16 %v1669
      %v1734 = vunpack.c.l.b16 %v1670
      %v1735 = vunpack.c.l.b16 %v1671
      %v1736 = vunpack.c.l.b16 %v1672
      %v1737 = vunpack.c.l.b16 %v1673
      %v1738 = vunpack.c.l.b16 %v1674
      %v1739 = vunpack.c.l.b16 %v1675
      %v1740 = vunpack.c.l.b16 %v1676
      %v1741 = vunpack.c.l.b16 %v1677
      %v1742 = vunpack.c.l.b16 %v1678
      %v1743 = vunpack.c.l.b16 %v1679
      %v1744 = vunpack.c.l.b16 %v1680
      %v1745 = vunpack.c.l.b16 %v1681
      %v1746 = vunpack.c.l.b16 %v1682
      %v1747 = vunpack.c.l.b16 %v1683
      %v1748 = vunpack.c.l.b16 %v1684
      %v1749 = vunpack.c.l.b16 %v1685
      %v1750 = vunpack.c.l.b16 %v1686
      %v1751 = vunpack.c.l.b16 %v1687
      %v1752 = vunpack.c.l.b16 %v1688
      %v1753 = vunpack.c.l.b16 %v1689
      %v1754 = vunpack.c.l.b16 %v1690
      %v1755 = vunpack.c.l.b16 %v1691
      %v1756 = vunpack.c.l.b16 %v1692
      %v1757 = vunpack.c.l.b16 %v1693
      %v1758 = vunpack.c.l.b16 %v1694
      %v1759 = vunpack.c.l.b16 %v1695
      %v1760 = vunpack.c.l.b16 %v1696
      %v1761 = vunpack.c.l.b16 %v1697
      %v1762 = vunpack.c.l.b16 %v1698
      %v1763 = vunpack.c.l.b16 %v1699
      %v1764 = vpack.c.b16 %v1733, %v1732
      %v1765 = vpack.c.b16 %v1735, %v1734
      %v1766 = vpack.c.b16 %v1737, %v1736
      %v1767 = vpack.c.b16 %v1739, %v1738
      %v1768 = vpack.c.b16 %v1741, %v1740
      %v1769 = vpack.c.b16 %v1743, %v1742
      %v1770 = vpack.c.b16 %v1745, %v1744
      %v1771 = vpack.c.b16 %v1747, %v1746
      %v1772 = vpack.c.b16 %v1749, %v1748
      %v1773 = vpack.c.b16 %v1751, %v1750
      %v1774 = vpack.c.b16 %v1753, %v1752
      %v1775 = vpack.c.b16 %v1755, %v1754
      %v1776 = vpack.c.b16 %v1757, %v1756
      %v1777 = vpack.c.b16 %v1759, %v1758
      %v1778 = vpack.c.b16 %v1761, %v1760
      %v1779 = vpack.c.b16 %v1763, %v1762
      %1796 = vmatpush.bf16.msra.mxu0 %v1771
      %1797 = vmatpush.bf16.msra.mxu0 %v1770
      %1798 = vmatpush.bf16.msra.mxu0 %v1769
      %1799 = vmatpush.bf16.msra.mxu0 %v1768
      %1800 = vmatpush.bf16.msra.mxu0 %v1767
      %1801 = vmatpush.bf16.msra.mxu0 %v1766
      %1802 = vmatpush.bf16.msra.mxu0 %v1765
      %1803 = vmatpush.bf16.msra.mxu0 %v1764
      %1804 = vmatmul.bf16.gmra.mxu0 %v1651
      %v1805 = vpop.f32.mrf.mxu0
      %v1806 = vadd.f32 0.0, %v1805
      %v1807 = vpop.f32.mrf.mxu0
      %v1808 = vadd.f32 0.0, %v1807
      %1809 = vmatmul.bf16.gmra.mxu0 %v1652
      %v1810 = vpop.f32.mrf.mxu0
      %v1811 = vadd.f32 0.0, %v1810
      %v1812 = vpop.f32.mrf.mxu0
      %v1813 = vadd.f32 0.0, %v1812
      %1814 = vmatmul.bf16.gmra.mxu0 %v1653
      %v1815 = vpop.f32.mrf.mxu0
      %v1816 = vadd.f32 0.0, %v1815
      %v1817 = vpop.f32.mrf.mxu0
      %v1818 = vadd.f32 0.0, %v1817
      %1819 = vmatmul.bf16.gmra.mxu0 %v1654
      %v1820 = vpop.f32.mrf.mxu0
      %v1821 = vadd.f32 0.0, %v1820
      %v1822 = vpop.f32.mrf.mxu0
      %v1823 = vadd.f32 0.0, %v1822
      %1824 = vdwg.mxu0
      %1825 = vmatpush.bf16.msra.mxu0 %v1779
      %1826 = vmatpush.bf16.msra.mxu0 %v1778
      %1827 = vmatpush.bf16.msra.mxu0 %v1777
      %1828 = vmatpush.bf16.msra.mxu0 %v1776
      %1829 = vmatpush.bf16.msra.mxu0 %v1775
      %1830 = vmatpush.bf16.msra.mxu0 %v1774
      %1831 = vmatpush.bf16.msra.mxu0 %v1773
      %1832 = vmatpush.bf16.msra.mxu0 %v1772
      %1833 = vmatmul.bf16.gmra.mxu0 %v1651
      %v1834 = vpop.f32.mrf.mxu0
      %v1835 = vadd.f32 %v1806, %v1834
      %v1836 = vpop.f32.mrf.mxu0
      %v1837 = vadd.f32 %v1808, %v1836
      %1838 = vmatmul.bf16.gmra.mxu0 %v1652
      %v1839 = vpop.f32.mrf.mxu0
      %v1840 = vadd.f32 %v1811, %v1839
      %v1841 = vpop.f32.mrf.mxu0
      %v1842 = vadd.f32 %v1813, %v1841
      %1843 = vmatmul.bf16.gmra.mxu0 %v1653
      %v1844 = vpop.f32.mrf.mxu0
      %v1845 = vadd.f32 %v1816, %v1844
      %v1846 = vpop.f32.mrf.mxu0
      %v1847 = vadd.f32 %v1818, %v1846
      %1848 = vmatmul.bf16.gmra.mxu0 %v1654
      %v1849 = vpop.f32.mrf.mxu0
      %v1850 = vadd.f32 %v1821, %v1849
      %v1851 = vpop.f32.mrf.mxu0
      %v1852 = vadd.f32 %v1823, %v1851
      %1853 = vdwg.mxu0
      %v1854 = vadd.f32 %v1659, %v1835
      %v1855 = vadd.f32 %v1660, %v1837
      %v1856 = vadd.f32 %v1661, %v1840
      %v1857 = vadd.f32 %v1662, %v1842
      %v1858 = vadd.f32 %v1663, %v1845
      %v1859 = vadd.f32 %v1664, %v1847
      %v1860 = vadd.f32 %v1665, %v1850
      %v1861 = vadd.f32 %v1666, %v1852
      %1862 = vst [vmem:[#allocation2] sm:$0xff] %v1854
      %1863 = vst [vmem:[#allocation2 + $0x8] sm:$0xff] %v1855
      %1864 = vst [vmem:[#allocation2 + $0x10] sm:$0xff] %v1856
      %1865 = vst [vmem:[#allocation2 + $0x18] sm:$0xff] %v1857
      %1866 = vst [vmem:[#allocation2 + $0x20] sm:$0xff] %v1858
      %1867 = vst [vmem:[#allocation2 + $0x28] sm:$0xff] %v1859
      %1868 = vst [vmem:[#allocation2 + $0x30] sm:$0xff] %v1860
      %1869 = vst [vmem:[#allocation2 + $0x38] sm:$0xff] %v1861
      %v1870 = vld [vmem:[#allocation2] sm:$0xff]
      %v1871 = vld [vmem:[#allocation2 + $0x8] sm:$0xff]
      %v1872 = vld [vmem:[#allocation2 + $0x10] sm:$0xff]
      %v1873 = vld [vmem:[#allocation2 + $0x18] sm:$0xff]
      %v1874 = vld [vmem:[#allocation2 + $0x20] sm:$0xff]
      %v1875 = vld [vmem:[#allocation2 + $0x28] sm:$0xff]
      %v1876 = vld [vmem:[#allocation2 + $0x30] sm:$0xff]
      %v1877 = vld [vmem:[#allocation2 + $0x38] sm:$0xff]
      %v1878 = vld [vmem:[%s2] sm:$0x1]
      %v1880 = vperm.slane %v1878, 0
      %v1882 = vadd.f32 %v1870, %v1880
      %v1883 = vadd.f32 %v1871, %v1880
      %v1884 = vadd.f32 %v1872, %v1880
      %v1885 = vadd.f32 %v1873, %v1880
      %v1886 = vadd.f32 %v1874, %v1880
      %v1887 = vadd.f32 %v1875, %v1880
      %v1888 = vadd.f32 %v1876, %v1880
      %v1889 = vadd.f32 %v1877, %v1880
      %v1890 = vmax.f32 %v1882, 0.0
      %v1891 = vmax.f32 %v1883, 0.0
      %v1892 = vmax.f32 %v1884, 0.0
      %v1893 = vmax.f32 %v1885, 0.0
      %v1894 = vmax.f32 %v1886, 0.0
      %v1895 = vmax.f32 %v1887, 0.0
      %v1896 = vmax.f32 %v1888, 0.0
      %v1897 = vmax.f32 %v1889, 0.0
      %v1898 = vpack.c.bf16 %v1890, %v1890
      %v1899 = vpack.c.bf16 %v1891, %v1891
      %v1900 = vpack.c.bf16 %v1892, %v1892
      %v1901 = vpack.c.bf16 %v1893, %v1893
      %v1902 = vpack.c.bf16 %v1894, %v1894
      %v1903 = vpack.c.bf16 %v1895, %v1895
      %v1904 = vpack.c.bf16 %v1896, %v1896
      %v1905 = vpack.c.bf16 %v1897, %v1897
      %1906 = vst [vmem:[%s175] sm:$0xf] %v1898
      %1907 = vst [vmem:[%s175 + $0x4] sm:$0xf] %v1899
      %1908 = vst [vmem:[%s175 + $0x8] sm:$0xf] %v1900
      %1909 = vst [vmem:[%s175 + $0xc] sm:$0xf] %v1901
      %1910 = vst [vmem:[%s175 + $0x10] sm:$0xf] %v1902
      %1911 = vst [vmem:[%s175 + $0x14] sm:$0xf] %v1903
      %1912 = vst [vmem:[%s175 + $0x18] sm:$0xf] %v1904
      %1913 = vst [vmem:[%s175 + $0x1c] sm:$0xf] %v1905
      %p1914 = scmp.lt.s32.totalorder %s14, 1
      %s1915 = scalar_select %p1914, %s14, 1
      %s1916 = smul.addr %s1915, 8
      %s1917 = smul.addr %s1916, 4
      %s1918 = scalar_lea.vmem %s3, %s1917
      // Predicated region
      $region33: #{forward.6} parent=31 // pred_check
        %p1919 = pneg %p100
      $region34: #{forward.6} parent=31 // pred_check_branch
        %1921 = sbr.rel (%p1919) target = $region36
      $region35: #{forward.6} parent=31 // pred_region
        _
      $region36: #{forward.6} parent=31 // pred_fallthru
        _
    $region32: #{forward.6} parent=5 // pred_fallthru
      _
    %p1922 = scmp.le.s32.totalorder 2, %s9
    // Predicated region
    $region37: #{forward.6} parent=5 // pred_check
      %p1923 = pneg %p1922
    $region38: #{forward.6} parent=5 // pred_check_branch
      %1925 = sbr.rel (%p1923) target = $region40
    $region39: #{forward.6} parent=5 // pred_region
      %s1926 = ssub.s32 %s9, 2
      // Predicated region
      $region41: #{forward.6} parent=39 // pred_check
        %p1927 = pneg %p106
      $region42: #{forward.6} parent=39 // pred_check_branch
        %1929 = sbr.rel (%p1927) target = $region44
      $region43: #{forward.6} parent=39 // pred_region
        %p1930 = scmp.lt.s32.totalorder %s15, 1
        %s1931 = scalar_select %p1930, %s15, 1
        %s1932 = smul.addr %s1931, 8
        %s1933 = smul.addr %s1932, 4
        %s1934 = scalar_lea.vmem %s3, %s1933
      $region44: #{forward.6} parent=39 // pred_fallthru
        _
    $region40: #{forward.6} parent=5 // pred_fallthru
      _
  $region6: #{forward.6} parent=0 // loop_footer
    %s13 = sadd.s32 1, %s9
  $region7: #{forward.6} parent=0 // loop_footer_branch
    %8 = sbr.rel target = $region3
  $region8: #{forward.6} parent=0 // loop_exit
    _

// kernel: sub.24
$region0: #{sub.24}
  %s0 = inlined_call_operand.vmem [shape: f32[8,8], index: 0, kind: input, shape index: {}]
  %s1 = inlined_call_operand.vmem [shape: f32[64], index: 1, kind: output, shape index: {}]
  $region1: #{sub.24} parent=0
    #allocation0 [shape = 'u8[4096]{0}', space=vmem, size = 0x1000, scoped, tag = 'scoped mem for output reshape']
    %v2 = vld [vmem:[%s0] sm:$0x1]
    %vm3 = vcmask 64512
    %4 = vst.msk [vmem:[#allocation0] sm:$0x1] %vm3, %v2
    %s5 = scalar_lea.vmem %s0, 7
    %v6 = vld [vmem:[%s5] sm:$0x1]
    %7 = vrot.lane.b32.xlu0 %v6, 56
    %v8 = vpop.permute.xlu0 %7
    %vm9 = vcmask 523712
    %10 = vst.msk [vmem:[#allocation0] sm:$0x1] %vm9, %v8
    %s11 = scalar_lea.vmem %s0, 6
    %v12 = vld [vmem:[%s11] sm:$0x1]
    %13 = vrot.lane.b32.xlu0 %v12, 48
    %v14 = vpop.permute.xlu0 %13
    %vm15 = vcmask 458112
    %16 = vst.msk [vmem:[#allocation0] sm:$0x1] %vm15, %v14
    %s17 = scalar_lea.vmem %s0, 5
    %v18 = vld [vmem:[%s17] sm:$0x1]
    %19 = vrot.lane.b32.xlu0 %v18, 40
    %v20 = vpop.permute.xlu0 %19
    %vm21 = vcmask 392512
    %22 = vst.msk [vmem:[#allocation0] sm:$0x1] %vm21, %v20
    %s23 = scalar_lea.vmem %s0, 4
    %v24 = vld [vmem:[%s23] sm:$0x1]
    %25 = vrot.lane.b32.xlu0 %v24, 32
    %v26 = vpop.permute.xlu0 %25
    %vm27 = vcmask 326912
    %28 = vst.msk [vmem:[#allocation0] sm:$0x1] %vm27, %v26
    %s29 = scalar_lea.vmem %s0, 3
    %v30 = vld [vmem:[%s29] sm:$0x1]
    %31 = vrot.lane.b32.xlu0 %v30, 24
    %v32 = vpop.permute.xlu0 %31
    %vm33 = vcmask 261312
    %34 = vst.msk [vmem:[#allocation0] sm:$0x1] %vm33, %v32
    %s35 = scalar_lea.vmem %s0, 2
    %v36 = vld [vmem:[%s35] sm:$0x1]
    %37 = vrot.lane.b32.xlu0 %v36, 16
    %v38 = vpop.permute.xlu0 %37
    %vm39 = vcmask 195712
    %40 = vst.msk [vmem:[#allocation0] sm:$0x1] %vm39, %v38
    %s41 = scalar_lea.vmem %s0, 1
    %v42 = vld [vmem:[%s41] sm:$0x1]
    %43 = vrot.lane.b32.xlu0 %v42, 8
    %v44 = vpop.permute.xlu0 %43
    %vm45 = vcmask 130112
    %46 = vst.msk [vmem:[#allocation0] sm:$0x1] %vm45, %v44
    %s48 = ssub.s32 2, 1
    %v49 = vld [vmem:[#allocation0] sm:%s48]
    %s51 = ssub.s32 2, 1
    %52 = vst [vmem:[%s1] sm:%s51] %v49

// kernel: forward.7
$region0: #{forward.7}
  #allocation0 [shape = 'u32[]', space=smem, size = 0x4, offset = 0x4, fixed_abs, tag = 'smem constant byte address 0x4 - core index']
  #allocation1 [shape = 'u32[72,128]{1,0:T(1,128)}', space=vmem, size = 0x9000, scoped, tag = 'internal scratch']
  #allocation2 [shape = 'f32[64,128]{1,0:T(8,128)}', space=vmem, size = 0x8000, scoped, tag = 'scratch operand']
  %s0 = inlined_call_operand.vmem [shape: bf16[2,10,10,128], index: 0, kind: input, shape index: {}]
  %s1 = inlined_call_operand.vmem [shape: bf16[5,256,128], index: 1, kind: input, shape index: {}]
  %s2 = inlined_call_operand.vmem [shape: f32[1,128], index: 2, kind: input, shape index: {}]
  %s3 = inlined_call_operand.vmem [shape: bf16[128,128], index: 3, kind: input, shape index: {}]
  %s4 = inlined_call_operand.vmem [shape: f32[1,128], index: 4, kind: input, shape index: {}]
  %s5 = inlined_call_operand.vmem [shape: f32[2,64,128], index: 5, kind: output, shape index: {}]
  %s6 = sld [smem:[#allocation0]]
  $region53: #{forward.7} parent=0
    _
  %s8 = ssub.s32 1, %s6
  %s9 = scalar_select 0, %s8, %s6
  loop: start=0, step=1, limit=4
  $region2: #{forward.7} parent=0 // loop_pre_header
    _
  $region3: #{forward.7} parent=0 // loop_header
    %s11 = sphi 0, %s15
    %p12 = scmp.ge.s32.totalorder %s11, 4
    %s21 = sphi 0, %s23
    %s24 = sphi 0, %s21
    %s25 = sphi 0, %s24
    %s41 = sphi 0, %s25
    %s45 = sphi 0, %s45
    %s47 = sphi 0, %s45
    %s48 = sphi 0, %s47
    %s62 = sphi 0, %s48
    %s66 = sphi 0, %s66
    %s68 = sphi 0, %s66
    %s69 = sphi 0, %s68
    %s83 = sphi 0, %s69
    %s87 = sphi 0, %s87
    %s89 = sphi 0, %s87
    %s90 = sphi 0, %s89
    %s104 = sphi 0, %s90
    %s108 = sphi 0, %s108
    %s110 = sphi 0, %s108
    %s111 = sphi 0, %s110
    %s125 = sphi 0, %s111
    %s131 = sphi 0, %s133
    %s134 = sphi 0, %s131
    %s135 = sphi 0, %s134
    %s151 = sphi 0, %s135
  $region4: #{forward.7} parent=0 // loop_header_branch
    %14 = sbr.rel (%p12) target = $region8
  $region5: #{forward.7} parent=0 // loop_body
    %s16 = ssub.s32 %s11, 1
    %s17 = ssub.s32 %s11, 2
    %s18 = sadd.s32 %s11, 1
    %s19 = ssub.s32 %s11, %s18
    %p20 = scmp.eq.s32.totalorder %s19, 0
    %s22 = sadd.s32 %s21, 1
    %s23 = scalar_select %p20, %s21, %s22
    %p26 = pneg %p20
    %p27 = scmp.eq.s32.totalorder %s11, 1
    %p28 = por %p26, %p27
    %p29 = scmp.ne.s32.totalorder %s21, %s24
    %p30 = scmp.eq.s32.totalorder %s11, 0
    %p31 = por %p29, %p30
    %p32 = scmp.ne.s32.totalorder %s21, %s24
    %p33 = scmp.eq.s32.totalorder %s16, 1
    %p34 = por %p32, %p33
    %p35 = scmp.ne.s32.totalorder %s24, %s25
    %p36 = scmp.eq.s32.totalorder %s16, 0
    %p37 = por %p35, %p36
    %p38 = scmp.ne.s32.totalorder %s24, %s25
    %p39 = scmp.eq.s32.totalorder %s17, 1
    %p40 = por %p38, %p39
    %p42 = scmp.ne.s32.totalorder %s25, %s41
    %p43 = scmp.eq.s32.totalorder %s17, 0
    %p44 = por %p42, %p43
    %s46 = sadd.s32 %s45, 1
    %p49 = scmp.eq.s32.totalorder %s11, 1
    %p50 = scmp.ne.s32.totalorder %s45, %s47
    %p51 = scmp.eq.s32.totalorder %s11, 0
    %p52 = por %p50, %p51
    %p53 = scmp.ne.s32.totalorder %s45, %s47
    %p54 = scmp.eq.s32.totalorder %s16, 1
    %p55 = por %p53, %p54
    %p56 = scmp.ne.s32.totalorder %s47, %s48
    %p57 = scmp.eq.s32.totalorder %s16, 0
    %p58 = por %p56, %p57
    %p59 = scmp.ne.s32.totalorder %s47, %s48
    %p60 = scmp.eq.s32.totalorder %s17, 1
    %p61 = por %p59, %p60
    %p63 = scmp.ne.s32.totalorder %s48, %s62
    %p64 = scmp.eq.s32.totalorder %s17, 0
    %p65 = por %p63, %p64
    %s67 = sadd.s32 %s66, 1
    %p70 = scmp.eq.s32.totalorder %s11, 1
    %p71 = scmp.ne.s32.totalorder %s66, %s68
    %p72 = scmp.eq.s32.totalorder %s11, 0
    %p73 = por %p71, %p72
    %p74 = scmp.ne.s32.totalorder %s66, %s68
    %p75 = scmp.eq.s32.totalorder %s16, 1
    %p76 = por %p74, %p75
    %p77 = scmp.ne.s32.totalorder %s68, %s69
    %p78 = scmp.eq.s32.totalorder %s16, 0
    %p79 = por %p77, %p78
    %p80 = scmp.ne.s32.totalorder %s68, %s69
    %p81 = scmp.eq.s32.totalorder %s17, 1
    %p82 = por %p80, %p81
    %p84 = scmp.ne.s32.totalorder %s69, %s83
    %p85 = scmp.eq.s32.totalorder %s17, 0
    %p86 = por %p84, %p85
    %s88 = sadd.s32 %s87, 1
    %p91 = scmp.eq.s32.totalorder %s11, 1
    %p92 = scmp.ne.s32.totalorder %s87, %s89
    %p93 = scmp.eq.s32.totalorder %s11, 0
    %p94 = por %p92, %p93
    %p95 = scmp.ne.s32.totalorder %s87, %s89
    %p96 = scmp.eq.s32.totalorder %s16, 1
    %p97 = por %p95, %p96
    %p98 = scmp.ne.s32.totalorder %s89, %s90
    %p99 = scmp.eq.s32.totalorder %s16, 0
    %p100 = por %p98, %p99
    %p101 = scmp.ne.s32.totalorder %s89, %s90
    %p102 = scmp.eq.s32.totalorder %s17, 1
    %p103 = por %p101, %p102
    %p105 = scmp.ne.s32.totalorder %s90, %s104
    %p106 = scmp.eq.s32.totalorder %s17, 0
    %p107 = por %p105, %p106
    %s109 = sadd.s32 %s108, 1
    %p112 = scmp.eq.s32.totalorder %s11, 1
    %p113 = scmp.ne.s32.totalorder %s108, %s110
    %p114 = scmp.eq.s32.totalorder %s11, 0
    %p115 = por %p113, %p114
    %p116 = scmp.ne.s32.totalorder %s108, %s110
    %p117 = scmp.eq.s32.totalorder %s16, 1
    %p118 = por %p116, %p117
    %p119 = scmp.ne.s32.totalorder %s110, %s111
    %p120 = scmp.eq.s32.totalorder %s16, 0
    %p121 = por %p119, %p120
    %p122 = scmp.ne.s32.totalorder %s110, %s111
    %p123 = scmp.eq.s32.totalorder %s17, 1
    %p124 = por %p122, %p123
    %p126 = scmp.ne.s32.totalorder %s111, %s125
    %p127 = scmp.eq.s32.totalorder %s17, 0
    %p128 = por %p126, %p127
    %s129 = ssub.s32 %s11, %s18
    %p130 = scmp.eq.s32.totalorder %s129, 0
    %s132 = sadd.s32 %s131, 1
    %s133 = scalar_select %p130, %s131, %s132
    %p136 = pneg %p130
    %p137 = scmp.eq.s32.totalorder %s11, 1
    %p138 = por %p136, %p137
    %p139 = scmp.ne.s32.totalorder %s131, %s134
    %p140 = scmp.eq.s32.totalorder %s11, 0
    %p141 = por %p139, %p140
    %p142 = scmp.ne.s32.totalorder %s131, %s134
    %p143 = scmp.eq.s32.totalorder %s16, 1
    %p144 = por %p142, %p143
    %p145 = scmp.ne.s32.totalorder %s134, %s135
    %p146 = scmp.eq.s32.totalorder %s16, 0
    %p147 = por %p145, %p146
    %p148 = scmp.ne.s32.totalorder %s134, %s135
    %p149 = scmp.eq.s32.totalorder %s17, 1
    %p150 = por %p148, %p149
    %p152 = scmp.ne.s32.totalorder %s135, %s151
    %p153 = scmp.eq.s32.totalorder %s17, 0
    %p154 = por %p152, %p153
    %p155 = scmp.le.s32.totalorder 1, %s11
    %p156 = scmp.lt.s32.totalorder %s11, 3
    %p157 = pnand %p155, %p156
    %p158 = pneg %p157
    // Predicated region
    $region9: #{forward.7} parent=5 // pred_check
      _
    $region10: #{forward.7} parent=5 // pred_check_branch
      %160 = sbr.rel (%p157) target = $region12
    $region11: #{forward.7} parent=5 // pred_region
      %s161 = ssub.s32 %s11, 1
      // Predicated region
      $region13: #{forward.7} parent=11 // pred_check
        %p162 = pneg %p58
      $region14: #{forward.7} parent=11 // pred_check_branch
        %164 = sbr.rel (%p162) target = $region16
      $region15: #{forward.7} parent=11 // pred_region
        _
      $region16: #{forward.7} parent=11 // pred_fallthru
        _
      // Predicated region
      $region17: #{forward.7} parent=11 // pred_check
        %p165 = pneg %p79
      $region18: #{forward.7} parent=11 // pred_check_branch
        %167 = sbr.rel (%p165) target = $region20
      $region19: #{forward.7} parent=11 // pred_region
        _
      $region20: #{forward.7} parent=11 // pred_fallthru
        _
      // Predicated region
      $region21: #{forward.7} parent=11 // pred_check
        %p168 = pneg %p100
      $region22: #{forward.7} parent=11 // pred_check_branch
        %170 = sbr.rel (%p168) target = $region24
      $region23: #{forward.7} parent=11 // pred_region
        _
      $region24: #{forward.7} parent=11 // pred_fallthru
        _
      // Predicated region
      $region25: #{forward.7} parent=11 // pred_check
        %p171 = pneg %p121
      $region26: #{forward.7} parent=11 // pred_check_branch
        %173 = sbr.rel (%p171) target = $region28
      $region27: #{forward.7} parent=11 // pred_region
        _
      $region28: #{forward.7} parent=11 // pred_fallthru
        _
    $region12: #{forward.7} parent=5 // pred_fallthru
      _
    %p174 = scmp.lt.s32.totalorder %s11, 2
    // Predicated region
    $region29: #{forward.7} parent=5 // pred_check
      %p175 = pneg %p174
    $region30: #{forward.7} parent=5 // pred_check_branch
      %177 = sbr.rel (%p175) target = $region32
    $region31: #{forward.7} parent=5 // pred_region
      // Predicated region
      $region33: #{forward.7} parent=31 // pred_check
        %p178 = pneg %p31
      $region34: #{forward.7} parent=31 // pred_check_branch
        %180 = sbr.rel (%p178) target = $region36
      $region35: #{forward.7} parent=31 // pred_region
        %p181 = scmp.lt.s32.totalorder %s11, 1
        %s182 = scalar_select %p181, %s11, 1
        %s183 = smul.addr %s182, 20
        %s184 = smul.addr %s183, 4
        %s185 = scalar_lea.vmem %s0, %s184
      $region36: #{forward.7} parent=31 // pred_fallthru
        _
    $region32: #{forward.7} parent=5 // pred_fallthru
      _
    %p186 = scmp.le.s32.totalorder 1, %s11
    %p187 = scmp.lt.s32.totalorder %s11, 3
    %p188 = pnand %p186, %p187
    %p189 = pneg %p188
    // Predicated region
    $region37: #{forward.7} parent=5 // pred_check
      _
    $region38: #{forward.7} parent=5 // pred_check_branch
      %191 = sbr.rel (%p188) target = $region40
    $region39: #{forward.7} parent=5 // pred_region
      %s192 = ssub.s32 %s11, 1
      %p193 = scmp.lt.s32.totalorder %s16, 1
      %s194 = scalar_select %p193, %s16, 1
      %s195 = smul.addr %s194, 20
      %s196 = smul.addr %s195, 4
      %s197 = scalar_lea.vmem %s0, %s196
      %p198 = pneg %p37
      %p199 = pneg %p34
      %p200 = pneg %p58
      %p201 = pneg %p55
      %p202 = pneg %p79
      %p203 = pneg %p76
      %p204 = pneg %p100
      %p205 = pneg %p97
      %p206 = pneg %p121
      %p207 = pneg %p118
      %p208 = pneg %p147
      %p209 = pneg %p144
      %p210 = scmp.lt.s32.totalorder %s16, 1
      %s211 = scalar_select %p210, %s16, 1
      %s212 = smul.addr %s211, 8
      %s213 = smul.addr %s212, 8
      %s214 = scalar_lea.vmem %s5, %s213
      %p215 = scmp.lt.s32.totalorder %s16, 1
      %s216 = scalar_select %p215, %s16, 1
      %s217 = smul.addr %s216, 20
      %s218 = smul.addr %s217, 4
      %s219 = scalar_lea.vmem %s0, %s218
      %p220 = scmp.lt.s32.totalorder %s16, 1
      %s221 = scalar_select %p220, %s16, 1
      %s222 = smul.addr %s221, 8
      %s223 = smul.addr %s222, 8
      %s224 = scalar_lea.vmem %s5, %s223
      %225 = vst [vmem:[#allocation2] sm:$0xff] 0.0
      %226 = vst [vmem:[#allocation2 + $0x8] sm:$0xff] 0.0
      %227 = vst [vmem:[#allocation2 + $0x10] sm:$0xff] 0.0
      %228 = vst [vmem:[#allocation2 + $0x18] sm:$0xff] 0.0
      %229 = vst [vmem:[#allocation2 + $0x20] sm:$0xff] 0.0
      %230 = vst [vmem:[#allocation2 + $0x28] sm:$0xff] 0.0
      %231 = vst [vmem:[#allocation2 + $0x30] sm:$0xff] 0.0
      %232 = vst [vmem:[#allocation2 + $0x38] sm:$0xff] 0.0
      %v233 = vld [vmem:[%s219] sm:$0xf]
      %v234 = vld [vmem:[%s219 + $0x8] sm:$0xf]
      %v235 = vld [vmem:[%s219 + $0x10] sm:$0xf]
      %v236 = vld [vmem:[%s219 + $0x18] sm:$0xf]
      %v237 = vld [vmem:[%s219 + $0x20] sm:$0xf]
      %v238 = vld [vmem:[%s219 + $0x28] sm:$0xf]
      %v239 = vld [vmem:[%s219 + $0x30] sm:$0xf]
      %v240 = vld [vmem:[%s219 + $0x38] sm:$0xf]
      %v241 = vld [vmem:[%s219 + $0x4] sm:$0x1]
      %v242 = vld [vmem:[%s219 + $0xc] sm:$0x1]
      %v243 = vld [vmem:[%s219 + $0x14] sm:$0x1]
      %v244 = vld [vmem:[%s219 + $0x1c] sm:$0x1]
      %v245 = vld [vmem:[%s219 + $0x24] sm:$0x1]
      %v246 = vld [vmem:[%s219 + $0x2c] sm:$0x1]
      %v247 = vld [vmem:[%s219 + $0x34] sm:$0x1]
      %v248 = vld [vmem:[%s219 + $0x3c] sm:$0x1]
      %vm249 = vsmask.f32 3328
      %vm250 = vsmask.f32 7440
      %vm251 = vmor %vm249, %vm250
      %v253 = vshrl.u32 %v233, 16
      %v255 = vrot.slane %v253, 4
      %v256 = vshll.u32 %v233, 16
      %v258 = vrot.slane %v256, 5
      %v259 = vor.u32 %v255, %v258
      %v260 = vrot.slane %v259, 4
      %v262 = vshll.u32 %v241, 16
      %v264 = vrot.slane %v262, 5
      %v265 = vsel %vm251, %v260, %v264
      %v267 = vshrl.u32 %v234, 16
      %v269 = vrot.slane %v267, 4
      %v270 = vshll.u32 %v234, 16
      %v272 = vrot.slane %v270, 5
      %v273 = vor.u32 %v269, %v272
      %v274 = vrot.slane %v273, 4
      %v276 = vshll.u32 %v242, 16
      %v278 = vrot.slane %v276, 5
      %v279 = vsel %vm251, %v274, %v278
      %v281 = vshrl.u32 %v235, 16
      %v283 = vrot.slane %v281, 4
      %v284 = vshll.u32 %v235, 16
      %v286 = vrot.slane %v284, 5
      %v287 = vor.u32 %v283, %v286
      %v288 = vrot.slane %v287, 4
      %v290 = vshll.u32 %v243, 16
      %v292 = vrot.slane %v290, 5
      %v293 = vsel %vm251, %v288, %v292
      %v295 = vshrl.u32 %v236, 16
      %v297 = vrot.slane %v295, 4
      %v298 = vshll.u32 %v236, 16
      %v300 = vrot.slane %v298, 5
      %v301 = vor.u32 %v297, %v300
      %v302 = vrot.slane %v301, 4
      %v304 = vshll.u32 %v244, 16
      %v306 = vrot.slane %v304, 5
      %v307 = vsel %vm251, %v302, %v306
      %v309 = vshrl.u32 %v237, 16
      %v311 = vrot.slane %v309, 4
      %v312 = vshll.u32 %v237, 16
      %v314 = vrot.slane %v312, 5
      %v315 = vor.u32 %v311, %v314
      %v316 = vrot.slane %v315, 4
      %v318 = vshll.u32 %v245, 16
      %v320 = vrot.slane %v318, 5
      %v321 = vsel %vm251, %v316, %v320
      %v323 = vshrl.u32 %v238, 16
      %v325 = vrot.slane %v323, 4
      %v326 = vshll.u32 %v238, 16
      %v328 = vrot.slane %v326, 5
      %v329 = vor.u32 %v325, %v328
      %v330 = vrot.slane %v329, 4
      %v332 = vshll.u32 %v246, 16
      %v334 = vrot.slane %v332, 5
      %v335 = vsel %vm251, %v330, %v334
      %v337 = vshrl.u32 %v239, 16
      %v339 = vrot.slane %v337, 4
      %v340 = vshll.u32 %v239, 16
      %v342 = vrot.slane %v340, 5
      %v343 = vor.u32 %v339, %v342
      %v344 = vrot.slane %v343, 4
      %v346 = vshll.u32 %v247, 16
      %v348 = vrot.slane %v346, 5
      %v349 = vsel %vm251, %v344, %v348
      %v351 = vshrl.u32 %v240, 16
      %v353 = vrot.slane %v351, 4
      %v354 = vshll.u32 %v240, 16
      %v356 = vrot.slane %v354, 5
      %v357 = vor.u32 %v353, %v356
      %v358 = vrot.slane %v357, 4
      %v360 = vshll.u32 %v248, 16
      %v362 = vrot.slane %v360, 5
      %v363 = vsel %vm251, %v358, %v362
      %v372 = vunpack.c.l.b16 %v233
      %v373 = vunpack.c.l.b16 %v234
      %v374 = vunpack.c.l.b16 %v235
      %v375 = vunpack.c.l.b16 %v236
      %v376 = vunpack.c.l.b16 %v237
      %v377 = vunpack.c.l.b16 %v238
      %v378 = vunpack.c.l.b16 %v239
      %v379 = vunpack.c.l.b16 %v240
      %v380 = vpack.c.b16 %v373, %v372
      %v381 = vpack.c.b16 %v375, %v374
      %v382 = vpack.c.b16 %v377, %v376
      %v383 = vpack.c.b16 %v379, %v378
      %v388 = vunpack.c.l.b16 %v265
      %v389 = vunpack.c.l.b16 %v279
      %v390 = vunpack.c.l.b16 %v293
      %v391 = vunpack.c.l.b16 %v307
      %v392 = vunpack.c.l.b16 %v321
      %v393 = vunpack.c.l.b16 %v335
      %v394 = vunpack.c.l.b16 %v349
      %v395 = vunpack.c.l.b16 %v363
      %v396 = vpack.c.b16 %v389, %v388
      %v397 = vpack.c.b16 %v391, %v390
      %v398 = vpack.c.b16 %v393, %v392
      %v399 = vpack.c.b16 %v395, %v394
      %v404 = vld [vmem:[#allocation2] sm:$0xff]
      %v405 = vld [vmem:[#allocation2 + $0x8] sm:$0xff]
      %v406 = vld [vmem:[#allocation2 + $0x10] sm:$0xff]
      %v407 = vld [vmem:[#allocation2 + $0x18] sm:$0xff]
      %v408 = vld [vmem:[#allocation2 + $0x20] sm:$0xff]
      %v409 = vld [vmem:[#allocation2 + $0x28] sm:$0xff]
      %v410 = vld [vmem:[#allocation2 + $0x30] sm:$0xff]
      %v411 = vld [vmem:[#allocation2 + $0x38] sm:$0xff]
      %v412 = vld [vmem:[%s1] sm:$0xf]
      %v413 = vld [vmem:[%s1 + $0x4] sm:$0xf]
      %v414 = vld [vmem:[%s1 + $0x8] sm:$0xf]
      %v415 = vld [vmem:[%s1 + $0xc] sm:$0xf]
      %v416 = vld [vmem:[%s1 + $0x10] sm:$0xf]
      %v417 = vld [vmem:[%s1 + $0x14] sm:$0xf]
      %v418 = vld [vmem:[%s1 + $0x18] sm:$0xf]
      %v419 = vld [vmem:[%s1 + $0x1c] sm:$0xf]
      %v420 = vld [vmem:[%s1 + $0x20] sm:$0xf]
      %v421 = vld [vmem:[%s1 + $0x24] sm:$0xf]
      %v422 = vld [vmem:[%s1 + $0x28] sm:$0xf]
      %v423 = vld [vmem:[%s1 + $0x2c] sm:$0xf]
      %v424 = vld [vmem:[%s1 + $0x30] sm:$0xf]
      %v425 = vld [vmem:[%s1 + $0x34] sm:$0xf]
      %v426 = vld [vmem:[%s1 + $0x38] sm:$0xf]
      %v427 = vld [vmem:[%s1 + $0x3c] sm:$0xf]
      %v428 = vld [vmem:[%s1 + $0x40] sm:$0xf]
      %v429 = vld [vmem:[%s1 + $0x44] sm:$0xf]
      %v430 = vld [vmem:[%s1 + $0x48] sm:$0xf]
      %v431 = vld [vmem:[%s1 + $0x4c] sm:$0xf]
      %v432 = vld [vmem:[%s1 + $0x50] sm:$0xf]
      %v433 = vld [vmem:[%s1 + $0x54] sm:$0xf]
      %v434 = vld [vmem:[%s1 + $0x58] sm:$0xf]
      %v435 = vld [vmem:[%s1 + $0x5c] sm:$0xf]
      %v436 = vld [vmem:[%s1 + $0x60] sm:$0xf]
      %v437 = vld [vmem:[%s1 + $0x64] sm:$0xf]
      %v438 = vld [vmem:[%s1 + $0x68] sm:$0xf]
      %v439 = vld [vmem:[%s1 + $0x6c] sm:$0xf]
      %v440 = vld [vmem:[%s1 + $0x70] sm:$0xf]
      %v441 = vld [vmem:[%s1 + $0x74] sm:$0xf]
      %v442 = vld [vmem:[%s1 + $0x78] sm:$0xf]
      %v443 = vld [vmem:[%s1 + $0x7c] sm:$0xf]
      %v476 = vunpack.c.l.b16 %v412
      %v477 = vunpack.c.l.b16 %v413
      %v478 = vunpack.c.l.b16 %v414
      %v479 = vunpack.c.l.b16 %v415
      %v480 = vunpack.c.l.b16 %v416
      %v481 = vunpack.c.l.b16 %v417
      %v482 = vunpack.c.l.b16 %v418
      %v483 = vunpack.c.l.b16 %v419
      %v484 = vunpack.c.l.b16 %v420
      %v485 = vunpack.c.l.b16 %v421
      %v486 = vunpack.c.l.b16 %v422
      %v487 = vunpack.c.l.b16 %v423
      %v488 = vunpack.c.l.b16 %v424
      %v489 = vunpack.c.l.b16 %v425
      %v490 = vunpack.c.l.b16 %v426
      %v491 = vunpack.c.l.b16 %v427
      %v492 = vunpack.c.l.b16 %v428
      %v493 = vunpack.c.l.b16 %v429
      %v494 = vunpack.c.l.b16 %v430
      %v495 = vunpack.c.l.b16 %v431
      %v496 = vunpack.c.l.b16 %v432
      %v497 = vunpack.c.l.b16 %v433
      %v498 = vunpack.c.l.b16 %v434
      %v499 = vunpack.c.l.b16 %v435
      %v500 = vunpack.c.l.b16 %v436
      %v501 = vunpack.c.l.b16 %v437
      %v502 = vunpack.c.l.b16 %v438
      %v503 = vunpack.c.l.b16 %v439
      %v504 = vunpack.c.l.b16 %v440
      %v505 = vunpack.c.l.b16 %v441
      %v506 = vunpack.c.l.b16 %v442
      %v507 = vunpack.c.l.b16 %v443
      %v508 = vpack.c.b16 %v477, %v476
      %v509 = vpack.c.b16 %v479, %v478
      %v510 = vpack.c.b16 %v481, %v480
      %v511 = vpack.c.b16 %v483, %v482
      %v512 = vpack.c.b16 %v485, %v484
      %v513 = vpack.c.b16 %v487, %v486
      %v514 = vpack.c.b16 %v489, %v488
      %v515 = vpack.c.b16 %v491, %v490
      %v516 = vpack.c.b16 %v493, %v492
      %v517 = vpack.c.b16 %v495, %v494
      %v518 = vpack.c.b16 %v497, %v496
      %v519 = vpack.c.b16 %v499, %v498
      %v520 = vpack.c.b16 %v501, %v500
      %v521 = vpack.c.b16 %v503, %v502
      %v522 = vpack.c.b16 %v505, %v504
      %v523 = vpack.c.b16 %v507, %v506
      %540 = vmatpush.bf16.msra.mxu0 %v515
      %541 = vmatpush.bf16.msra.mxu0 %v514
      %542 = vmatpush.bf16.msra.mxu0 %v513
      %543 = vmatpush.bf16.msra.mxu0 %v512
      %544 = vmatpush.bf16.msra.mxu0 %v511
      %545 = vmatpush.bf16.msra.mxu0 %v510
      %546 = vmatpush.bf16.msra.mxu0 %v509
      %547 = vmatpush.bf16.msra.mxu0 %v508
      %548 = vmatmul.bf16.gmra.mxu0 %v380
      %v549 = vpop.f32.mrf.mxu0
      %v550 = vadd.f32 0.0, %v549
      %v551 = vpop.f32.mrf.mxu0
      %v552 = vadd.f32 0.0, %v551
      %553 = vmatmul.bf16.gmra.mxu0 %v381
      %v554 = vpop.f32.mrf.mxu0
      %v555 = vadd.f32 0.0, %v554
      %v556 = vpop.f32.mrf.mxu0
      %v557 = vadd.f32 0.0, %v556
      %558 = vmatmul.bf16.gmra.mxu0 %v382
      %v559 = vpop.f32.mrf.mxu0
      %v560 = vadd.f32 0.0, %v559
      %v561 = vpop.f32.mrf.mxu0
      %v562 = vadd.f32 0.0, %v561
      %563 = vmatmul.bf16.gmra.mxu0 %v383
      %v564 = vpop.f32.mrf.mxu0
      %v565 = vadd.f32 0.0, %v564
      %v566 = vpop.f32.mrf.mxu0
      %v567 = vadd.f32 0.0, %v566
      %568 = vdwg.mxu0
      %569 = vmatpush.bf16.msra.mxu0 %v523
      %570 = vmatpush.bf16.msra.mxu0 %v522
      %571 = vmatpush.bf16.msra.mxu0 %v521
      %572 = vmatpush.bf16.msra.mxu0 %v520
      %573 = vmatpush.bf16.msra.mxu0 %v519
      %574 = vmatpush.bf16.msra.mxu0 %v518
      %575 = vmatpush.bf16.msra.mxu0 %v517
      %576 = vmatpush.bf16.msra.mxu0 %v516
      %577 = vmatmul.bf16.gmra.mxu0 %v396
      %v578 = vpop.f32.mrf.mxu0
      %v579 = vadd.f32 %v550, %v578
      %v580 = vpop.f32.mrf.mxu0
      %v581 = vadd.f32 %v552, %v580
      %582 = vmatmul.bf16.gmra.mxu0 %v397
      %v583 = vpop.f32.mrf.mxu0
      %v584 = vadd.f32 %v555, %v583
      %v585 = vpop.f32.mrf.mxu0
      %v586 = vadd.f32 %v557, %v585
      %587 = vmatmul.bf16.gmra.mxu0 %v398
      %v588 = vpop.f32.mrf.mxu0
      %v589 = vadd.f32 %v560, %v588
      %v590 = vpop.f32.mrf.mxu0
      %v591 = vadd.f32 %v562, %v590
      %592 = vmatmul.bf16.gmra.mxu0 %v399
      %v593 = vpop.f32.mrf.mxu0
      %v594 = vadd.f32 %v565, %v593
      %v595 = vpop.f32.mrf.mxu0
      %v596 = vadd.f32 %v567, %v595
      %597 = vdwg.mxu0
      %v598 = vadd.f32 %v404, %v579
      %v599 = vadd.f32 %v405, %v581
      %v600 = vadd.f32 %v406, %v584
      %v601 = vadd.f32 %v407, %v586
      %v602 = vadd.f32 %v408, %v589
      %v603 = vadd.f32 %v409, %v591
      %v604 = vadd.f32 %v410, %v594
      %v605 = vadd.f32 %v411, %v596
      %606 = vst [vmem:[#allocation2] sm:$0xff] %v598
      %607 = vst [vmem:[#allocation2 + $0x8] sm:$0xff] %v599
      %608 = vst [vmem:[#allocation2 + $0x10] sm:$0xff] %v600
      %609 = vst [vmem:[#allocation2 + $0x18] sm:$0xff] %v601
      %610 = vst [vmem:[#allocation2 + $0x20] sm:$0xff] %v602
      %611 = vst [vmem:[#allocation2 + $0x28] sm:$0xff] %v603
      %612 = vst [vmem:[#allocation2 + $0x30] sm:$0xff] %v604
      %613 = vst [vmem:[#allocation2 + $0x38] sm:$0xff] %v605
      %v614 = vld [vmem:[%s219] sm:$0xe]
      %v615 = vld [vmem:[%s219 + $0x4] sm:$0x1]
      %v616 = vld [vmem:[%s219 + $0x8] sm:$0xe]
      %v617 = vld [vmem:[%s219 + $0xc] sm:$0x1]
      %v618 = vld [vmem:[%s219 + $0x10] sm:$0xe]
      %v619 = vld [vmem:[%s219 + $0x14] sm:$0x1]
      %v620 = vld [vmem:[%s219 + $0x18] sm:$0xe]
      %v621 = vld [vmem:[%s219 + $0x1c] sm:$0x1]
      %v622 = vld [vmem:[%s219 + $0x20] sm:$0xe]
      %v623 = vld [vmem:[%s219 + $0x24] sm:$0x1]
      %v624 = vld [vmem:[%s219 + $0x28] sm:$0xe]
      %v625 = vld [vmem:[%s219 + $0x2c] sm:$0x1]
      %v626 = vld [vmem:[%s219 + $0x30] sm:$0xe]
      %v627 = vld [vmem:[%s219 + $0x34] sm:$0x1]
      %v628 = vld [vmem:[%s219 + $0x38] sm:$0xe]
      %v629 = vld [vmem:[%s219 + $0x3c] sm:$0x1]
      %vm646 = vcmask 1042432
      %vm647 = vcmask 1046532
      %vm648 = vmor %vm646, %vm647
      %v649 = vrot.slane %v614, 5
      %v650 = vrot.slane %v649, 4
      %v651 = vrot.slane %v615, 5
      %v652 = vsel %vm648, %v650, %v651
      %v653 = vrot.slane %v616, 5
      %v654 = vrot.slane %v653, 4
      %v655 = vrot.slane %v617, 5
      %v656 = vsel %vm648, %v654, %v655
      %v657 = vrot.slane %v618, 5
      %v658 = vrot.slane %v657, 4
      %v659 = vrot.slane %v619, 5
      %v660 = vsel %vm648, %v658, %v659
      %v661 = vrot.slane %v620, 5
      %v662 = vrot.slane %v661, 4
      %v663 = vrot.slane %v621, 5
      %v664 = vsel %vm648, %v662, %v663
      %v665 = vrot.slane %v622, 5
      %v666 = vrot.slane %v665, 4
      %v667 = vrot.slane %v623, 5
      %v668 = vsel %vm648, %v666, %v667
      %v669 = vrot.slane %v624, 5
      %v670 = vrot.slane %v669, 4
      %v671 = vrot.slane %v625, 5
      %v672 = vsel %vm648, %v670, %v671
      %v673 = vrot.slane %v626, 5
      %v674 = vrot.slane %v673, 4
      %v675 = vrot.slane %v627, 5
      %v676 = vsel %vm648, %v674, %v675
      %v677 = vrot.slane %v628, 5
      %v678 = vrot.slane %v677, 4
      %v679 = vrot.slane %v629, 5
      %v680 = vsel %vm648, %v678, %v679
      %s681 = scalar_lea.vmem %s219, 8
      %v682 = vld [vmem:[%s681] sm:$0xf]
      %v683 = vld [vmem:[%s681 + $0x8] sm:$0xf]
      %v684 = vld [vmem:[%s681 + $0x10] sm:$0xf]
      %v685 = vld [vmem:[%s681 + $0x18] sm:$0xf]
      %v686 = vld [vmem:[%s681 + $0x20] sm:$0xf]
      %v687 = vld [vmem:[%s681 + $0x28] sm:$0xf]
      %v688 = vld [vmem:[%s681 + $0x30] sm:$0xf]
      %v689 = vld [vmem:[%s681 + $0x38] sm:$0xf]
      %v690 = vunpack.c.l.b16 %v652
      %v691 = vunpack.c.l.b16 %v656
      %v692 = vunpack.c.l.b16 %v660
      %v693 = vunpack.c.l.b16 %v664
      %v694 = vunpack.c.l.b16 %v668
      %v695 = vunpack.c.l.b16 %v672
      %v696 = vunpack.c.l.b16 %v676
      %v697 = vunpack.c.l.b16 %v680
      %v698 = vpack.c.b16 %v691, %v690
      %v699 = vpack.c.b16 %v693, %v692
      %v700 = vpack.c.b16 %v695, %v694
      %v701 = vpack.c.b16 %v697, %v696
      %v714 = vunpack.c.l.b16 %v682
      %v715 = vunpack.c.l.b16 %v683
      %v716 = vunpack.c.l.b16 %v684
      %v717 = vunpack.c.l.b16 %v685
      %v718 = vunpack.c.l.b16 %v686
      %v719 = vunpack.c.l.b16 %v687
      %v720 = vunpack.c.l.b16 %v688
      %v721 = vunpack.c.l.b16 %v689
      %v722 = vpack.c.b16 %v715, %v714
      %v723 = vpack.c.b16 %v717, %v716
      %v724 = vpack.c.b16 %v719, %v718
      %v725 = vpack.c.b16 %v721, %v720
      %v730 = vld [vmem:[#allocation2] sm:$0xff]
      %v731 = vld [vmem:[#allocation2 + $0x8] sm:$0xff]
      %v732 = vld [vmem:[#allocation2 + $0x10] sm:$0xff]
      %v733 = vld [vmem:[#allocation2 + $0x18] sm:$0xff]
      %v734 = vld [vmem:[#allocation2 + $0x20] sm:$0xff]
      %v735 = vld [vmem:[#allocation2 + $0x28] sm:$0xff]
      %v736 = vld [vmem:[#allocation2 + $0x30] sm:$0xff]
      %v737 = vld [vmem:[#allocation2 + $0x38] sm:$0xff]
      %s738 = scalar_lea.vmem %s1, 128
      %v739 = vld [vmem:[%s738] sm:$0xf]
      %v740 = vld [vmem:[%s738 + $0x4] sm:$0xf]
      %v741 = vld [vmem:[%s738 + $0x8] sm:$0xf]
      %v742 = vld [vmem:[%s738 + $0xc] sm:$0xf]
      %v743 = vld [vmem:[%s738 + $0x10] sm:$0xf]
      %v744 = vld [vmem:[%s738 + $0x14] sm:$0xf]
      %v745 = vld [vmem:[%s738 + $0x18] sm:$0xf]
      %v746 = vld [vmem:[%s738 + $0x1c] sm:$0xf]
      %v747 = vld [vmem:[%s738 + $0x20] sm:$0xf]
      %v748 = vld [vmem:[%s738 + $0x24] sm:$0xf]
      %v749 = vld [vmem:[%s738 + $0x28] sm:$0xf]
      %v750 = vld [vmem:[%s738 + $0x2c] sm:$0xf]
      %v751 = vld [vmem:[%s738 + $0x30] sm:$0xf]
      %v752 = vld [vmem:[%s738 + $0x34] sm:$0xf]
      %v753 = vld [vmem:[%s738 + $0x38] sm:$0xf]
      %v754 = vld [vmem:[%s738 + $0x3c] sm:$0xf]
      %v755 = vld [vmem:[%s738 + $0x40] sm:$0xf]
      %v756 = vld [vmem:[%s738 + $0x44] sm:$0xf]
      %v757 = vld [vmem:[%s738 + $0x48] sm:$0xf]
      %v758 = vld [vmem:[%s738 + $0x4c] sm:$0xf]
      %v759 = vld [vmem:[%s738 + $0x50] sm:$0xf]
      %v760 = vld [vmem:[%s738 + $0x54] sm:$0xf]
      %v761 = vld [vmem:[%s738 + $0x58] sm:$0xf]
      %v762 = vld [vmem:[%s738 + $0x5c] sm:$0xf]
      %v763 = vld [vmem:[%s738 + $0x60] sm:$0xf]
      %v764 = vld [vmem:[%s738 + $0x64] sm:$0xf]
      %v765 = vld [vmem:[%s738 + $0x68] sm:$0xf]
      %v766 = vld [vmem:[%s738 + $0x6c] sm:$0xf]
      %v767 = vld [vmem:[%s738 + $0x70] sm:$0xf]
      %v768 = vld [vmem:[%s738 + $0x74] sm:$0xf]
      %v769 = vld [vmem:[%s738 + $0x78] sm:$0xf]
      %v770 = vld [vmem:[%s738 + $0x7c] sm:$0xf]
      %v803 = vunpack.c.l.b16 %v739
      %v804 = vunpack.c.l.b16 %v740
      %v805 = vunpack.c.l.b16 %v741
      %v806 = vunpack.c.l.b16 %v742
      %v807 = vunpack.c.l.b16 %v743
      %v808 = vunpack.c.l.b16 %v744
      %v809 = vunpack.c.l.b16 %v745
      %v810 = vunpack.c.l.b16 %v746
      %v811 = vunpack.c.l.b16 %v747
      %v812 = vunpack.c.l.b16 %v748
      %v813 = vunpack.c.l.b16 %v749
      %v814 = vunpack.c.l.b16 %v750
      %v815 = vunpack.c.l.b16 %v751
      %v816 = vunpack.c.l.b16 %v752
      %v817 = vunpack.c.l.b16 %v753
      %v818 = vunpack.c.l.b16 %v754
      %v819 = vunpack.c.l.b16 %v755
      %v820 = vunpack.c.l.b16 %v756
      %v821 = vunpack.c.l.b16 %v757
      %v822 = vunpack.c.l.b16 %v758
      %v823 = vunpack.c.l.b16 %v759
      %v824 = vunpack.c.l.b16 %v760
      %v825 = vunpack.c.l.b16 %v761
      %v826 = vunpack.c.l.b16 %v762
      %v827 = vunpack.c.l.b16 %v763
      %v828 = vunpack.c.l.b16 %v764
      %v829 = vunpack.c.l.b16 %v765
      %v830 = vunpack.c.l.b16 %v766
      %v831 = vunpack.c.l.b16 %v767
      %v832 = vunpack.c.l.b16 %v768
      %v833 = vunpack.c.l.b16 %v769
      %v834 = vunpack.c.l.b16 %v770
      %v835 = vpack.c.b16 %v804, %v803
      %v836 = vpack.c.b16 %v806, %v805
      %v837 = vpack.c.b16 %v808, %v807
      %v838 = vpack.c.b16 %v810, %v809
      %v839 = vpack.c.b16 %v812, %v811
      %v840 = vpack.c.b16 %v814, %v813
      %v841 = vpack.c.b16 %v816, %v815
      %v842 = vpack.c.b16 %v818, %v817
      %v843 = vpack.c.b16 %v820, %v819
      %v844 = vpack.c.b16 %v822, %v821
      %v845 = vpack.c.b16 %v824, %v823
      %v846 = vpack.c.b16 %v826, %v825
      %v847 = vpack.c.b16 %v828, %v827
      %v848 = vpack.c.b16 %v830, %v829
      %v849 = vpack.c.b16 %v832, %v831
      %v850 = vpack.c.b16 %v834, %v833
      %867 = vmatpush.bf16.msra.mxu0 %v842
      %868 = vmatpush.bf16.msra.mxu0 %v841
      %869 = vmatpush.bf16.msra.mxu0 %v840
      %870 = vmatpush.bf16.msra.mxu0 %v839
      %871 = vmatpush.bf16.msra.mxu0 %v838
      %872 = vmatpush.bf16.msra.mxu0 %v837
      %873 = vmatpush.bf16.msra.mxu0 %v836
      %874 = vmatpush.bf16.msra.mxu0 %v835
      %875 = vmatmul.bf16.gmra.mxu0 %v698
      %v876 = vpop.f32.mrf.mxu0
      %v877 = vadd.f32 0.0, %v876
      %v878 = vpop.f32.mrf.mxu0
      %v879 = vadd.f32 0.0, %v878
      %880 = vmatmul.bf16.gmra.mxu0 %v699
      %v881 = vpop.f32.mrf.mxu0
      %v882 = vadd.f32 0.0, %v881
      %v883 = vpop.f32.mrf.mxu0
      %v884 = vadd.f32 0.0, %v883
      %885 = vmatmul.bf16.gmra.mxu0 %v700
      %v886 = vpop.f32.mrf.mxu0
      %v887 = vadd.f32 0.0, %v886
      %v888 = vpop.f32.mrf.mxu0
      %v889 = vadd.f32 0.0, %v888
      %890 = vmatmul.bf16.gmra.mxu0 %v701
      %v891 = vpop.f32.mrf.mxu0
      %v892 = vadd.f32 0.0, %v891
      %v893 = vpop.f32.mrf.mxu0
      %v894 = vadd.f32 0.0, %v893
      %895 = vdwg.mxu0
      %896 = vmatpush.bf16.msra.mxu0 %v850
      %897 = vmatpush.bf16.msra.mxu0 %v849
      %898 = vmatpush.bf16.msra.mxu0 %v848
      %899 = vmatpush.bf16.msra.mxu0 %v847
      %900 = vmatpush.bf16.msra.mxu0 %v846
      %901 = vmatpush.bf16.msra.mxu0 %v845
      %902 = vmatpush.bf16.msra.mxu0 %v844
      %903 = vmatpush.bf16.msra.mxu0 %v843
      %904 = vmatmul.bf16.gmra.mxu0 %v722
      %v905 = vpop.f32.mrf.mxu0
      %v906 = vadd.f32 %v877, %v905
      %v907 = vpop.f32.mrf.mxu0
      %v908 = vadd.f32 %v879, %v907
      %909 = vmatmul.bf16.gmra.mxu0 %v723
      %v910 = vpop.f32.mrf.mxu0
      %v911 = vadd.f32 %v882, %v910
      %v912 = vpop.f32.mrf.mxu0
      %v913 = vadd.f32 %v884, %v912
      %914 = vmatmul.bf16.gmra.mxu0 %v724
      %v915 = vpop.f32.mrf.mxu0
      %v916 = vadd.f32 %v887, %v915
      %v917 = vpop.f32.mrf.mxu0
      %v918 = vadd.f32 %v889, %v917
      %919 = vmatmul.bf16.gmra.mxu0 %v725
      %v920 = vpop.f32.mrf.mxu0
      %v921 = vadd.f32 %v892, %v920
      %v922 = vpop.f32.mrf.mxu0
      %v923 = vadd.f32 %v894, %v922
      %924 = vdwg.mxu0
      %v925 = vadd.f32 %v730, %v906
      %v926 = vadd.f32 %v731, %v908
      %v927 = vadd.f32 %v732, %v911
      %v928 = vadd.f32 %v733, %v913
      %v929 = vadd.f32 %v734, %v916
      %v930 = vadd.f32 %v735, %v918
      %v931 = vadd.f32 %v736, %v921
      %v932 = vadd.f32 %v737, %v923
      %933 = vst [vmem:[#allocation2] sm:$0xff] %v925
      %934 = vst [vmem:[#allocation2 + $0x8] sm:$0xff] %v926
      %935 = vst [vmem:[#allocation2 + $0x10] sm:$0xff] %v927
      %936 = vst [vmem:[#allocation2 + $0x18] sm:$0xff] %v928
      %937 = vst [vmem:[#allocation2 + $0x20] sm:$0xff] %v929
      %938 = vst [vmem:[#allocation2 + $0x28] sm:$0xff] %v930
      %939 = vst [vmem:[#allocation2 + $0x30] sm:$0xff] %v931
      %940 = vst [vmem:[#allocation2 + $0x38] sm:$0xff] %v932
      %v941 = vld [vmem:[%s681] sm:$0xf]
      %v942 = vld [vmem:[%s681 + $0x4] sm:$0x1]
      %v943 = vld [vmem:[%s681 + $0x8] sm:$0xf]
      %v944 = vld [vmem:[%s681 + $0xc] sm:$0x1]
      %v945 = vld [vmem:[%s681 + $0x10] sm:$0xf]
      %v946 = vld [vmem:[%s681 + $0x14] sm:$0x1]
      %v947 = vld [vmem:[%s681 + $0x18] sm:$0xf]
      %v948 = vld [vmem:[%s681 + $0x1c] sm:$0x1]
      %v949 = vld [vmem:[%s681 + $0x20] sm:$0xf]
      %v950 = vld [vmem:[%s681 + $0x24] sm:$0x1]
      %v951 = vld [vmem:[%s681 + $0x28] sm:$0xf]
      %v952 = vld [vmem:[%s681 + $0x2c] sm:$0x1]
      %v953 = vld [vmem:[%s681 + $0x30] sm:$0xf]
      %v954 = vld [vmem:[%s681 + $0x34] sm:$0x1]
      %v955 = vld [vmem:[%s681 + $0x38] sm:$0xf]
      %v956 = vld [vmem:[%s681 + $0x3c] sm:$0x1]
      %v958 = vshrl.u32 %v941, 16
      %v960 = vrot.slane %v958, 4
      %v961 = vshll.u32 %v941, 16
      %v963 = vrot.slane %v961, 5
      %v964 = vor.u32 %v960, %v963
      %v965 = vrot.slane %v964, 4
      %v967 = vshll.u32 %v942, 16
      %v969 = vrot.slane %v967, 5
      %v970 = vsel %vm251, %v965, %v969
      %v972 = vshrl.u32 %v943, 16
      %v974 = vrot.slane %v972, 4
      %v975 = vshll.u32 %v943, 16
      %v977 = vrot.slane %v975, 5
      %v978 = vor.u32 %v974, %v977
      %v979 = vrot.slane %v978, 4
      %v981 = vshll.u32 %v944, 16
      %v983 = vrot.slane %v981, 5
      %v984 = vsel %vm251, %v979, %v983
      %v986 = vshrl.u32 %v945, 16
      %v988 = vrot.slane %v986, 4
      %v989 = vshll.u32 %v945, 16
      %v991 = vrot.slane %v989, 5
      %v992 = vor.u32 %v988, %v991
      %v993 = vrot.slane %v992, 4
      %v995 = vshll.u32 %v946, 16
      %v997 = vrot.slane %v995, 5
      %v998 = vsel %vm251, %v993, %v997
      %v1000 = vshrl.u32 %v947, 16
      %v1002 = vrot.slane %v1000, 4
      %v1003 = vshll.u32 %v947, 16
      %v1005 = vrot.slane %v1003, 5
      %v1006 = vor.u32 %v1002, %v1005
      %v1007 = vrot.slane %v1006, 4
      %v1009 = vshll.u32 %v948, 16
      %v1011 = vrot.slane %v1009, 5
      %v1012 = vsel %vm251, %v1007, %v1011
      %v1014 = vshrl.u32 %v949, 16
      %v1016 = vrot.slane %v1014, 4
      %v1017 = vshll.u32 %v949, 16
      %v1019 = vrot.slane %v1017, 5
      %v1020 = vor.u32 %v1016, %v1019
      %v1021 = vrot.slane %v1020, 4
      %v1023 = vshll.u32 %v950, 16
      %v1025 = vrot.slane %v1023, 5
      %v1026 = vsel %vm251, %v1021, %v1025
      %v1028 = vshrl.u32 %v951, 16
      %v1030 = vrot.slane %v1028, 4
      %v1031 = vshll.u32 %v951, 16
      %v1033 = vrot.slane %v1031, 5
      %v1034 = vor.u32 %v1030, %v1033
      %v1035 = vrot.slane %v1034, 4
      %v1037 = vshll.u32 %v952, 16
      %v1039 = vrot.slane %v1037, 5
      %v1040 = vsel %vm251, %v1035, %v1039
      %v1042 = vshrl.u32 %v953, 16
      %v1044 = vrot.slane %v1042, 4
      %v1045 = vshll.u32 %v953, 16
      %v1047 = vrot.slane %v1045, 5
      %v1048 = vor.u32 %v1044, %v1047
      %v1049 = vrot.slane %v1048, 4
      %v1051 = vshll.u32 %v954, 16
      %v1053 = vrot.slane %v1051, 5
      %v1054 = vsel %vm251, %v1049, %v1053
      %v1056 = vshrl.u32 %v955, 16
      %v1058 = vrot.slane %v1056, 4
      %v1059 = vshll.u32 %v955, 16
      %v1061 = vrot.slane %v1059, 5
      %v1062 = vor.u32 %v1058, %v1061
      %v1063 = vrot.slane %v1062, 4
      %v1065 = vshll.u32 %v956, 16
      %v1067 = vrot.slane %v1065, 5
      %v1068 = vsel %vm251, %v1063, %v1067
      %v1069 = vld [vmem:[%s681] sm:$0xe]
      %v1070 = vld [vmem:[%s681 + $0x8] sm:$0xe]
      %v1071 = vld [vmem:[%s681 + $0x10] sm:$0xe]
      %v1072 = vld [vmem:[%s681 + $0x18] sm:$0xe]
      %v1073 = vld [vmem:[%s681 + $0x20] sm:$0xe]
      %v1074 = vld [vmem:[%s681 + $0x28] sm:$0xe]
      %v1075 = vld [vmem:[%s681 + $0x30] sm:$0xe]
      %v1076 = vld [vmem:[%s681 + $0x38] sm:$0xe]
      %v1093 = vrot.slane %v1069, 5
      %v1094 = vrot.slane %v1093, 4
      %v1095 = vrot.slane %v942, 5
      %v1096 = vsel %vm648, %v1094, %v1095
      %v1097 = vrot.slane %v1070, 5
      %v1098 = vrot.slane %v1097, 4
      %v1099 = vrot.slane %v944, 5
      %v1100 = vsel %vm648, %v1098, %v1099
      %v1101 = vrot.slane %v1071, 5
      %v1102 = vrot.slane %v1101, 4
      %v1103 = vrot.slane %v946, 5
      %v1104 = vsel %vm648, %v1102, %v1103
      %v1105 = vrot.slane %v1072, 5
      %v1106 = vrot.slane %v1105, 4
      %v1107 = vrot.slane %v948, 5
      %v1108 = vsel %vm648, %v1106, %v1107
      %v1109 = vrot.slane %v1073, 5
      %v1110 = vrot.slane %v1109, 4
      %v1111 = vrot.slane %v950, 5
      %v1112 = vsel %vm648, %v1110, %v1111
      %v1113 = vrot.slane %v1074, 5
      %v1114 = vrot.slane %v1113, 4
      %v1115 = vrot.slane %v952, 5
      %v1116 = vsel %vm648, %v1114, %v1115
      %v1117 = vrot.slane %v1075, 5
      %v1118 = vrot.slane %v1117, 4
      %v1119 = vrot.slane %v954, 5
      %v1120 = vsel %vm648, %v1118, %v1119
      %v1121 = vrot.slane %v1076, 5
      %v1122 = vrot.slane %v1121, 4
      %v1123 = vrot.slane %v956, 5
      %v1124 = vsel %vm648, %v1122, %v1123
      %v1125 = vunpack.c.l.b16 %v970
      %v1126 = vunpack.c.l.b16 %v984
      %v1127 = vunpack.c.l.b16 %v998
      %v1128 = vunpack.c.l.b16 %v1012
      %v1129 = vunpack.c.l.b16 %v1026
      %v1130 = vunpack.c.l.b16 %v1040
      %v1131 = vunpack.c.l.b16 %v1054
      %v1132 = vunpack.c.l.b16 %v1068
      %v1133 = vpack.c.b16 %v1126, %v1125
      %v1134 = vpack.c.b16 %v1128, %v1127
      %v1135 = vpack.c.b16 %v1130, %v1129
      %v1136 = vpack.c.b16 %v1132, %v1131
      %v1141 = vunpack.c.l.b16 %v1096
      %v1142 = vunpack.c.l.b16 %v1100
      %v1143 = vunpack.c.l.b16 %v1104
      %v1144 = vunpack.c.l.b16 %v1108
      %v1145 = vunpack.c.l.b16 %v1112
      %v1146 = vunpack.c.l.b16 %v1116
      %v1147 = vunpack.c.l.b16 %v1120
      %v1148 = vunpack.c.l.b16 %v1124
      %v1149 = vpack.c.b16 %v1142, %v1141
      %v1150 = vpack.c.b16 %v1144, %v1143
      %v1151 = vpack.c.b16 %v1146, %v1145
      %v1152 = vpack.c.b16 %v1148, %v1147
      %v1157 = vld [vmem:[#allocation2] sm:$0xff]
      %v1158 = vld [vmem:[#allocation2 + $0x8] sm:$0xff]
      %v1159 = vld [vmem:[#allocation2 + $0x10] sm:$0xff]
      %v1160 = vld [vmem:[#allocation2 + $0x18] sm:$0xff]
      %v1161 = vld [vmem:[#allocation2 + $0x20] sm:$0xff]
      %v1162 = vld [vmem:[#allocation2 + $0x28] sm:$0xff]
      %v1163 = vld [vmem:[#allocation2 + $0x30] sm:$0xff]
      %v1164 = vld [vmem:[#allocation2 + $0x38] sm:$0xff]
      %s1165 = scalar_lea.vmem %s1, 256
      %v1166 = vld [vmem:[%s1165] sm:$0xf]
      %v1167 = vld [vmem:[%s1165 + $0x4] sm:$0xf]
      %v1168 = vld [vmem:[%s1165 + $0x8] sm:$0xf]
      %v1169 = vld [vmem:[%s1165 + $0xc] sm:$0xf]
      %v1170 = vld [vmem:[%s1165 + $0x10] sm:$0xf]
      %v1171 = vld [vmem:[%s1165 + $0x14] sm:$0xf]
      %v1172 = vld [vmem:[%s1165 + $0x18] sm:$0xf]
      %v1173 = vld [vmem:[%s1165 + $0x1c] sm:$0xf]
      %v1174 = vld [vmem:[%s1165 + $0x20] sm:$0xf]
      %v1175 = vld [vmem:[%s1165 + $0x24] sm:$0xf]
      %v1176 = vld [vmem:[%s1165 + $0x28] sm:$0xf]
      %v1177 = vld [vmem:[%s1165 + $0x2c] sm:$0xf]
      %v1178 = vld [vmem:[%s1165 + $0x30] sm:$0xf]
      %v1179 = vld [vmem:[%s1165 + $0x34] sm:$0xf]
      %v1180 = vld [vmem:[%s1165 + $0x38] sm:$0xf]
      %v1181 = vld [vmem:[%s1165 + $0x3c] sm:$0xf]
      %v1182 = vld [vmem:[%s1165 + $0x40] sm:$0xf]
      %v1183 = vld [vmem:[%s1165 + $0x44] sm:$0xf]
      %v1184 = vld [vmem:[%s1165 + $0x48] sm:$0xf]
      %v1185 = vld [vmem:[%s1165 + $0x4c] sm:$0xf]
      %v1186 = vld [vmem:[%s1165 + $0x50] sm:$0xf]
      %v1187 = vld [vmem:[%s1165 + $0x54] sm:$0xf]
      %v1188 = vld [vmem:[%s1165 + $0x58] sm:$0xf]
      %v1189 = vld [vmem:[%s1165 + $0x5c] sm:$0xf]
      %v1190 = vld [vmem:[%s1165 + $0x60] sm:$0xf]
      %v1191 = vld [vmem:[%s1165 + $0x64] sm:$0xf]
      %v1192 = vld [vmem:[%s1165 + $0x68] sm:$0xf]
      %v1193 = vld [vmem:[%s1165 + $0x6c] sm:$0xf]
      %v1194 = vld [vmem:[%s1165 + $0x70] sm:$0xf]
      %v1195 = vld [vmem:[%s1165 + $0x74] sm:$0xf]
      %v1196 = vld [vmem:[%s1165 + $0x78] sm:$0xf]
      %v1197 = vld [vmem:[%s1165 + $0x7c] sm:$0xf]
      %v1230 = vunpack.c.l.b16 %v1166
      %v1231 = vunpack.c.l.b16 %v1167
      %v1232 = vunpack.c.l.b16 %v1168
      %v1233 = vunpack.c.l.b16 %v1169
      %v1234 = vunpack.c.l.b16 %v1170
      %v1235 = vunpack.c.l.b16 %v1171
      %v1236 = vunpack.c.l.b16 %v1172
      %v1237 = vunpack.c.l.b16 %v1173
      %v1238 = vunpack.c.l.b16 %v1174
      %v1239 = vunpack.c.l.b16 %v1175
      %v1240 = vunpack.c.l.b16 %v1176
      %v1241 = vunpack.c.l.b16 %v1177
      %v1242 = vunpack.c.l.b16 %v1178
      %v1243 = vunpack.c.l.b16 %v1179
      %v1244 = vunpack.c.l.b16 %v1180
      %v1245 = vunpack.c.l.b16 %v1181
      %v1246 = vunpack.c.l.b16 %v1182
      %v1247 = vunpack.c.l.b16 %v1183
      %v1248 = vunpack.c.l.b16 %v1184
      %v1249 = vunpack.c.l.b16 %v1185
      %v1250 = vunpack.c.l.b16 %v1186
      %v1251 = vunpack.c.l.b16 %v1187
      %v1252 = vunpack.c.l.b16 %v1188
      %v1253 = vunpack.c.l.b16 %v1189
      %v1254 = vunpack.c.l.b16 %v1190
      %v1255 = vunpack.c.l.b16 %v1191
      %v1256 = vunpack.c.l.b16 %v1192
      %v1257 = vunpack.c.l.b16 %v1193
      %v1258 = vunpack.c.l.b16 %v1194
      %v1259 = vunpack.c.l.b16 %v1195
      %v1260 = vunpack.c.l.b16 %v1196
      %v1261 = vunpack.c.l.b16 %v1197
      %v1262 = vpack.c.b16 %v1231, %v1230
      %v1263 = vpack.c.b16 %v1233, %v1232
      %v1264 = vpack.c.b16 %v1235, %v1234
      %v1265 = vpack.c.b16 %v1237, %v1236
      %v1266 = vpack.c.b16 %v1239, %v1238
      %v1267 = vpack.c.b16 %v1241, %v1240
      %v1268 = vpack.c.b16 %v1243, %v1242
      %v1269 = vpack.c.b16 %v1245, %v1244
      %v1270 = vpack.c.b16 %v1247, %v1246
      %v1271 = vpack.c.b16 %v1249, %v1248
      %v1272 = vpack.c.b16 %v1251, %v1250
      %v1273 = vpack.c.b16 %v1253, %v1252
      %v1274 = vpack.c.b16 %v1255, %v1254
      %v1275 = vpack.c.b16 %v1257, %v1256
      %v1276 = vpack.c.b16 %v1259, %v1258
      %v1277 = vpack.c.b16 %v1261, %v1260
      %1294 = vmatpush.bf16.msra.mxu0 %v1269
      %1295 = vmatpush.bf16.msra.mxu0 %v1268
      %1296 = vmatpush.bf16.msra.mxu0 %v1267
      %1297 = vmatpush.bf16.msra.mxu0 %v1266
      %1298 = vmatpush.bf16.msra.mxu0 %v1265
      %1299 = vmatpush.bf16.msra.mxu0 %v1264
      %1300 = vmatpush.bf16.msra.mxu0 %v1263
      %1301 = vmatpush.bf16.msra.mxu0 %v1262
      %1302 = vmatmul.bf16.gmra.mxu0 %v1133
      %v1303 = vpop.f32.mrf.mxu0
      %v1304 = vadd.f32 0.0, %v1303
      %v1305 = vpop.f32.mrf.mxu0
      %v1306 = vadd.f32 0.0, %v1305
      %1307 = vmatmul.bf16.gmra.mxu0 %v1134
      %v1308 = vpop.f32.mrf.mxu0
      %v1309 = vadd.f32 0.0, %v1308
      %v1310 = vpop.f32.mrf.mxu0
      %v1311 = vadd.f32 0.0, %v1310
      %1312 = vmatmul.bf16.gmra.mxu0 %v1135
      %v1313 = vpop.f32.mrf.mxu0
      %v1314 = vadd.f32 0.0, %v1313
      %v1315 = vpop.f32.mrf.mxu0
      %v1316 = vadd.f32 0.0, %v1315
      %1317 = vmatmul.bf16.gmra.mxu0 %v1136
      %v1318 = vpop.f32.mrf.mxu0
      %v1319 = vadd.f32 0.0, %v1318
      %v1320 = vpop.f32.mrf.mxu0
      %v1321 = vadd.f32 0.0, %v1320
      %1322 = vdwg.mxu0
      %1323 = vmatpush.bf16.msra.mxu0 %v1277
      %1324 = vmatpush.bf16.msra.mxu0 %v1276
      %1325 = vmatpush.bf16.msra.mxu0 %v1275
      %1326 = vmatpush.bf16.msra.mxu0 %v1274
      %1327 = vmatpush.bf16.msra.mxu0 %v1273
      %1328 = vmatpush.bf16.msra.mxu0 %v1272
      %1329 = vmatpush.bf16.msra.mxu0 %v1271
      %1330 = vmatpush.bf16.msra.mxu0 %v1270
      %1331 = vmatmul.bf16.gmra.mxu0 %v1149
      %v1332 = vpop.f32.mrf.mxu0
      %v1333 = vadd.f32 %v1304, %v1332
      %v1334 = vpop.f32.mrf.mxu0
      %v1335 = vadd.f32 %v1306, %v1334
      %1336 = vmatmul.bf16.gmra.mxu0 %v1150
      %v1337 = vpop.f32.mrf.mxu0
      %v1338 = vadd.f32 %v1309, %v1337
      %v1339 = vpop.f32.mrf.mxu0
      %v1340 = vadd.f32 %v1311, %v1339
      %1341 = vmatmul.bf16.gmra.mxu0 %v1151
      %v1342 = vpop.f32.mrf.mxu0
      %v1343 = vadd.f32 %v1314, %v1342
      %v1344 = vpop.f32.mrf.mxu0
      %v1345 = vadd.f32 %v1316, %v1344
      %1346 = vmatmul.bf16.gmra.mxu0 %v1152
      %v1347 = vpop.f32.mrf.mxu0
      %v1348 = vadd.f32 %v1319, %v1347
      %v1349 = vpop.f32.mrf.mxu0
      %v1350 = vadd.f32 %v1321, %v1349
      %1351 = vdwg.mxu0
      %v1352 = vadd.f32 %v1157, %v1333
      %v1353 = vadd.f32 %v1158, %v1335
      %v1354 = vadd.f32 %v1159, %v1338
      %v1355 = vadd.f32 %v1160, %v1340
      %v1356 = vadd.f32 %v1161, %v1343
      %v1357 = vadd.f32 %v1162, %v1345
      %v1358 = vadd.f32 %v1163, %v1348
      %v1359 = vadd.f32 %v1164, %v1350
      %1360 = vst [vmem:[#allocation2] sm:$0xff] %v1352
      %1361 = vst [vmem:[#allocation2 + $0x8] sm:$0xff] %v1353
      %1362 = vst [vmem:[#allocation2 + $0x10] sm:$0xff] %v1354
      %1363 = vst [vmem:[#allocation2 + $0x18] sm:$0xff] %v1355
      %1364 = vst [vmem:[#allocation2 + $0x20] sm:$0xff] %v1356
      %1365 = vst [vmem:[#allocation2 + $0x28] sm:$0xff] %v1357
      %1366 = vst [vmem:[#allocation2 + $0x30] sm:$0xff] %v1358
      %1367 = vst [vmem:[#allocation2 + $0x38] sm:$0xff] %v1359
      %s1368 = scalar_lea.vmem %s219, 16
      %v1369 = vld [vmem:[%s1368] sm:$0xf]
      %v1370 = vld [vmem:[%s1368 + $0x8] sm:$0xf]
      %v1371 = vld [vmem:[%s1368 + $0x10] sm:$0xf]
      %v1372 = vld [vmem:[%s1368 + $0x18] sm:$0xf]
      %v1373 = vld [vmem:[%s1368 + $0x20] sm:$0xf]
      %v1374 = vld [vmem:[%s1368 + $0x28] sm:$0xf]
      %v1375 = vld [vmem:[%s1368 + $0x30] sm:$0xf]
      %v1376 = vld [vmem:[%s1368 + $0x38] sm:$0xf]
      %v1377 = vld [vmem:[%s1368 + $0x4] sm:$0x1]
      %v1378 = vld [vmem:[%s1368 + $0xc] sm:$0x1]
      %v1379 = vld [vmem:[%s1368 + $0x14] sm:$0x1]
      %v1380 = vld [vmem:[%s1368 + $0x1c] sm:$0x1]
      %v1381 = vld [vmem:[%s1368 + $0x24] sm:$0x1]
      %v1382 = vld [vmem:[%s1368 + $0x2c] sm:$0x1]
      %v1383 = vld [vmem:[%s1368 + $0x34] sm:$0x1]
      %v1384 = vld [vmem:[%s1368 + $0x3c] sm:$0x1]
      %v1386 = vshrl.u32 %v1369, 16
      %v1388 = vrot.slane %v1386, 4
      %v1389 = vshll.u32 %v1369, 16
      %v1391 = vrot.slane %v1389, 5
      %v1392 = vor.u32 %v1388, %v1391
      %v1393 = vrot.slane %v1392, 4
      %v1395 = vshll.u32 %v1377, 16
      %v1397 = vrot.slane %v1395, 5
      %v1398 = vsel %vm251, %v1393, %v1397
      %v1400 = vshrl.u32 %v1370, 16
      %v1402 = vrot.slane %v1400, 4
      %v1403 = vshll.u32 %v1370, 16
      %v1405 = vrot.slane %v1403, 5
      %v1406 = vor.u32 %v1402, %v1405
      %v1407 = vrot.slane %v1406, 4
      %v1409 = vshll.u32 %v1378, 16
      %v1411 = vrot.slane %v1409, 5
      %v1412 = vsel %vm251, %v1407, %v1411
      %v1414 = vshrl.u32 %v1371, 16
      %v1416 = vrot.slane %v1414, 4
      %v1417 = vshll.u32 %v1371, 16
      %v1419 = vrot.slane %v1417, 5
      %v1420 = vor.u32 %v1416, %v1419
      %v1421 = vrot.slane %v1420, 4
      %v1423 = vshll.u32 %v1379, 16
      %v1425 = vrot.slane %v1423, 5
      %v1426 = vsel %vm251, %v1421, %v1425
      %v1428 = vshrl.u32 %v1372, 16
      %v1430 = vrot.slane %v1428, 4
      %v1431 = vshll.u32 %v1372, 16
      %v1433 = vrot.slane %v1431, 5
      %v1434 = vor.u32 %v1430, %v1433
      %v1435 = vrot.slane %v1434, 4
      %v1437 = vshll.u32 %v1380, 16
      %v1439 = vrot.slane %v1437, 5
      %v1440 = vsel %vm251, %v1435, %v1439
      %v1442 = vshrl.u32 %v1373, 16
      %v1444 = vrot.slane %v1442, 4
      %v1445 = vshll.u32 %v1373, 16
      %v1447 = vrot.slane %v1445, 5
      %v1448 = vor.u32 %v1444, %v1447
      %v1449 = vrot.slane %v1448, 4
      %v1451 = vshll.u32 %v1381, 16
      %v1453 = vrot.slane %v1451, 5
      %v1454 = vsel %vm251, %v1449, %v1453
      %v1456 = vshrl.u32 %v1374, 16
      %v1458 = vrot.slane %v1456, 4
      %v1459 = vshll.u32 %v1374, 16
      %v1461 = vrot.slane %v1459, 5
      %v1462 = vor.u32 %v1458, %v1461
      %v1463 = vrot.slane %v1462, 4
      %v1465 = vshll.u32 %v1382, 16
      %v1467 = vrot.slane %v1465, 5
      %v1468 = vsel %vm251, %v1463, %v1467
      %v1470 = vshrl.u32 %v1375, 16
      %v1472 = vrot.slane %v1470, 4
      %v1473 = vshll.u32 %v1375, 16
      %v1475 = vrot.slane %v1473, 5
      %v1476 = vor.u32 %v1472, %v1475
      %v1477 = vrot.slane %v1476, 4
      %v1479 = vshll.u32 %v1383, 16
      %v1481 = vrot.slane %v1479, 5
      %v1482 = vsel %vm251, %v1477, %v1481
      %v1484 = vshrl.u32 %v1376, 16
      %v1486 = vrot.slane %v1484, 4
      %v1487 = vshll.u32 %v1376, 16
      %v1489 = vrot.slane %v1487, 5
      %v1490 = vor.u32 %v1486, %v1489
      %v1491 = vrot.slane %v1490, 4
      %v1493 = vshll.u32 %v1384, 16
      %v1495 = vrot.slane %v1493, 5
      %v1496 = vsel %vm251, %v1491, %v1495
      %v1505 = vunpack.c.l.b16 %v1369
      %v1506 = vunpack.c.l.b16 %v1370
      %v1507 = vunpack.c.l.b16 %v1371
      %v1508 = vunpack.c.l.b16 %v1372
      %v1509 = vunpack.c.l.b16 %v1373
      %v1510 = vunpack.c.l.b16 %v1374
      %v1511 = vunpack.c.l.b16 %v1375
      %v1512 = vunpack.c.l.b16 %v1376
      %v1513 = vpack.c.b16 %v1506, %v1505
      %v1514 = vpack.c.b16 %v1508, %v1507
      %v1515 = vpack.c.b16 %v1510, %v1509
      %v1516 = vpack.c.b16 %v1512, %v1511
      %v1521 = vunpack.c.l.b16 %v1398
      %v1522 = vunpack.c.l.b16 %v1412
      %v1523 = vunpack.c.l.b16 %v1426
      %v1524 = vunpack.c.l.b16 %v1440
      %v1525 = vunpack.c.l.b16 %v1454
      %v1526 = vunpack.c.l.b16 %v1468
      %v1527 = vunpack.c.l.b16 %v1482
      %v1528 = vunpack.c.l.b16 %v1496
      %v1529 = vpack.c.b16 %v1522, %v1521
      %v1530 = vpack.c.b16 %v1524, %v1523
      %v1531 = vpack.c.b16 %v1526, %v1525
      %v1532 = vpack.c.b16 %v1528, %v1527
      %v1537 = vld [vmem:[#allocation2] sm:$0xff]
      %v1538 = vld [vmem:[#allocation2 + $0x8] sm:$0xff]
      %v1539 = vld [vmem:[#allocation2 + $0x10] sm:$0xff]
      %v1540 = vld [vmem:[#allocation2 + $0x18] sm:$0xff]
      %v1541 = vld [vmem:[#allocation2 + $0x20] sm:$0xff]
      %v1542 = vld [vmem:[#allocation2 + $0x28] sm:$0xff]
      %v1543 = vld [vmem:[#allocation2 + $0x30] sm:$0xff]
      %v1544 = vld [vmem:[#allocation2 + $0x38] sm:$0xff]
      %s1545 = scalar_lea.vmem %s1, 384
      %v1546 = vld [vmem:[%s1545] sm:$0xf]
      %v1547 = vld [vmem:[%s1545 + $0x4] sm:$0xf]
      %v1548 = vld [vmem:[%s1545 + $0x8] sm:$0xf]
      %v1549 = vld [vmem:[%s1545 + $0xc] sm:$0xf]
      %v1550 = vld [vmem:[%s1545 + $0x10] sm:$0xf]
      %v1551 = vld [vmem:[%s1545 + $0x14] sm:$0xf]
      %v1552 = vld [vmem:[%s1545 + $0x18] sm:$0xf]
      %v1553 = vld [vmem:[%s1545 + $0x1c] sm:$0xf]
      %v1554 = vld [vmem:[%s1545 + $0x20] sm:$0xf]
      %v1555 = vld [vmem:[%s1545 + $0x24] sm:$0xf]
      %v1556 = vld [vmem:[%s1545 + $0x28] sm:$0xf]
      %v1557 = vld [vmem:[%s1545 + $0x2c] sm:$0xf]
      %v1558 = vld [vmem:[%s1545 + $0x30] sm:$0xf]
      %v1559 = vld [vmem:[%s1545 + $0x34] sm:$0xf]
      %v1560 = vld [vmem:[%s1545 + $0x38] sm:$0xf]
      %v1561 = vld [vmem:[%s1545 + $0x3c] sm:$0xf]
      %v1562 = vld [vmem:[%s1545 + $0x40] sm:$0xf]
      %v1563 = vld [vmem:[%s1545 + $0x44] sm:$0xf]
      %v1564 = vld [vmem:[%s1545 + $0x48] sm:$0xf]
      %v1565 = vld [vmem:[%s1545 + $0x4c] sm:$0xf]
      %v1566 = vld [vmem:[%s1545 + $0x50] sm:$0xf]
      %v1567 = vld [vmem:[%s1545 + $0x54] sm:$0xf]
      %v1568 = vld [vmem:[%s1545 + $0x58] sm:$0xf]
      %v1569 = vld [vmem:[%s1545 + $0x5c] sm:$0xf]
      %v1570 = vld [vmem:[%s1545 + $0x60] sm:$0xf]
      %v1571 = vld [vmem:[%s1545 + $0x64] sm:$0xf]
      %v1572 = vld [vmem:[%s1545 + $0x68] sm:$0xf]
      %v1573 = vld [vmem:[%s1545 + $0x6c] sm:$0xf]
      %v1574 = vld [vmem:[%s1545 + $0x70] sm:$0xf]
      %v1575 = vld [vmem:[%s1545 + $0x74] sm:$0xf]
      %v1576 = vld [vmem:[%s1545 + $0x78] sm:$0xf]
      %v1577 = vld [vmem:[%s1545 + $0x7c] sm:$0xf]
      %v1610 = vunpack.c.l.b16 %v1546
      %v1611 = vunpack.c.l.b16 %v1547
      %v1612 = vunpack.c.l.b16 %v1548
      %v1613 = vunpack.c.l.b16 %v1549
      %v1614 = vunpack.c.l.b16 %v1550
      %v1615 = vunpack.c.l.b16 %v1551
      %v1616 = vunpack.c.l.b16 %v1552
      %v1617 = vunpack.c.l.b16 %v1553
      %v1618 = vunpack.c.l.b16 %v1554
      %v1619 = vunpack.c.l.b16 %v1555
      %v1620 = vunpack.c.l.b16 %v1556
      %v1621 = vunpack.c.l.b16 %v1557
      %v1622 = vunpack.c.l.b16 %v1558
      %v1623 = vunpack.c.l.b16 %v1559
      %v1624 = vunpack.c.l.b16 %v1560
      %v1625 = vunpack.c.l.b16 %v1561
      %v1626 = vunpack.c.l.b16 %v1562
      %v1627 = vunpack.c.l.b16 %v1563
      %v1628 = vunpack.c.l.b16 %v1564
      %v1629 = vunpack.c.l.b16 %v1565
      %v1630 = vunpack.c.l.b16 %v1566
      %v1631 = vunpack.c.l.b16 %v1567
      %v1632 = vunpack.c.l.b16 %v1568
      %v1633 = vunpack.c.l.b16 %v1569
      %v1634 = vunpack.c.l.b16 %v1570
      %v1635 = vunpack.c.l.b16 %v1571
      %v1636 = vunpack.c.l.b16 %v1572
      %v1637 = vunpack.c.l.b16 %v1573
      %v1638 = vunpack.c.l.b16 %v1574
      %v1639 = vunpack.c.l.b16 %v1575
      %v1640 = vunpack.c.l.b16 %v1576
      %v1641 = vunpack.c.l.b16 %v1577
      %v1642 = vpack.c.b16 %v1611, %v1610
      %v1643 = vpack.c.b16 %v1613, %v1612
      %v1644 = vpack.c.b16 %v1615, %v1614
      %v1645 = vpack.c.b16 %v1617, %v1616
      %v1646 = vpack.c.b16 %v1619, %v1618
      %v1647 = vpack.c.b16 %v1621, %v1620
      %v1648 = vpack.c.b16 %v1623, %v1622
      %v1649 = vpack.c.b16 %v1625, %v1624
      %v1650 = vpack.c.b16 %v1627, %v1626
      %v1651 = vpack.c.b16 %v1629, %v1628
      %v1652 = vpack.c.b16 %v1631, %v1630
      %v1653 = vpack.c.b16 %v1633, %v1632
      %v1654 = vpack.c.b16 %v1635, %v1634
      %v1655 = vpack.c.b16 %v1637, %v1636
      %v1656 = vpack.c.b16 %v1639, %v1638
      %v1657 = vpack.c.b16 %v1641, %v1640
      %1674 = vmatpush.bf16.msra.mxu0 %v1649
      %1675 = vmatpush.bf16.msra.mxu0 %v1648
      %1676 = vmatpush.bf16.msra.mxu0 %v1647
      %1677 = vmatpush.bf16.msra.mxu0 %v1646
      %1678 = vmatpush.bf16.msra.mxu0 %v1645
      %1679 = vmatpush.bf16.msra.mxu0 %v1644
      %1680 = vmatpush.bf16.msra.mxu0 %v1643
      %1681 = vmatpush.bf16.msra.mxu0 %v1642
      %1682 = vmatmul.bf16.gmra.mxu0 %v1513
      %v1683 = vpop.f32.mrf.mxu0
      %v1684 = vadd.f32 0.0, %v1683
      %v1685 = vpop.f32.mrf.mxu0
      %v1686 = vadd.f32 0.0, %v1685
      %1687 = vmatmul.bf16.gmra.mxu0 %v1514
      %v1688 = vpop.f32.mrf.mxu0
      %v1689 = vadd.f32 0.0, %v1688
      %v1690 = vpop.f32.mrf.mxu0
      %v1691 = vadd.f32 0.0, %v1690
      %1692 = vmatmul.bf16.gmra.mxu0 %v1515
      %v1693 = vpop.f32.mrf.mxu0
      %v1694 = vadd.f32 0.0, %v1693
      %v1695 = vpop.f32.mrf.mxu0
      %v1696 = vadd.f32 0.0, %v1695
      %1697 = vmatmul.bf16.gmra.mxu0 %v1516
      %v1698 = vpop.f32.mrf.mxu0
      %v1699 = vadd.f32 0.0, %v1698
      %v1700 = vpop.f32.mrf.mxu0
      %v1701 = vadd.f32 0.0, %v1700
      %1702 = vdwg.mxu0
      %1703 = vmatpush.bf16.msra.mxu0 %v1657
      %1704 = vmatpush.bf16.msra.mxu0 %v1656
      %1705 = vmatpush.bf16.msra.mxu0 %v1655
      %1706 = vmatpush.bf16.msra.mxu0 %v1654
      %1707 = vmatpush.bf16.msra.mxu0 %v1653
      %1708 = vmatpush.bf16.msra.mxu0 %v1652
      %1709 = vmatpush.bf16.msra.mxu0 %v1651
      %1710 = vmatpush.bf16.msra.mxu0 %v1650
      %1711 = vmatmul.bf16.gmra.mxu0 %v1529
      %v1712 = vpop.f32.mrf.mxu0
      %v1713 = vadd.f32 %v1684, %v1712
      %v1714 = vpop.f32.mrf.mxu0
      %v1715 = vadd.f32 %v1686, %v1714
      %1716 = vmatmul.bf16.gmra.mxu0 %v1530
      %v1717 = vpop.f32.mrf.mxu0
      %v1718 = vadd.f32 %v1689, %v1717
      %v1719 = vpop.f32.mrf.mxu0
      %v1720 = vadd.f32 %v1691, %v1719
      %1721 = vmatmul.bf16.gmra.mxu0 %v1531
      %v1722 = vpop.f32.mrf.mxu0
      %v1723 = vadd.f32 %v1694, %v1722
      %v1724 = vpop.f32.mrf.mxu0
      %v1725 = vadd.f32 %v1696, %v1724
      %1726 = vmatmul.bf16.gmra.mxu0 %v1532
      %v1727 = vpop.f32.mrf.mxu0
      %v1728 = vadd.f32 %v1699, %v1727
      %v1729 = vpop.f32.mrf.mxu0
      %v1730 = vadd.f32 %v1701, %v1729
      %1731 = vdwg.mxu0
      %v1732 = vadd.f32 %v1537, %v1713
      %v1733 = vadd.f32 %v1538, %v1715
      %v1734 = vadd.f32 %v1539, %v1718
      %v1735 = vadd.f32 %v1540, %v1720
      %v1736 = vadd.f32 %v1541, %v1723
      %v1737 = vadd.f32 %v1542, %v1725
      %v1738 = vadd.f32 %v1543, %v1728
      %v1739 = vadd.f32 %v1544, %v1730
      %1740 = vst [vmem:[#allocation2] sm:$0xff] %v1732
      %1741 = vst [vmem:[#allocation2 + $0x8] sm:$0xff] %v1733
      %1742 = vst [vmem:[#allocation2 + $0x10] sm:$0xff] %v1734
      %1743 = vst [vmem:[#allocation2 + $0x18] sm:$0xff] %v1735
      %1744 = vst [vmem:[#allocation2 + $0x20] sm:$0xff] %v1736
      %1745 = vst [vmem:[#allocation2 + $0x28] sm:$0xff] %v1737
      %1746 = vst [vmem:[#allocation2 + $0x30] sm:$0xff] %v1738
      %1747 = vst [vmem:[#allocation2 + $0x38] sm:$0xff] %v1739
      %v1748 = vld [vmem:[%s1368] sm:$0xe]
      %v1749 = vld [vmem:[%s1368 + $0x4] sm:$0x1]
      %v1750 = vld [vmem:[%s1368 + $0x8] sm:$0xe]
      %v1751 = vld [vmem:[%s1368 + $0xc] sm:$0x1]
      %v1752 = vld [vmem:[%s1368 + $0x10] sm:$0xe]
      %v1753 = vld [vmem:[%s1368 + $0x14] sm:$0x1]
      %v1754 = vld [vmem:[%s1368 + $0x18] sm:$0xe]
      %v1755 = vld [vmem:[%s1368 + $0x1c] sm:$0x1]
      %v1756 = vld [vmem:[%s1368 + $0x20] sm:$0xe]
      %v1757 = vld [vmem:[%s1368 + $0x24] sm:$0x1]
      %v1758 = vld [vmem:[%s1368 + $0x28] sm:$0xe]
      %v1759 = vld [vmem:[%s1368 + $0x2c] sm:$0x1]
      %v1760 = vld [vmem:[%s1368 + $0x30] sm:$0xe]
      %v1761 = vld [vmem:[%s1368 + $0x34] sm:$0x1]
      %v1762 = vld [vmem:[%s1368 + $0x38] sm:$0xe]
      %v1763 = vld [vmem:[%s1368 + $0x3c] sm:$0x1]
      %v1780 = vrot.slane %v1748, 5
      %v1781 = vrot.slane %v1780, 4
      %v1782 = vrot.slane %v1749, 5
      %v1783 = vsel %vm648, %v1781, %v1782
      %v1784 = vrot.slane %v1750, 5
      %v1785 = vrot.slane %v1784, 4
      %v1786 = vrot.slane %v1751, 5
      %v1787 = vsel %vm648, %v1785, %v1786
      %v1788 = vrot.slane %v1752, 5
      %v1789 = vrot.slane %v1788, 4
      %v1790 = vrot.slane %v1753, 5
      %v1791 = vsel %vm648, %v1789, %v1790
      %v1792 = vrot.slane %v1754, 5
      %v1793 = vrot.slane %v1792, 4
      %v1794 = vrot.slane %v1755, 5
      %v1795 = vsel %vm648, %v1793, %v1794
      %v1796 = vrot.slane %v1756, 5
      %v1797 = vrot.slane %v1796, 4
      %v1798 = vrot.slane %v1757, 5
      %v1799 = vsel %vm648, %v1797, %v1798
      %v1800 = vrot.slane %v1758, 5
      %v1801 = vrot.slane %v1800, 4
      %v1802 = vrot.slane %v1759, 5
      %v1803 = vsel %vm648, %v1801, %v1802
      %v1804 = vrot.slane %v1760, 5
      %v1805 = vrot.slane %v1804, 4
      %v1806 = vrot.slane %v1761, 5
      %v1807 = vsel %vm648, %v1805, %v1806
      %v1808 = vrot.slane %v1762, 5
      %v1809 = vrot.slane %v1808, 4
      %v1810 = vrot.slane %v1763, 5
      %v1811 = vsel %vm648, %v1809, %v1810
      %v1812 = vunpack.c.l.b16 %v1783
      %v1813 = vunpack.c.l.b16 %v1787
      %v1814 = vunpack.c.l.b16 %v1791
      %v1815 = vunpack.c.l.b16 %v1795
      %v1816 = vunpack.c.l.b16 %v1799
      %v1817 = vunpack.c.l.b16 %v1803
      %v1818 = vunpack.c.l.b16 %v1807
      %v1819 = vunpack.c.l.b16 %v1811
      %v1820 = vpack.c.b16 %v1813, %v1812
      %v1821 = vpack.c.b16 %v1815, %v1814
      %v1822 = vpack.c.b16 %v1817, %v1816
      %v1823 = vpack.c.b16 %v1819, %v1818
      %v1828 = vld [vmem:[#allocation2] sm:$0xff]
      %v1829 = vld [vmem:[#allocation2 + $0x8] sm:$0xff]
      %v1830 = vld [vmem:[#allocation2 + $0x10] sm:$0xff]
      %v1831 = vld [vmem:[#allocation2 + $0x18] sm:$0xff]
      %v1832 = vld [vmem:[#allocation2 + $0x20] sm:$0xff]
      %v1833 = vld [vmem:[#allocation2 + $0x28] sm:$0xff]
      %v1834 = vld [vmem:[#allocation2 + $0x30] sm:$0xff]
      %v1835 = vld [vmem:[#allocation2 + $0x38] sm:$0xff]
      %s1836 = scalar_lea.vmem %s1, 512
      %v1837 = vld [vmem:[%s1836] sm:$0xf]
      %v1838 = vld [vmem:[%s1836 + $0x4] sm:$0xf]
      %v1839 = vld [vmem:[%s1836 + $0x8] sm:$0xf]
      %v1840 = vld [vmem:[%s1836 + $0xc] sm:$0xf]
      %v1841 = vld [vmem:[%s1836 + $0x10] sm:$0xf]
      %v1842 = vld [vmem:[%s1836 + $0x14] sm:$0xf]
      %v1843 = vld [vmem:[%s1836 + $0x18] sm:$0xf]
      %v1844 = vld [vmem:[%s1836 + $0x1c] sm:$0xf]
      %v1845 = vld [vmem:[%s1836 + $0x20] sm:$0xf]
      %v1846 = vld [vmem:[%s1836 + $0x24] sm:$0xf]
      %v1847 = vld [vmem:[%s1836 + $0x28] sm:$0xf]
      %v1848 = vld [vmem:[%s1836 + $0x2c] sm:$0xf]
      %v1849 = vld [vmem:[%s1836 + $0x30] sm:$0xf]
      %v1850 = vld [vmem:[%s1836 + $0x34] sm:$0xf]
      %v1851 = vld [vmem:[%s1836 + $0x38] sm:$0xf]
      %v1852 = vld [vmem:[%s1836 + $0x3c] sm:$0xf]
      %v1853 = vld [vmem:[%s1836 + $0x40] sm:$0xf]
      %v1854 = vld [vmem:[%s1836 + $0x44] sm:$0xf]
      %v1855 = vld [vmem:[%s1836 + $0x48] sm:$0xf]
      %v1856 = vld [vmem:[%s1836 + $0x4c] sm:$0xf]
      %v1857 = vld [vmem:[%s1836 + $0x50] sm:$0xf]
      %v1858 = vld [vmem:[%s1836 + $0x54] sm:$0xf]
      %v1859 = vld [vmem:[%s1836 + $0x58] sm:$0xf]
      %v1860 = vld [vmem:[%s1836 + $0x5c] sm:$0xf]
      %v1861 = vld [vmem:[%s1836 + $0x60] sm:$0xf]
      %v1862 = vld [vmem:[%s1836 + $0x64] sm:$0xf]
      %v1863 = vld [vmem:[%s1836 + $0x68] sm:$0xf]
      %v1864 = vld [vmem:[%s1836 + $0x6c] sm:$0xf]
      %v1865 = vld [vmem:[%s1836 + $0x70] sm:$0xf]
      %v1866 = vld [vmem:[%s1836 + $0x74] sm:$0xf]
      %v1867 = vld [vmem:[%s1836 + $0x78] sm:$0xf]
      %v1868 = vld [vmem:[%s1836 + $0x7c] sm:$0xf]
      %v1901 = vunpack.c.l.b16 %v1837
      %v1902 = vunpack.c.l.b16 %v1838
      %v1903 = vunpack.c.l.b16 %v1839
      %v1904 = vunpack.c.l.b16 %v1840
      %v1905 = vunpack.c.l.b16 %v1841
      %v1906 = vunpack.c.l.b16 %v1842
      %v1907 = vunpack.c.l.b16 %v1843
      %v1908 = vunpack.c.l.b16 %v1844
      %v1909 = vunpack.c.l.b16 %v1845
      %v1910 = vunpack.c.l.b16 %v1846
      %v1911 = vunpack.c.l.b16 %v1847
      %v1912 = vunpack.c.l.b16 %v1848
      %v1913 = vunpack.c.l.b16 %v1849
      %v1914 = vunpack.c.l.b16 %v1850
      %v1915 = vunpack.c.l.b16 %v1851
      %v1916 = vunpack.c.l.b16 %v1852
      %v1917 = vunpack.c.l.b16 %v1853
      %v1918 = vunpack.c.l.b16 %v1854
      %v1919 = vunpack.c.l.b16 %v1855
      %v1920 = vunpack.c.l.b16 %v1856
      %v1921 = vunpack.c.l.b16 %v1857
      %v1922 = vunpack.c.l.b16 %v1858
      %v1923 = vunpack.c.l.b16 %v1859
      %v1924 = vunpack.c.l.b16 %v1860
      %v1925 = vunpack.c.l.b16 %v1861
      %v1926 = vunpack.c.l.b16 %v1862
      %v1927 = vunpack.c.l.b16 %v1863
      %v1928 = vunpack.c.l.b16 %v1864
      %v1929 = vunpack.c.l.b16 %v1865
      %v1930 = vunpack.c.l.b16 %v1866
      %v1931 = vunpack.c.l.b16 %v1867
      %v1932 = vunpack.c.l.b16 %v1868
      %v1933 = vpack.c.b16 %v1902, %v1901
      %v1934 = vpack.c.b16 %v1904, %v1903
      %v1935 = vpack.c.b16 %v1906, %v1905
      %v1936 = vpack.c.b16 %v1908, %v1907
      %v1937 = vpack.c.b16 %v1910, %v1909
      %v1938 = vpack.c.b16 %v1912, %v1911
      %v1939 = vpack.c.b16 %v1914, %v1913
      %v1940 = vpack.c.b16 %v1916, %v1915
      %v1941 = vpack.c.b16 %v1918, %v1917
      %v1942 = vpack.c.b16 %v1920, %v1919
      %v1943 = vpack.c.b16 %v1922, %v1921
      %v1944 = vpack.c.b16 %v1924, %v1923
      %v1945 = vpack.c.b16 %v1926, %v1925
      %v1946 = vpack.c.b16 %v1928, %v1927
      %v1947 = vpack.c.b16 %v1930, %v1929
      %v1948 = vpack.c.b16 %v1932, %v1931
      %1965 = vmatpush.bf16.msra.mxu0 %v1940
      %1966 = vmatpush.bf16.msra.mxu0 %v1939
      %1967 = vmatpush.bf16.msra.mxu0 %v1938
      %1968 = vmatpush.bf16.msra.mxu0 %v1937
      %1969 = vmatpush.bf16.msra.mxu0 %v1936
      %1970 = vmatpush.bf16.msra.mxu0 %v1935
      %1971 = vmatpush.bf16.msra.mxu0 %v1934
      %1972 = vmatpush.bf16.msra.mxu0 %v1933
      %1973 = vmatmul.bf16.gmra.mxu0 %v1820
      %v1974 = vpop.f32.mrf.mxu0
      %v1975 = vadd.f32 0.0, %v1974
      %v1976 = vpop.f32.mrf.mxu0
      %v1977 = vadd.f32 0.0, %v1976
      %1978 = vmatmul.bf16.gmra.mxu0 %v1821
      %v1979 = vpop.f32.mrf.mxu0
      %v1980 = vadd.f32 0.0, %v1979
      %v1981 = vpop.f32.mrf.mxu0
      %v1982 = vadd.f32 0.0, %v1981
      %1983 = vmatmul.bf16.gmra.mxu0 %v1822
      %v1984 = vpop.f32.mrf.mxu0
      %v1985 = vadd.f32 0.0, %v1984
      %v1986 = vpop.f32.mrf.mxu0
      %v1987 = vadd.f32 0.0, %v1986
      %1988 = vmatmul.bf16.gmra.mxu0 %v1823
      %v1989 = vpop.f32.mrf.mxu0
      %v1990 = vadd.f32 0.0, %v1989
      %v1991 = vpop.f32.mrf.mxu0
      %v1992 = vadd.f32 0.0, %v1991
      %1993 = vdwg.mxu0
      %1994 = vmatpush.bf16.msra.mxu0 %v1948
      %1995 = vmatpush.bf16.msra.mxu0 %v1947
      %1996 = vmatpush.bf16.msra.mxu0 %v1946
      %1997 = vmatpush.bf16.msra.mxu0 %v1945
      %1998 = vmatpush.bf16.msra.mxu0 %v1944
      %1999 = vmatpush.bf16.msra.mxu0 %v1943
      %2000 = vmatpush.bf16.msra.mxu0 %v1942
      %2001 = vmatpush.bf16.msra.mxu0 %v1941
      %2002 = vmatmul.bf16.gmra.mxu0 %v1820
      %v2003 = vpop.f32.mrf.mxu0
      %v2004 = vadd.f32 %v1975, %v2003
      %v2005 = vpop.f32.mrf.mxu0
      %v2006 = vadd.f32 %v1977, %v2005
      %2007 = vmatmul.bf16.gmra.mxu0 %v1821
      %v2008 = vpop.f32.mrf.mxu0
      %v2009 = vadd.f32 %v1980, %v2008
      %v2010 = vpop.f32.mrf.mxu0
      %v2011 = vadd.f32 %v1982, %v2010
      %2012 = vmatmul.bf16.gmra.mxu0 %v1822
      %v2013 = vpop.f32.mrf.mxu0
      %v2014 = vadd.f32 %v1985, %v2013
      %v2015 = vpop.f32.mrf.mxu0
      %v2016 = vadd.f32 %v1987, %v2015
      %2017 = vmatmul.bf16.gmra.mxu0 %v1823
      %v2018 = vpop.f32.mrf.mxu0
      %v2019 = vadd.f32 %v1990, %v2018
      %v2020 = vpop.f32.mrf.mxu0
      %v2021 = vadd.f32 %v1992, %v2020
      %2022 = vdwg.mxu0
      %v2023 = vadd.f32 %v1828, %v2004
      %v2024 = vadd.f32 %v1829, %v2006
      %v2025 = vadd.f32 %v1830, %v2009
      %v2026 = vadd.f32 %v1831, %v2011
      %v2027 = vadd.f32 %v1832, %v2014
      %v2028 = vadd.f32 %v1833, %v2016
      %v2029 = vadd.f32 %v1834, %v2019
      %v2030 = vadd.f32 %v1835, %v2021
      %2031 = vst [vmem:[#allocation2] sm:$0xff] %v2023
      %2032 = vst [vmem:[#allocation2 + $0x8] sm:$0xff] %v2024
      %2033 = vst [vmem:[#allocation2 + $0x10] sm:$0xff] %v2025
      %2034 = vst [vmem:[#allocation2 + $0x18] sm:$0xff] %v2026
      %2035 = vst [vmem:[#allocation2 + $0x20] sm:$0xff] %v2027
      %2036 = vst [vmem:[#allocation2 + $0x28] sm:$0xff] %v2028
      %2037 = vst [vmem:[#allocation2 + $0x30] sm:$0xff] %v2029
      %2038 = vst [vmem:[#allocation2 + $0x38] sm:$0xff] %v2030
      %v2039 = vld [vmem:[#allocation2] sm:$0xff]
      %v2040 = vld [vmem:[#allocation2 + $0x8] sm:$0xff]
      %v2041 = vld [vmem:[#allocation2 + $0x10] sm:$0xff]
      %v2042 = vld [vmem:[#allocation2 + $0x18] sm:$0xff]
      %v2043 = vld [vmem:[#allocation2 + $0x20] sm:$0xff]
      %v2044 = vld [vmem:[#allocation2 + $0x28] sm:$0xff]
      %v2045 = vld [vmem:[#allocation2 + $0x30] sm:$0xff]
      %v2046 = vld [vmem:[#allocation2 + $0x38] sm:$0xff]
      %v2047 = vld [vmem:[%s2] sm:$0x1]
      %v2049 = vperm.slane %v2047, 0
      %v2051 = vadd.f32 %v2039, %v2049
      %v2052 = vadd.f32 %v2040, %v2049
      %v2053 = vadd.f32 %v2041, %v2049
      %v2054 = vadd.f32 %v2042, %v2049
      %v2055 = vadd.f32 %v2043, %v2049
      %v2056 = vadd.f32 %v2044, %v2049
      %v2057 = vadd.f32 %v2045, %v2049
      %v2058 = vadd.f32 %v2046, %v2049
      %v2059 = vmax.f32 %v2051, 0.0
      %v2060 = vmax.f32 %v2052, 0.0
      %v2061 = vmax.f32 %v2053, 0.0
      %v2062 = vmax.f32 %v2054, 0.0
      %v2063 = vmax.f32 %v2055, 0.0
      %v2064 = vmax.f32 %v2056, 0.0
      %v2065 = vmax.f32 %v2057, 0.0
      %v2066 = vmax.f32 %v2058, 0.0
      %v2067 = vpack.c.bf16 %v2060, %v2059
      %v2068 = vpack.c.bf16 %v2062, %v2061
      %v2069 = vpack.c.bf16 %v2064, %v2063
      %v2070 = vpack.c.bf16 %v2066, %v2065
      %v2071 = vld [vmem:[%s3] sm:$0xf]
      %v2072 = vld [vmem:[%s3 + $0x4] sm:$0xf]
      %v2073 = vld [vmem:[%s3 + $0x8] sm:$0xf]
      %v2074 = vld [vmem:[%s3 + $0xc] sm:$0xf]
      %v2075 = vld [vmem:[%s3 + $0x10] sm:$0xf]
      %v2076 = vld [vmem:[%s3 + $0x14] sm:$0xf]
      %v2077 = vld [vmem:[%s3 + $0x18] sm:$0xf]
      %v2078 = vld [vmem:[%s3 + $0x1c] sm:$0xf]
      %v2079 = vld [vmem:[%s3 + $0x20] sm:$0xf]
      %v2080 = vld [vmem:[%s3 + $0x24] sm:$0xf]
      %v2081 = vld [vmem:[%s3 + $0x28] sm:$0xf]
      %v2082 = vld [vmem:[%s3 + $0x2c] sm:$0xf]
      %v2083 = vld [vmem:[%s3 + $0x30] sm:$0xf]
      %v2084 = vld [vmem:[%s3 + $0x34] sm:$0xf]
      %v2085 = vld [vmem:[%s3 + $0x38] sm:$0xf]
      %v2086 = vld [vmem:[%s3 + $0x3c] sm:$0xf]
      %v2087 = vld [vmem:[%s4] sm:$0x1]
      %v2089 = vperm.slane %v2087, 0
      %v2107 = vunpack.c.l.b16 %v2071
      %v2108 = vunpack.c.l.b16 %v2072
      %v2109 = vunpack.c.l.b16 %v2073
      %v2110 = vunpack.c.l.b16 %v2074
      %v2111 = vunpack.c.l.b16 %v2075
      %v2112 = vunpack.c.l.b16 %v2076
      %v2113 = vunpack.c.l.b16 %v2077
      %v2114 = vunpack.c.l.b16 %v2078
      %v2115 = vunpack.c.l.b16 %v2079
      %v2116 = vunpack.c.l.b16 %v2080
      %v2117 = vunpack.c.l.b16 %v2081
      %v2118 = vunpack.c.l.b16 %v2082
      %v2119 = vunpack.c.l.b16 %v2083
      %v2120 = vunpack.c.l.b16 %v2084
      %v2121 = vunpack.c.l.b16 %v2085
      %v2122 = vunpack.c.l.b16 %v2086
      %v2123 = vpack.c.b16 %v2108, %v2107
      %v2124 = vpack.c.b16 %v2110, %v2109
      %v2125 = vpack.c.b16 %v2112, %v2111
      %v2126 = vpack.c.b16 %v2114, %v2113
      %v2127 = vpack.c.b16 %v2116, %v2115
      %v2128 = vpack.c.b16 %v2118, %v2117
      %v2129 = vpack.c.b16 %v2120, %v2119
      %v2130 = vpack.c.b16 %v2122, %v2121
      %2139 = vmatpush.bf16.msra.mxu0 %v2130
      %2140 = vmatpush.bf16.msra.mxu0 %v2129
      %2141 = vmatpush.bf16.msra.mxu0 %v2128
      %2142 = vmatpush.bf16.msra.mxu0 %v2127
      %2143 = vmatpush.bf16.msra.mxu0 %v2126
      %2144 = vmatpush.bf16.msra.mxu0 %v2125
      %2145 = vmatpush.bf16.msra.mxu0 %v2124
      %2146 = vmatpush.bf16.msra.mxu0 %v2123
      %2147 = vmatmul.bf16.gmra.mxu0 %v2067
      %v2148 = vpop.f32.mrf.mxu0
      %v2149 = vadd.f32 %v2089, %v2148
      %v2150 = vpop.f32.mrf.mxu0
      %v2151 = vadd.f32 %v2089, %v2150
      %2152 = vmatmul.bf16.gmra.mxu0 %v2068
      %v2153 = vpop.f32.mrf.mxu0
      %v2154 = vadd.f32 %v2089, %v2153
      %v2155 = vpop.f32.mrf.mxu0
      %v2156 = vadd.f32 %v2089, %v2155
      %2157 = vmatmul.bf16.gmra.mxu0 %v2069
      %v2158 = vpop.f32.mrf.mxu0
      %v2159 = vadd.f32 %v2089, %v2158
      %v2160 = vpop.f32.mrf.mxu0
      %v2161 = vadd.f32 %v2089, %v2160
      %2162 = vmatmul.bf16.gmra.mxu0 %v2070
      %v2163 = vpop.f32.mrf.mxu0
      %v2164 = vadd.f32 %v2089, %v2163
      %v2165 = vpop.f32.mrf.mxu0
      %v2166 = vadd.f32 %v2089, %v2165
      %2167 = vdwg.mxu0
      %2168 = vst [vmem:[%s224] sm:$0xff] %v2149
      %2169 = vst [vmem:[%s224 + $0x8] sm:$0xff] %v2151
      %2170 = vst [vmem:[%s224 + $0x10] sm:$0xff] %v2154
      %2171 = vst [vmem:[%s224 + $0x18] sm:$0xff] %v2156
      %2172 = vst [vmem:[%s224 + $0x20] sm:$0xff] %v2159
      %2173 = vst [vmem:[%s224 + $0x28] sm:$0xff] %v2161
      %2174 = vst [vmem:[%s224 + $0x30] sm:$0xff] %v2164
      %2175 = vst [vmem:[%s224 + $0x38] sm:$0xff] %v2166
      %p2176 = scmp.lt.s32.totalorder %s16, 1
      %s2177 = scalar_select %p2176, %s16, 1
      %s2178 = smul.addr %s2177, 8
      %s2179 = smul.addr %s2178, 8
      %s2180 = scalar_lea.vmem %s5, %s2179
      // Predicated region
      $region41: #{forward.7} parent=39 // pred_check
        %p2181 = pneg %p144
      $region42: #{forward.7} parent=39 // pred_check_branch
        %2183 = sbr.rel (%p2181) target = $region44
      $region43: #{forward.7} parent=39 // pred_region
        _
      $region44: #{forward.7} parent=39 // pred_fallthru
        _
    $region40: #{forward.7} parent=5 // pred_fallthru
      _
    %p2184 = scmp.le.s32.totalorder 2, %s11
    // Predicated region
    $region45: #{forward.7} parent=5 // pred_check
      %p2185 = pneg %p2184
    $region46: #{forward.7} parent=5 // pred_check_branch
      %2187 = sbr.rel (%p2185) target = $region48
    $region47: #{forward.7} parent=5 // pred_region
      %s2188 = ssub.s32 %s11, 2
      // Predicated region
      $region49: #{forward.7} parent=47 // pred_check
        %p2189 = pneg %p150
      $region50: #{forward.7} parent=47 // pred_check_branch
        %2191 = sbr.rel (%p2189) target = $region52
      $region51: #{forward.7} parent=47 // pred_region
        %p2192 = scmp.lt.s32.totalorder %s17, 1
        %s2193 = scalar_select %p2192, %s17, 1
        %s2194 = smul.addr %s2193, 8
        %s2195 = smul.addr %s2194, 8
        %s2196 = scalar_lea.vmem %s5, %s2195
      $region52: #{forward.7} parent=47 // pred_fallthru
        _
    $region48: #{forward.7} parent=5 // pred_fallthru
      _
  $region6: #{forward.7} parent=0 // loop_footer
    %s15 = sadd.s32 1, %s11
  $region7: #{forward.7} parent=0 // loop_footer_branch
    %10 = sbr.rel target = $region3
  $region8: #{forward.7} parent=0 // loop_exit
    _

// kernel: forward.8
$region0: #{forward.8}
  #allocation0 [shape = 'u32[]', space=smem, size = 0x4, offset = 0x4, fixed_abs, tag = 'smem constant byte address 0x4 - core index']
  #allocation1 [shape = 'u32[72,128]{1,0:T(1,128)}', space=vmem, size = 0x9000, scoped, tag = 'internal scratch']
  %s0 = inlined_call_operand.vmem [shape: f32[8,768], index: 0, kind: input, shape index: {}]
  %s1 = inlined_call_operand.vmem [shape: f32[4,768], index: 1, kind: output, shape index: {}]
  %s2 = sld [smem:[#allocation0]]
  $region14: #{forward.8} parent=0
    _
  %s4 = ssub.s32 1, %s2
  %s5 = scalar_select 0, %s4, %s2
  // Predicated region
  $region2: #{forward.8} parent=0 // pred_check
    _
  $region3: #{forward.8} parent=0 // pred_check_branch
    %7 = sbr.rel (0) target = $region5
  $region4: #{forward.8} parent=0 // pred_region
    _
  $region5: #{forward.8} parent=0 // pred_fallthru
    _
  %v8 = vld [vmem:[%s0] sm:$0xff]
  %v9 = vld [vmem:[%s0 + $0x8] sm:$0xff]
  %v10 = vld [vmem:[%s0 + $0x10] sm:$0xff]
  %v11 = vld [vmem:[%s0 + $0x18] sm:$0xff]
  %v12 = vld [vmem:[%s0 + $0x20] sm:$0xff]
  %v13 = vld [vmem:[%s0 + $0x28] sm:$0xff]
  %v14 = vmin.f32 %v8, 4.1351666
  %v15 = vmin.f32 %v9, 4.1351666
  %v16 = vmin.f32 %v10, 4.1351666
  %v17 = vmin.f32 %v11, 4.1351666
  %v18 = vmin.f32 %v12, 4.1351666
  %v19 = vmin.f32 %v13, 4.1351666
  %v26 = vrot.slane %v8, 6
  %v27 = vrot.slane %v9, 6
  %v28 = vrot.slane %v10, 6
  %v29 = vrot.slane %v11, 6
  %v30 = vrot.slane %v12, 6
  %v31 = vrot.slane %v13, 6
  %v38 = vsub.f32 %v8, %v26
  %v39 = vsub.f32 %v9, %v27
  %v40 = vsub.f32 %v10, %v28
  %v41 = vsub.f32 %v11, %v29
  %v42 = vsub.f32 %v12, %v30
  %v43 = vsub.f32 %v13, %v31
  %v44 = vmul.f32 %v38, 0.5
  %v45 = vmul.f32 %v39, 0.5
  %v46 = vmul.f32 %v40, 0.5
  %v47 = vmul.f32 %v41, 0.5
  %v48 = vmul.f32 %v42, 0.5
  %v49 = vmul.f32 %v43, 0.5
  %v56 = vrot.slane %v44, 2
  %v57 = vrot.slane %v45, 2
  %v58 = vrot.slane %v46, 2
  %v59 = vrot.slane %v47, 2
  %v60 = vrot.slane %v48, 2
  %v61 = vrot.slane %v49, 2
  %v68 = vadd.f32 %v8, %v56
  %v69 = vadd.f32 %v9, %v57
  %v70 = vadd.f32 %v10, %v58
  %v71 = vadd.f32 %v11, %v59
  %v72 = vadd.f32 %v12, %v60
  %v73 = vadd.f32 %v13, %v61
  %v80 = vrot.slane %v38, 6
  %v81 = vrot.slane %v39, 6
  %v82 = vrot.slane %v40, 6
  %v83 = vrot.slane %v41, 6
  %v84 = vrot.slane %v42, 6
  %v85 = vrot.slane %v43, 6
  %v92 = vmul.f32 %v8, %v80
  %v93 = vmul.f32 %v9, %v81
  %v94 = vmul.f32 %v10, %v82
  %v95 = vmul.f32 %v11, %v83
  %v96 = vmul.f32 %v12, %v84
  %v97 = vmul.f32 %v13, %v85
  %v104 = vrot.slane %v68, 4
  %v105 = vrot.slane %v69, 4
  %v106 = vrot.slane %v70, 4
  %v107 = vrot.slane %v71, 4
  %v108 = vrot.slane %v72, 4
  %v109 = vrot.slane %v73, 4
  %v116 = vadd.f32 %v92, %v104
  %v117 = vadd.f32 %v93, %v105
  %v118 = vadd.f32 %v94, %v106
  %v119 = vadd.f32 %v95, %v107
  %v120 = vadd.f32 %v96, %v108
  %v121 = vadd.f32 %v97, %v109
  %v122 = vmul.f32 %v14, 1.442695
  %v123 = vpow.pop %v122
  %v124 = vmul.f32 %v15, 1.442695
  %v125 = vpow.pop %v124
  %v126 = vmul.f32 %v16, 1.442695
  %v127 = vpow.pop %v126
  %v128 = vmul.f32 %v17, 1.442695
  %v129 = vpow.pop %v128
  %v130 = vmul.f32 %v18, 1.442695
  %v131 = vpow.pop %v130
  %v132 = vmul.f32 %v19, 1.442695
  %v133 = vpow.pop %v132
  %v134 = vrot.slane %v38, 4
  %v135 = vrot.slane %v39, 4
  %v136 = vrot.slane %v40, 4
  %v137 = vrot.slane %v41, 4
  %v138 = vrot.slane %v42, 4
  %v139 = vrot.slane %v43, 4
  %v146 = vmul.f32 %v123, %v134
  %v147 = vmul.f32 %v125, %v135
  %v148 = vmul.f32 %v127, %v136
  %v149 = vmul.f32 %v129, %v137
  %v150 = vmul.f32 %v131, %v138
  %v151 = vmul.f32 %v133, %v139
  %v152 = vmul.f32 %v146, 0.5
  %v153 = vmul.f32 %v147, 0.5
  %v154 = vmul.f32 %v148, 0.5
  %v155 = vmul.f32 %v149, 0.5
  %v156 = vmul.f32 %v150, 0.5
  %v157 = vmul.f32 %v151, 0.5
  %v164 = vrot.slane %v152, 2
  %v165 = vrot.slane %v153, 2
  %v166 = vrot.slane %v154, 2
  %v167 = vrot.slane %v155, 2
  %v168 = vrot.slane %v156, 2
  %v169 = vrot.slane %v157, 2
  %v176 = vsub.f32 %v116, %v164
  %v177 = vsub.f32 %v117, %v165
  %v178 = vsub.f32 %v118, %v166
  %v179 = vsub.f32 %v119, %v167
  %v180 = vsub.f32 %v120, %v168
  %v181 = vsub.f32 %v121, %v169
  %v182 = vmax.f32 %v176, 0.0
  %v183 = vmax.f32 %v177, 0.0
  %v184 = vmax.f32 %v178, 0.0
  %v185 = vmax.f32 %v179, 0.0
  %v186 = vmax.f32 %v180, 0.0
  %v187 = vmax.f32 %v181, 0.0
  %v188 = vmin.f32 %v182, 32.0
  %v189 = vmin.f32 %v183, 32.0
  %v190 = vmin.f32 %v184, 32.0
  %v191 = vmin.f32 %v185, 32.0
  %v192 = vmin.f32 %v186, 32.0
  %v193 = vmin.f32 %v187, 32.0
  %200 = vst [vmem:[#allocation1] sm:$0xff] %v188
  %201 = vst [vmem:[#allocation1 + $0x9] sm:$0xff] %v189
  %202 = vst [vmem:[#allocation1 + $0x12] sm:$0xff] %v190
  %203 = vst [vmem:[#allocation1 + $0x1b] sm:$0xff] %v191
  %204 = vst [vmem:[#allocation1 + $0x24] sm:$0xff] %v192
  %205 = vst [vmem:[#allocation1 + $0x2d] sm:$0xff] %v193
  %s206 = scalar_lea.vmem [#allocation1], 4
  %v207 = vld [vmem:[%s206] ss:$9 sm:$0xff]
  %v209 = vlaneseq
  %vm210 = vcmp.ge.s32.totalorder %v209, 0
  %vm211 = vcmp.lt.s32.totalorder %v209, 768
  %vm212 = vmand %vm210, %vm211
  %213 = vst.msk [vmem:[%s1] ss:$4 sm:$0x3f] %vm212, %v207
  %214 = vst [vmem:[#allocation1] sm:$0xff] %v188
  %215 = vst [vmem:[#allocation1 + $0x9] sm:$0xff] %v189
  %216 = vst [vmem:[#allocation1 + $0x12] sm:$0xff] %v190
  %217 = vst [vmem:[#allocation1 + $0x1b] sm:$0xff] %v191
  %218 = vst [vmem:[#allocation1 + $0x24] sm:$0xff] %v192
  %219 = vst [vmem:[#allocation1 + $0x2d] sm:$0xff] %v193
  %s220 = scalar_lea.vmem [#allocation1], 5
  %v221 = vld [vmem:[%s220] ss:$9 sm:$0xff]
  %s223 = scalar_lea.vmem %s1, 1
  %224 = vst.msk [vmem:[%s223] ss:$4 sm:$0x3f] %vm212, %v221
  %v225 = vadd.f32 %v116, %v164
  %v226 = vadd.f32 %v117, %v165
  %v227 = vadd.f32 %v118, %v166
  %v228 = vadd.f32 %v119, %v167
  %v229 = vadd.f32 %v120, %v168
  %v230 = vadd.f32 %v121, %v169
  %v231 = vmax.f32 %v225, 0.0
  %v232 = vmax.f32 %v226, 0.0
  %v233 = vmax.f32 %v227, 0.0
  %v234 = vmax.f32 %v228, 0.0
  %v235 = vmax.f32 %v229, 0.0
  %v236 = vmax.f32 %v230, 0.0
  %v237 = vmin.f32 %v231, 32.0
  %v238 = vmin.f32 %v232, 32.0
  %v239 = vmin.f32 %v233, 32.0
  %v240 = vmin.f32 %v234, 32.0
  %v241 = vmin.f32 %v235, 32.0
  %v242 = vmin.f32 %v236, 32.0
  %249 = vst [vmem:[#allocation1] sm:$0xff] %v237
  %250 = vst [vmem:[#allocation1 + $0x9] sm:$0xff] %v238
  %251 = vst [vmem:[#allocation1 + $0x12] sm:$0xff] %v239
  %252 = vst [vmem:[#allocation1 + $0x1b] sm:$0xff] %v240
  %253 = vst [vmem:[#allocation1 + $0x24] sm:$0xff] %v241
  %254 = vst [vmem:[#allocation1 + $0x2d] sm:$0xff] %v242
  %s255 = scalar_lea.vmem [#allocation1], 4
  %v256 = vld [vmem:[%s255] ss:$9 sm:$0xff]
  %s258 = scalar_lea.vmem %s1, 2
  %259 = vst.msk [vmem:[%s258] ss:$4 sm:$0x3f] %vm212, %v256
  %260 = vst [vmem:[#allocation1] sm:$0xff] %v237
  %261 = vst [vmem:[#allocation1 + $0x9] sm:$0xff] %v238
  %262 = vst [vmem:[#allocation1 + $0x12] sm:$0xff] %v239
  %263 = vst [vmem:[#allocation1 + $0x1b] sm:$0xff] %v240
  %264 = vst [vmem:[#allocation1 + $0x24] sm:$0xff] %v241
  %265 = vst [vmem:[#allocation1 + $0x2d] sm:$0xff] %v242
  %s266 = scalar_lea.vmem [#allocation1], 5
  %v267 = vld [vmem:[%s266] ss:$9 sm:$0xff]
  %s269 = scalar_lea.vmem %s1, 3
  %270 = vst.msk [vmem:[%s269] ss:$4 sm:$0x3f] %vm212, %v267
  // Predicated region
  $region6: #{forward.8} parent=0 // pred_check
    _
  $region7: #{forward.8} parent=0 // pred_check_branch
    %272 = sbr.rel (0) target = $region9
  $region8: #{forward.8} parent=0 // pred_region
    _
  $region9: #{forward.8} parent=0 // pred_fallthru
    _
  // Predicated region
  $region10: #{forward.8} parent=0 // pred_check
    _
  $region11: #{forward.8} parent=0 // pred_check_branch
    %274 = sbr.rel (0) target = $region13
  $region12: #{forward.8} parent=0 // pred_region
    _
  $region13: #{forward.8} parent=0 // pred_fallthru
    _

</llo_original>
